<compile_context>
chip_gen: v7x
topology: tpu7x:2x2x1
jax: 0.10.0
libtpu: 0.0.40
codegen_flags: <defaults>
</compile_context>

<pallas_src>
import jax
import jax.numpy as jnp
from jax.experimental import pallas as pl
from jax.experimental.pallas import tpu as pltpu

# ----------------------- HRED hyper-parameters --------------------------------
NTOKEN = 100          # ntoken -> [100]
NT_PAD = 128          # ntoken padded to a full lane group (lane-dense logits store)
EMB_SZ = 32           # emb_sz -> [32, 32]
NHID = 32             # nhid   -> [32, 32, 32]  (query enc, session enc, decoder)
NLAYERS = 1           # nlayers-> [1, 1, 1]
PAD_TOKEN = 0
EOS_TOKEN = 1
# share_embedding_layer=False, tie_decoder=True, bidir=False, dropoutd=0.5 (eval: identity)


def _round_up(x, m):
    return (x + m - 1) // m * m


# ----------------------------- fused Pallas kernel -----------------------------
def _build_hred_kernel(sl, num_ut, bsp, dec_sl):
    """Build the fused HRED forward kernel. bsp = batch padded to a multiple of 8."""
    nbp = num_ut * bsp        # stacked (padded) encoder batch, multiple of 8
    H = NHID
    bf = jnp.bfloat16

    def gru_step(h, gi_r, gi_z, gi_n, whh, bhn_b):
        # PyTorch nn.GRU gate math (order r, z, n); ONE fused h @ W_hh matmul per step.
        gh = jnp.dot(h.astype(bf), whh, preferred_element_type=jnp.float32)  # [rows, 3H]
        r = jax.nn.sigmoid(gi_r + gh[:, 0:H])
        z = jax.nn.sigmoid(gi_z + gh[:, H:2 * H])
        n = jnp.tanh(gi_n + r * (gh[:, 2 * H:3 * H] + bhn_b))
        return (1.0 - z) * n + z * h

    def embed(tok_ref, emb_ref, n_rows):
        # In-kernel embedding lookup via one-hot matmul on the MXU (rows >= NTOKEN are 0).
        tok = tok_ref[...]                                             # [n_rows, 1] int32
        ids = jax.lax.broadcasted_iota(jnp.int32, (n_rows, NT_PAD), 1)
        onehot = jnp.where(tok == ids, 1.0, 0.0).astype(bf)            # [n_rows, NT_PAD]
        return jnp.dot(onehot, emb_ref[...], preferred_element_type=jnp.float32)

    def stage_gates(x_f32, wih_ref, bgi_ref, scr):
        # Hoisted fused input-gate projection for ALL timesteps at once (off the serial
        # path); pre-split per gate into aligned VMEM scratch so the recurrence bodies
        # only issue cheap aligned vlds.
        g = (jnp.dot(x_f32.astype(bf), wih_ref[...],
                     preferred_element_type=jnp.float32) + bgi_ref[...])      # [N, 3H]
        scr[0] = g[:, 0:H]
        scr[1] = g[:, H:2 * H]
        scr[2] = g[:, 2 * H:3 * H]

    def kernel(enc_tok_ref, dec_tok_ref,
               enc_emb_ref, enc_wih_ref, enc_whh_ref, enc_bgi_ref, enc_bhn_ref,
               ses_wih_ref, ses_whh_ref, ses_bgi_ref, ses_bhn_ref,
               state_w_ref, state_b_ref,
               dec_emb_ref, dec_wih_ref, dec_whh_ref, dec_bgi_ref, dec_bhn_ref,
               proj_w_ref, proj_b_ref,
               enc_all_ref, dec_out_ref, logits_ref,
               enc_gi_scr, ses_gi_scr, dec_gi_scr):
        # ---- query encoder: all utterances stacked along the (padded) batch axis ----
        emb = embed(enc_tok_ref, enc_emb_ref, sl * nbp)                # [sl*nbp, EMB]
        stage_gates(emb, enc_wih_ref, enc_bgi_ref, enc_gi_scr)

        enc_whh = enc_whh_ref[...]                                     # hoisted weight read
        enc_bhn = jnp.broadcast_to(enc_bhn_ref[...], (nbp, H))         # hoisted broadcast
        h = jnp.zeros((nbp, H), jnp.float32)                           # query_encoder.reset(bs)
        # TODO(synk): switch to lax.fori_loop(..., unroll=k) for long sequence lengths.
        for t in range(sl):                                            # fully unrolled (sl small)
            lo = t * nbp                                               # 8-aligned slab offset
            h = gru_step(h,
                         enc_gi_scr[0, lo:lo + nbp, :],
                         enc_gi_scr[1, lo:lo + nbp, :],
                         enc_gi_scr[2, lo:lo + nbp, :], enc_whh, enc_bhn)
            enc_all_ref[lo:lo + nbp, :] = h                            # full-slab aligned store

        # ---- session encoder over cat(query outputs, dim=0): [num_ut*sl, bs, H] ----
        stage_gates(enc_all_ref[...], ses_wih_ref, ses_bgi_ref, ses_gi_scr)
        ses_whh = ses_whh_ref[...]
        ses_bhn = jnp.broadcast_to(ses_bhn_ref[...], (bsp, H))
        hs = jnp.zeros((bsp, H), jnp.float32)                          # session_encoder.reset(bs)
        for s in range(num_ut * sl):
            u, t = divmod(s, sl)
            base = t * nbp + u * bsp                                   # 8-aligned
            hs = gru_step(hs,
                          ses_gi_scr[0, base:base + bsp, :],
                          ses_gi_scr[1, base:base + bsp, :],
                          ses_gi_scr[2, base:base + bsp, :], ses_whh, ses_bhn)

        # ---- create_decoder_state: Linear(last session output) -> decoder h0 ----
        h = (jnp.dot(hs.astype(bf), state_w_ref[...],
                     preferred_element_type=jnp.float32) + state_b_ref[...])   # [bsp, H]

        # ---- decoder GRU (teacher forcing over decoder_inputs); num_beams=0 path only ----
        # TODO(synk): beam-search / greedy generation path (num_beams > 0) not implemented.
        demb = embed(dec_tok_ref, dec_emb_ref, dec_sl * bsp)           # [dec_sl*bsp, EMB]
        stage_gates(demb, dec_wih_ref, dec_bgi_ref, dec_gi_scr)
        dec_whh = dec_whh_ref[...]
        dec_bhn = jnp.broadcast_to(dec_bhn_ref[...], (bsp, H))
        for t in range(dec_sl):
            lo = t * bsp
            h = gru_step(h,
                         dec_gi_scr[0, lo:lo + bsp, :],
                         dec_gi_scr[1, lo:lo + bsp, :],
                         dec_gi_scr[2, lo:lo + bsp, :], dec_whh, dec_bhn)
            dec_out_ref[lo:lo + bsp, :] = h                            # full-slab aligned store

        # ---- folded tied Projection -> logits, lane-dense (NTOKEN padded to 128 lanes) ----
        logits_ref[...] = (jnp.dot(dec_out_ref[...].astype(bf), proj_w_ref[...],
                                   preferred_element_type=jnp.float32) + proj_b_ref[...])

    return kernel


# ------------------------------- parameters -----------------------------------
def init_params(key):
    ks = iter(jax.random.split(key, 32))
    bf = jnp.bfloat16
    s_h = float(NHID) ** -0.5
    s_e = float(EMB_SZ) ** -0.5

    def uni(shape, scale):
        return jax.random.uniform(next(ks), shape, jnp.float32, -scale, scale)

    p = {}
    pad = ((0, NT_PAD - NTOKEN), (0, 0))
    enc_emb = jax.random.normal(next(ks), (NTOKEN, EMB_SZ), jnp.float32) * 0.1
    dec_emb = jax.random.normal(next(ks), (NTOKEN, EMB_SZ), jnp.float32) * 0.1
    enc_emb_p = jnp.pad(enc_emb, pad)                                  # [NT_PAD, EMB]
    dec_emb_p = jnp.pad(dec_emb, pad)
    p["enc_emb"] = enc_emb_p.astype(bf)
    p["dec_emb"] = dec_emb_p.astype(bf)

    def gru(prefix, in_dim):
        # fused gate layout: column blocks [r | z | n], weights [in, 3H]
        w_ih = uni((in_dim, 3 * NHID), s_h)
        w_hh = uni((NHID, 3 * NHID), s_h)
        b_ih = uni((1, 3 * NHID), s_h)
        b_hh = uni((1, 3 * NHID), s_h)
        # fold b_hr, b_hz into the hoisted input-gate bias; keep only b_hn on the serial path
        b_gi = b_ih.at[:, :2 * NHID].add(b_hh[:, :2 * NHID])
        p[prefix + "_w_ih"] = w_ih.astype(bf)
        p[prefix + "_w_hh"] = w_hh.astype(bf)
        p[prefix + "_b_gi"] = b_gi
        p[prefix + "_b_hn"] = b_hh[:, 2 * NHID:]

    gru("enc", EMB_SZ)   # query encoder (EmbeddingRNNEncoder): GRU(emb_sz -> nhid0)
    gru("ses", NHID)     # session encoder (RNNEncoder):        GRU(nhid0 -> nhid2)
    gru("dec", EMB_SZ)   # decoder (EmbeddingRNNDecoder):       GRU(emb_sz -> nhid2)

    # decoder_state_linear: nhid2 -> decoder hidden size
    p["state_w"] = uni((NHID, NHID), s_h).astype(bf)
    p["state_b"] = uni((1, NHID), s_h)

    # Projection (Linear nhid->emb, eval-mode dropout = identity) folded with the tied
    # output embedding (tie_decoder=True) into ONE matmul: exact since no nonlinearity.
    proj_w1 = uni((NHID, EMB_SZ), s_e)
    proj_b1 = uni((1, EMB_SZ), s_e)
    proj_b2 = jnp.zeros((1, NT_PAD), jnp.float32)
    p["proj_w"] = (proj_w1 @ dec_emb_p.T).astype(bf)                   # [NHID, NT_PAD]
    p["proj_b"] = proj_b1 @ dec_emb_p.T + proj_b2                      # [1, NT_PAD]
    return p


# ------------------------------- HRED forward ---------------------------------
@jax.jit
def hred_forward(params, encoder_inputs, decoder_inputs):
    """encoder_inputs: [num_utterances, sl, bs] int32; decoder_inputs: [dec_sl, bs] int32."""
    num_ut, sl, bs = encoder_inputs.shape
    dec_sl = decoder_inputs.shape[0]
    bsp = _round_up(bs, 8)            # sublane-aligned batch (padded rows are independent)
    nbp = num_ut * bsp

    # Stack utterances along the batch axis (each starts from h0=0, so they are independent)
    # and pad batch with PAD_TOKEN rows. Row layout: index = t*nbp + u*bsp + b.
    enc_pad = jnp.pad(encoder_inputs, ((0, 0), (0, 0), (0, bsp - bs)),
                      constant_values=PAD_TOKEN)
    enc_tok = jnp.transpose(enc_pad, (1, 0, 2)).reshape(sl * nbp, 1)
    dec_pad = jnp.pad(decoder_inputs, ((0, 0), (0, bsp - bs)), constant_values=PAD_TOKEN)
    dec_tok = dec_pad.reshape(dec_sl * bsp, 1)

    kernel = _build_hred_kernel(sl, num_ut, bsp, dec_sl)

    n_steps = sl + num_ut * sl + dec_sl
    flops = 2 * (
        (sl * nbp + dec_sl * bsp) * NT_PAD * EMB_SZ            # one-hot embedding matmuls
        + (2 * sl * nbp + dec_sl * bsp) * NHID * 3 * NHID      # hoisted fused input gates
        + n_steps * nbp * NHID * 3 * NHID                      # serial h @ W_hh matmuls
        + bsp * NHID * NHID                                    # decoder_state_linear
        + dec_sl * bsp * NHID * NT_PAD)                        # folded tied projection
    vmem = pl.BlockSpec(memory_space=pltpu.MemorySpace.VMEM)

    enc_all, dec_all, logits_pad = pl.pallas_call(
        kernel,
        out_shape=(
            jax.ShapeDtypeStruct((sl * nbp, NHID), jnp.float32),        # all query-enc outputs
            jax.ShapeDtypeStruct((dec_sl * bsp, NHID), jnp.float32),    # decoder RNN outputs
            jax.ShapeDtypeStruct((dec_sl * bsp, NT_PAD), jnp.float32),  # lane-dense logits
        ),
        in_specs=[vmem] * 20,
        out_specs=(vmem, vmem, vmem),
        scratch_shapes=[
            pltpu.VMEM((3, sl * nbp, NHID), jnp.float32),     # encoder input gates (r,z,n)
            pltpu.VMEM((3, sl * nbp, NHID), jnp.float32),     # session input gates
            pltpu.VMEM((3, dec_sl * bsp, NHID), jnp.float32),  # decoder input gates
        ],
        cost_estimate=pl.CostEstimate(
            flops=int(flops),
            transcendentals=int(n_steps * nbp * NHID * 3),
            bytes_accessed=int(1 << 17)),
    )(
        enc_tok, dec_tok,
        params["enc_emb"], params["enc_w_ih"], params["enc_w_hh"],
        params["enc_b_gi"], params["enc_b_hn"],
        params["ses_w_ih"], params["ses_w_hh"], params["ses_b_gi"], params["ses_b_hn"],
        params["state_w"], params["state_b"],
        params["dec_emb"], params["dec_w_ih"], params["dec_w_hh"],
        params["dec_b_gi"], params["dec_b_hn"],
        params["proj_w"], params["proj_b"],
    )

    # Match the reference return structure: the per-utterance loop overwrites raw_outputs /
    # outputs, so only the LAST utterance's query-encoder outputs appear in the lists.
    enc_out = enc_all.reshape(sl, num_ut, bsp, NHID)[:, -1, :bs, :]
    dec_out = dec_all.reshape(dec_sl, bsp, NHID)[:, :bs, :]
    predictions = logits_pad.reshape(dec_sl, bsp, NT_PAD)[:, :bs, :NTOKEN]
    raw_outputs = [enc_out, dec_out]
    outputs = [enc_out, dec_out, predictions]
    return predictions, raw_outputs, outputs


# ----------------------------------- main --------------------------------------
if __name__ == "__main__":
    key = jax.random.PRNGKey(0)
    pkey, ekey, dkey = jax.random.split(key, 3)
    params = init_params(pkey)

    num_utterances, sl, bs, dec_sl = 3, 5, 2, 6
    encoder_inputs = jax.random.randint(ekey, (num_utterances, sl, bs), 0, NTOKEN,
                                        dtype=jnp.int32)
    decoder_inputs = jax.random.randint(dkey, (dec_sl, bs), 0, NTOKEN, dtype=jnp.int32)

    predictions, raw_list, out_list = hred_forward(params, encoder_inputs, decoder_inputs)
    jax.block_until_ready(predictions)

    assert predictions.shape == (dec_sl, bs, NTOKEN)
    assert predictions.dtype == jnp.float32
    assert bool(jnp.all(jnp.isfinite(predictions)))
    print("KERNEL_OK")
</pallas_src>

<mosaic_0001>
module attributes {stable_mosaic.version = 11 : i64} {
  func.func @kernel(%arg0: memref<120x1xi32, #tpu.memory_space<vmem>>, %arg1: memref<48x1xi32, #tpu.memory_space<vmem>>, %arg2: memref<128x32xbf16, #tpu.memory_space<vmem>>, %arg3: memref<32x96xbf16, #tpu.memory_space<vmem>>, %arg4: memref<32x96xbf16, #tpu.memory_space<vmem>>, %arg5: memref<1x96xf32, #tpu.memory_space<vmem>>, %arg6: memref<1x32xf32, #tpu.memory_space<vmem>>, %arg7: memref<32x96xbf16, #tpu.memory_space<vmem>>, %arg8: memref<32x96xbf16, #tpu.memory_space<vmem>>, %arg9: memref<1x96xf32, #tpu.memory_space<vmem>>, %arg10: memref<1x32xf32, #tpu.memory_space<vmem>>, %arg11: memref<32x32xbf16, #tpu.memory_space<vmem>>, %arg12: memref<1x32xf32, #tpu.memory_space<vmem>>, %arg13: memref<128x32xbf16, #tpu.memory_space<vmem>>, %arg14: memref<32x96xbf16, #tpu.memory_space<vmem>>, %arg15: memref<32x96xbf16, #tpu.memory_space<vmem>>, %arg16: memref<1x96xf32, #tpu.memory_space<vmem>>, %arg17: memref<1x32xf32, #tpu.memory_space<vmem>>, %arg18: memref<32x128xbf16, #tpu.memory_space<vmem>>, %arg19: memref<1x128xf32, #tpu.memory_space<vmem>>, %arg20: memref<120x32xf32, #tpu.memory_space<vmem>>, %arg21: memref<48x32xf32, #tpu.memory_space<vmem>>, %arg22: memref<48x128xf32, #tpu.memory_space<vmem>>, %arg23: memref<3x120x32xf32, #tpu.memory_space<vmem>>, %arg24: memref<3x120x32xf32, #tpu.memory_space<vmem>>, %arg25: memref<3x48x32xf32, #tpu.memory_space<vmem>>) attributes {dimension_semantics = [], scalar_prefetch = 0 : i64, scratch_operands = 3 : i64, tpu.core_type = #tpu.core_type<tc>} {
    %c0 = arith.constant 0 : index
    %c0_0 = arith.constant 0 : index
    %0 = vector.load %arg0[%c0, %c0_0] : memref<120x1xi32, #tpu.memory_space<vmem>>, vector<120x1xi32>
    %1 = tpu.iota {dimensions = array<i32: 1>} : vector<120x128xi32>
    %2 = vector.broadcast %0 : vector<120x1xi32> to vector<120x128xi32>
    %3 = arith.cmpi eq, %2, %1 : vector<120x128xi32>
    %cst = arith.constant 1.000000e+00 : f32
    %cst_1 = arith.constant 0.000000e+00 : f32
    %4 = vector.broadcast %cst : f32 to vector<120x128xf32>
    %5 = vector.broadcast %cst_1 : f32 to vector<120x128xf32>
    %6 = arith.select %3, %4, %5 : vector<120x128xi1>, vector<120x128xf32>
    %7 = arith.truncf %6 : vector<120x128xf32> to vector<120x128xbf16>
    %c0_2 = arith.constant 0 : index
    %c0_3 = arith.constant 0 : index
    %8 = vector.load %arg2[%c0_2, %c0_3] : memref<128x32xbf16, #tpu.memory_space<vmem>>, vector<128x32xbf16>
    %cst_4 = arith.constant dense<0.000000e+00> : vector<120x32xf32>
    %9 = tpu.matmul %7, %8, %cst_4 {dimension_numbers = #tpu.dot_dimension_numbers<[1], [0], [0], [1], [0, 0, 1, 1], [], []>} : vector<120x128xbf16>, vector<128x32xbf16>, vector<120x32xf32> -> vector<120x32xf32>
    %10 = arith.truncf %9 : vector<120x32xf32> to vector<120x32xbf16>
    %c0_5 = arith.constant 0 : index
    %c0_6 = arith.constant 0 : index
    %11 = vector.load %arg3[%c0_5, %c0_6] : memref<32x96xbf16, #tpu.memory_space<vmem>>, vector<32x96xbf16>
    %cst_7 = arith.constant dense<0.000000e+00> : vector<120x96xf32>
    %12 = tpu.matmul %10, %11, %cst_7 {dimension_numbers = #tpu.dot_dimension_numbers<[1], [0], [0], [1], [0, 0, 1, 1], [], []>} : vector<120x32xbf16>, vector<32x96xbf16>, vector<120x96xf32> -> vector<120x96xf32>
    %c0_8 = arith.constant 0 : index
    %c0_9 = arith.constant 0 : index
    %13 = vector.load %arg5[%c0_8, %c0_9] : memref<1x96xf32, #tpu.memory_space<vmem>>, vector<1x96xf32>
    %14 = vector.broadcast %13 : vector<1x96xf32> to vector<120x96xf32>
    %15 = arith.addf %12, %14 : vector<120x96xf32>
    %16 = vector.extract_strided_slice %15 {offsets = [0, 0], sizes = [120, 32], strides = [1, 1]} : vector<120x96xf32> to vector<120x32xf32>
    %c0_10 = arith.constant 0 : index
    %c0_11 = arith.constant 0 : index
    %c0_12 = arith.constant 0 : index
    %17 = vector.load %arg23[%c0_10, %c0_11, %c0_12] : memref<3x120x32xf32, #tpu.memory_space<vmem>>, vector<1x120x32xf32>
    %18 = vector.shape_cast %17 : vector<1x120x32xf32> to vector<120x32xf32>
    %19 = vector.shape_cast %16 : vector<120x32xf32> to vector<1x120x32xf32>
    tpu.vector_store %arg23[%c0_10, %c0_11, %c0_12], %19 {strides = array<i32>} : memref<3x120x32xf32, #tpu.memory_space<vmem>>, vector<1x120x32xf32>,
    %20 = vector.extract_strided_slice %15 {offsets = [0, 32], sizes = [120, 32], strides = [1, 1]} : vector<120x96xf32> to vector<120x32xf32>
    %c1 = arith.constant 1 : index
    %c0_13 = arith.constant 0 : index
    %c0_14 = arith.constant 0 : index
    %21 = vector.load %arg23[%c1, %c0_13, %c0_14] : memref<3x120x32xf32, #tpu.memory_space<vmem>>, vector<1x120x32xf32>
    %22 = vector.shape_cast %21 : vector<1x120x32xf32> to vector<120x32xf32>
    %23 = vector.shape_cast %20 : vector<120x32xf32> to vector<1x120x32xf32>
    tpu.vector_store %arg23[%c1, %c0_13, %c0_14], %23 {strides = array<i32>} : memref<3x120x32xf32, #tpu.memory_space<vmem>>, vector<1x120x32xf32>,
    %24 = vector.extract_strided_slice %15 {offsets = [0, 64], sizes = [120, 32], strides = [1, 1]} : vector<120x96xf32> to vector<120x32xf32>
    %c2 = arith.constant 2 : index
    %c0_15 = arith.constant 0 : index
    %c0_16 = arith.constant 0 : index
    %25 = vector.load %arg23[%c2, %c0_15, %c0_16] : memref<3x120x32xf32, #tpu.memory_space<vmem>>, vector<1x120x32xf32>
    %26 = vector.shape_cast %25 : vector<1x120x32xf32> to vector<120x32xf32>
    %27 = vector.shape_cast %24 : vector<120x32xf32> to vector<1x120x32xf32>
    tpu.vector_store %arg23[%c2, %c0_15, %c0_16], %27 {strides = array<i32>} : memref<3x120x32xf32, #tpu.memory_space<vmem>>, vector<1x120x32xf32>,
    %c0_17 = arith.constant 0 : index
    %c0_18 = arith.constant 0 : index
    %28 = vector.load %arg4[%c0_17, %c0_18] : memref<32x96xbf16, #tpu.memory_space<vmem>>, vector<32x96xbf16>
    %c0_19 = arith.constant 0 : index
    %c0_20 = arith.constant 0 : index
    %29 = vector.load %arg6[%c0_19, %c0_20] : memref<1x32xf32, #tpu.memory_space<vmem>>, vector<1x32xf32>
    %30 = vector.shape_cast %29 : vector<1x32xf32> to vector<1x32xf32>
    %31 = vector.broadcast %30 : vector<1x32xf32> to vector<24x32xf32>
    %cst_21 = arith.constant 0.000000e+00 : f32
    %32 = vector.broadcast %cst_21 : f32 to vector<24x32xf32>
    %c0_22 = arith.constant 0 : index
    %c0_23 = arith.constant 0 : index
    %c0_24 = arith.constant 0 : index
    %33 = vector.load %arg23[%c0_22, %c0_23, %c0_24] : memref<3x120x32xf32, #tpu.memory_space<vmem>>, vector<1x24x32xf32>
    %34 = vector.shape_cast %33 : vector<1x24x32xf32> to vector<24x32xf32>
    %c1_25 = arith.constant 1 : index
    %c0_26 = arith.constant 0 : index
    %c0_27 = arith.constant 0 : index
    %35 = vector.load %arg23[%c1_25, %c0_26, %c0_27] : memref<3x120x32xf32, #tpu.memory_space<vmem>>, vector<1x24x32xf32>
    %36 = vector.shape_cast %35 : vector<1x24x32xf32> to vector<24x32xf32>
    %c2_28 = arith.constant 2 : index
    %c0_29 = arith.constant 0 : index
    %c0_30 = arith.constant 0 : index
    %37 = vector.load %arg23[%c2_28, %c0_29, %c0_30] : memref<3x120x32xf32, #tpu.memory_space<vmem>>, vector<1x24x32xf32>
    %38 = vector.shape_cast %37 : vector<1x24x32xf32> to vector<24x32xf32>
    %39 = arith.truncf %32 : vector<24x32xf32> to vector<24x32xbf16>
    %cst_31 = arith.constant dense<0.000000e+00> : vector<24x96xf32>
    %40 = tpu.matmul %39, %28, %cst_31 {dimension_numbers = #tpu.dot_dimension_numbers<[1], [0], [0], [1], [0, 0, 1, 1], [], []>} : vector<24x32xbf16>, vector<32x96xbf16>, vector<24x96xf32> -> vector<24x96xf32>
    %41 = vector.extract_strided_slice %40 {offsets = [0, 0], sizes = [24, 32], strides = [1, 1]} : vector<24x96xf32> to vector<24x32xf32>
    %42 = arith.addf %34, %41 : vector<24x32xf32>
    %43 = arith.negf %42 : vector<24x32xf32>
    %44 = math.exp %43 : vector<24x32xf32>
    %cst_32 = arith.constant 1.000000e+00 : f32
    %45 = vector.broadcast %cst_32 : f32 to vector<24x32xf32>
    %46 = arith.addf %45, %44 : vector<24x32xf32>
    %47 = arith.divf %45, %46 : vector<24x32xf32>
    %48 = vector.extract_strided_slice %40 {offsets = [0, 32], sizes = [24, 32], strides = [1, 1]} : vector<24x96xf32> to vector<24x32xf32>
    %49 = arith.addf %36, %48 : vector<24x32xf32>
    %50 = arith.negf %49 : vector<24x32xf32>
    %51 = math.exp %50 : vector<24x32xf32>
    %cst_33 = arith.constant 1.000000e+00 : f32
    %52 = vector.broadcast %cst_33 : f32 to vector<24x32xf32>
    %53 = arith.addf %52, %51 : vector<24x32xf32>
    %54 = arith.divf %52, %53 : vector<24x32xf32>
    %55 = vector.extract_strided_slice %40 {offsets = [0, 64], sizes = [24, 32], strides = [1, 1]} : vector<24x96xf32> to vector<24x32xf32>
    %56 = arith.addf %55, %31 : vector<24x32xf32>
    %57 = arith.mulf %47, %56 : vector<24x32xf32>
    %58 = arith.addf %38, %57 : vector<24x32xf32>
    %59 = math.tanh %58 : vector<24x32xf32>
    %cst_34 = arith.constant 1.000000e+00 : f32
    %60 = vector.broadcast %cst_34 : f32 to vector<24x32xf32>
    %61 = arith.subf %60, %54 : vector<24x32xf32>
    %62 = arith.mulf %61, %59 : vector<24x32xf32>
    %63 = arith.mulf %54, %32 : vector<24x32xf32>
    %64 = arith.addf %62, %63 : vector<24x32xf32>
    %c0_35 = arith.constant 0 : index
    %c0_36 = arith.constant 0 : index
    %65 = vector.load %arg20[%c0_35, %c0_36] : memref<120x32xf32, #tpu.memory_space<vmem>>, vector<24x32xf32>
    tpu.vector_store %arg20[%c0_35, %c0_36], %64 {strides = array<i32>} : memref<120x32xf32, #tpu.memory_space<vmem>>, vector<24x32xf32>,
    %c0_37 = arith.constant 0 : index
    %c24 = arith.constant 24 : index
    %c0_38 = arith.constant 0 : index
    %66 = vector.load %arg23[%c0_37, %c24, %c0_38] : memref<3x120x32xf32, #tpu.memory_space<vmem>>, vector<1x24x32xf32>
    %67 = vector.shape_cast %66 : vector<1x24x32xf32> to vector<24x32xf32>
    %c1_39 = arith.constant 1 : index
    %c24_40 = arith.constant 24 : index
    %c0_41 = arith.constant 0 : index
    %68 = vector.load %arg23[%c1_39, %c24_40, %c0_41] : memref<3x120x32xf32, #tpu.memory_space<vmem>>, vector<1x24x32xf32>
    %69 = vector.shape_cast %68 : vector<1x24x32xf32> to vector<24x32xf32>
    %c2_42 = arith.constant 2 : index
    %c24_43 = arith.constant 24 : index
    %c0_44 = arith.constant 0 : index
    %70 = vector.load %arg23[%c2_42, %c24_43, %c0_44] : memref<3x120x32xf32, #tpu.memory_space<vmem>>, vector<1x24x32xf32>
    %71 = vector.shape_cast %70 : vector<1x24x32xf32> to vector<24x32xf32>
    %72 = arith.truncf %64 : vector<24x32xf32> to vector<24x32xbf16>
    %cst_45 = arith.constant dense<0.000000e+00> : vector<24x96xf32>
    %73 = tpu.matmul %72, %28, %cst_45 {dimension_numbers = #tpu.dot_dimension_numbers<[1], [0], [0], [1], [0, 0, 1, 1], [], []>} : vector<24x32xbf16>, vector<32x96xbf16>, vector<24x96xf32> -> vector<24x96xf32>
    %74 = vector.extract_strided_slice %73 {offsets = [0, 0], sizes = [24, 32], strides = [1, 1]} : vector<24x96xf32> to vector<24x32xf32>
    %75 = arith.addf %67, %74 : vector<24x32xf32>
    %76 = arith.negf %75 : vector<24x32xf32>
    %77 = math.exp %76 : vector<24x32xf32>
    %cst_46 = arith.constant 1.000000e+00 : f32
    %78 = vector.broadcast %cst_46 : f32 to vector<24x32xf32>
    %79 = arith.addf %78, %77 : vector<24x32xf32>
    %80 = arith.divf %78, %79 : vector<24x32xf32>
    %81 = vector.extract_strided_slice %73 {offsets = [0, 32], sizes = [24, 32], strides = [1, 1]} : vector<24x96xf32> to vector<24x32xf32>
    %82 = arith.addf %69, %81 : vector<24x32xf32>
    %83 = arith.negf %82 : vector<24x32xf32>
    %84 = math.exp %83 : vector<24x32xf32>
    %cst_47 = arith.constant 1.000000e+00 : f32
    %85 = vector.broadcast %cst_47 : f32 to vector<24x32xf32>
    %86 = arith.addf %85, %84 : vector<24x32xf32>
    %87 = arith.divf %85, %86 : vector<24x32xf32>
    %88 = vector.extract_strided_slice %73 {offsets = [0, 64], sizes = [24, 32], strides = [1, 1]} : vector<24x96xf32> to vector<24x32xf32>
    %89 = arith.addf %88, %31 : vector<24x32xf32>
    %90 = arith.mulf %80, %89 : vector<24x32xf32>
    %91 = arith.addf %71, %90 : vector<24x32xf32>
    %92 = math.tanh %91 : vector<24x32xf32>
    %cst_48 = arith.constant 1.000000e+00 : f32
    %93 = vector.broadcast %cst_48 : f32 to vector<24x32xf32>
    %94 = arith.subf %93, %87 : vector<24x32xf32>
    %95 = arith.mulf %94, %92 : vector<24x32xf32>
    %96 = arith.mulf %87, %64 : vector<24x32xf32>
    %97 = arith.addf %95, %96 : vector<24x32xf32>
    %c24_49 = arith.constant 24 : index
    %c0_50 = arith.constant 0 : index
    %98 = vector.load %arg20[%c24_49, %c0_50] : memref<120x32xf32, #tpu.memory_space<vmem>>, vector<24x32xf32>
    tpu.vector_store %arg20[%c24_49, %c0_50], %97 {strides = array<i32>} : memref<120x32xf32, #tpu.memory_space<vmem>>, vector<24x32xf32>,
    %c0_51 = arith.constant 0 : index
    %c48 = arith.constant 48 : index
    %c0_52 = arith.constant 0 : index
    %99 = vector.load %arg23[%c0_51, %c48, %c0_52] : memref<3x120x32xf32, #tpu.memory_space<vmem>>, vector<1x24x32xf32>
    %100 = vector.shape_cast %99 : vector<1x24x32xf32> to vector<24x32xf32>
    %c1_53 = arith.constant 1 : index
    %c48_54 = arith.constant 48 : index
    %c0_55 = arith.constant 0 : index
    %101 = vector.load %arg23[%c1_53, %c48_54, %c0_55] : memref<3x120x32xf32, #tpu.memory_space<vmem>>, vector<1x24x32xf32>
    %102 = vector.shape_cast %101 : vector<1x24x32xf32> to vector<24x32xf32>
    %c2_56 = arith.constant 2 : index
    %c48_57 = arith.constant 48 : index
    %c0_58 = arith.constant 0 : index
    %103 = vector.load %arg23[%c2_56, %c48_57, %c0_58] : memref<3x120x32xf32, #tpu.memory_space<vmem>>, vector<1x24x32xf32>
    %104 = vector.shape_cast %103 : vector<1x24x32xf32> to vector<24x32xf32>
    %105 = arith.truncf %97 : vector<24x32xf32> to vector<24x32xbf16>
    %cst_59 = arith.constant dense<0.000000e+00> : vector<24x96xf32>
    %106 = tpu.matmul %105, %28, %cst_59 {dimension_numbers = #tpu.dot_dimension_numbers<[1], [0], [0], [1], [0, 0, 1, 1], [], []>} : vector<24x32xbf16>, vector<32x96xbf16>, vector<24x96xf32> -> vector<24x96xf32>
    %107 = vector.extract_strided_slice %106 {offsets = [0, 0], sizes = [24, 32], strides = [1, 1]} : vector<24x96xf32> to vector<24x32xf32>
    %108 = arith.addf %100, %107 : vector<24x32xf32>
    %109 = arith.negf %108 : vector<24x32xf32>
    %110 = math.exp %109 : vector<24x32xf32>
    %cst_60 = arith.constant 1.000000e+00 : f32
    %111 = vector.broadcast %cst_60 : f32 to vector<24x32xf32>
    %112 = arith.addf %111, %110 : vector<24x32xf32>
    %113 = arith.divf %111, %112 : vector<24x32xf32>
    %114 = vector.extract_strided_slice %106 {offsets = [0, 32], sizes = [24, 32], strides = [1, 1]} : vector<24x96xf32> to vector<24x32xf32>
    %115 = arith.addf %102, %114 : vector<24x32xf32>
    %116 = arith.negf %115 : vector<24x32xf32>
    %117 = math.exp %116 : vector<24x32xf32>
    %cst_61 = arith.constant 1.000000e+00 : f32
    %118 = vector.broadcast %cst_61 : f32 to vector<24x32xf32>
    %119 = arith.addf %118, %117 : vector<24x32xf32>
    %120 = arith.divf %118, %119 : vector<24x32xf32>
    %121 = vector.extract_strided_slice %106 {offsets = [0, 64], sizes = [24, 32], strides = [1, 1]} : vector<24x96xf32> to vector<24x32xf32>
    %122 = arith.addf %121, %31 : vector<24x32xf32>
    %123 = arith.mulf %113, %122 : vector<24x32xf32>
    %124 = arith.addf %104, %123 : vector<24x32xf32>
    %125 = math.tanh %124 : vector<24x32xf32>
    %cst_62 = arith.constant 1.000000e+00 : f32
    %126 = vector.broadcast %cst_62 : f32 to vector<24x32xf32>
    %127 = arith.subf %126, %120 : vector<24x32xf32>
    %128 = arith.mulf %127, %125 : vector<24x32xf32>
    %129 = arith.mulf %120, %97 : vector<24x32xf32>
    %130 = arith.addf %128, %129 : vector<24x32xf32>
    %c48_63 = arith.constant 48 : index
    %c0_64 = arith.constant 0 : index
    %131 = vector.load %arg20[%c48_63, %c0_64] : memref<120x32xf32, #tpu.memory_space<vmem>>, vector<24x32xf32>
    tpu.vector_store %arg20[%c48_63, %c0_64], %130 {strides = array<i32>} : memref<120x32xf32, #tpu.memory_space<vmem>>, vector<24x32xf32>,
    %c0_65 = arith.constant 0 : index
    %c72 = arith.constant 72 : index
    %c0_66 = arith.constant 0 : index
    %132 = vector.load %arg23[%c0_65, %c72, %c0_66] : memref<3x120x32xf32, #tpu.memory_space<vmem>>, vector<1x24x32xf32>
    %133 = vector.shape_cast %132 : vector<1x24x32xf32> to vector<24x32xf32>
    %c1_67 = arith.constant 1 : index
    %c72_68 = arith.constant 72 : index
    %c0_69 = arith.constant 0 : index
    %134 = vector.load %arg23[%c1_67, %c72_68, %c0_69] : memref<3x120x32xf32, #tpu.memory_space<vmem>>, vector<1x24x32xf32>
    %135 = vector.shape_cast %134 : vector<1x24x32xf32> to vector<24x32xf32>
    %c2_70 = arith.constant 2 : index
    %c72_71 = arith.constant 72 : index
    %c0_72 = arith.constant 0 : index
    %136 = vector.load %arg23[%c2_70, %c72_71, %c0_72] : memref<3x120x32xf32, #tpu.memory_space<vmem>>, vector<1x24x32xf32>
    %137 = vector.shape_cast %136 : vector<1x24x32xf32> to vector<24x32xf32>
    %138 = arith.truncf %130 : vector<24x32xf32> to vector<24x32xbf16>
    %cst_73 = arith.constant dense<0.000000e+00> : vector<24x96xf32>
    %139 = tpu.matmul %138, %28, %cst_73 {dimension_numbers = #tpu.dot_dimension_numbers<[1], [0], [0], [1], [0, 0, 1, 1], [], []>} : vector<24x32xbf16>, vector<32x96xbf16>, vector<24x96xf32> -> vector<24x96xf32>
    %140 = vector.extract_strided_slice %139 {offsets = [0, 0], sizes = [24, 32], strides = [1, 1]} : vector<24x96xf32> to vector<24x32xf32>
    %141 = arith.addf %133, %140 : vector<24x32xf32>
    %142 = arith.negf %141 : vector<24x32xf32>
    %143 = math.exp %142 : vector<24x32xf32>
    %cst_74 = arith.constant 1.000000e+00 : f32
    %144 = vector.broadcast %cst_74 : f32 to vector<24x32xf32>
    %145 = arith.addf %144, %143 : vector<24x32xf32>
    %146 = arith.divf %144, %145 : vector<24x32xf32>
    %147 = vector.extract_strided_slice %139 {offsets = [0, 32], sizes = [24, 32], strides = [1, 1]} : vector<24x96xf32> to vector<24x32xf32>
    %148 = arith.addf %135, %147 : vector<24x32xf32>
    %149 = arith.negf %148 : vector<24x32xf32>
    %150 = math.exp %149 : vector<24x32xf32>
    %cst_75 = arith.constant 1.000000e+00 : f32
    %151 = vector.broadcast %cst_75 : f32 to vector<24x32xf32>
    %152 = arith.addf %151, %150 : vector<24x32xf32>
    %153 = arith.divf %151, %152 : vector<24x32xf32>
    %154 = vector.extract_strided_slice %139 {offsets = [0, 64], sizes = [24, 32], strides = [1, 1]} : vector<24x96xf32> to vector<24x32xf32>
    %155 = arith.addf %154, %31 : vector<24x32xf32>
    %156 = arith.mulf %146, %155 : vector<24x32xf32>
    %157 = arith.addf %137, %156 : vector<24x32xf32>
    %158 = math.tanh %157 : vector<24x32xf32>
    %cst_76 = arith.constant 1.000000e+00 : f32
    %159 = vector.broadcast %cst_76 : f32 to vector<24x32xf32>
    %160 = arith.subf %159, %153 : vector<24x32xf32>
    %161 = arith.mulf %160, %158 : vector<24x32xf32>
    %162 = arith.mulf %153, %130 : vector<24x32xf32>
    %163 = arith.addf %161, %162 : vector<24x32xf32>
    %c72_77 = arith.constant 72 : index
    %c0_78 = arith.constant 0 : index
    %164 = vector.load %arg20[%c72_77, %c0_78] : memref<120x32xf32, #tpu.memory_space<vmem>>, vector<24x32xf32>
    tpu.vector_store %arg20[%c72_77, %c0_78], %163 {strides = array<i32>} : memref<120x32xf32, #tpu.memory_space<vmem>>, vector<24x32xf32>,
    %c0_79 = arith.constant 0 : index
    %c96 = arith.constant 96 : index
    %c0_80 = arith.constant 0 : index
    %165 = vector.load %arg23[%c0_79, %c96, %c0_80] : memref<3x120x32xf32, #tpu.memory_space<vmem>>, vector<1x24x32xf32>
    %166 = vector.shape_cast %165 : vector<1x24x32xf32> to vector<24x32xf32>
    %c1_81 = arith.constant 1 : index
    %c96_82 = arith.constant 96 : index
    %c0_83 = arith.constant 0 : index
    %167 = vector.load %arg23[%c1_81, %c96_82, %c0_83] : memref<3x120x32xf32, #tpu.memory_space<vmem>>, vector<1x24x32xf32>
    %168 = vector.shape_cast %167 : vector<1x24x32xf32> to vector<24x32xf32>
    %c2_84 = arith.constant 2 : index
    %c96_85 = arith.constant 96 : index
    %c0_86 = arith.constant 0 : index
    %169 = vector.load %arg23[%c2_84, %c96_85, %c0_86] : memref<3x120x32xf32, #tpu.memory_space<vmem>>, vector<1x24x32xf32>
    %170 = vector.shape_cast %169 : vector<1x24x32xf32> to vector<24x32xf32>
    %171 = arith.truncf %163 : vector<24x32xf32> to vector<24x32xbf16>
    %cst_87 = arith.constant dense<0.000000e+00> : vector<24x96xf32>
    %172 = tpu.matmul %171, %28, %cst_87 {dimension_numbers = #tpu.dot_dimension_numbers<[1], [0], [0], [1], [0, 0, 1, 1], [], []>} : vector<24x32xbf16>, vector<32x96xbf16>, vector<24x96xf32> -> vector<24x96xf32>
    %173 = vector.extract_strided_slice %172 {offsets = [0, 0], sizes = [24, 32], strides = [1, 1]} : vector<24x96xf32> to vector<24x32xf32>
    %174 = arith.addf %166, %173 : vector<24x32xf32>
    %175 = arith.negf %174 : vector<24x32xf32>
    %176 = math.exp %175 : vector<24x32xf32>
    %cst_88 = arith.constant 1.000000e+00 : f32
    %177 = vector.broadcast %cst_88 : f32 to vector<24x32xf32>
    %178 = arith.addf %177, %176 : vector<24x32xf32>
    %179 = arith.divf %177, %178 : vector<24x32xf32>
    %180 = vector.extract_strided_slice %172 {offsets = [0, 32], sizes = [24, 32], strides = [1, 1]} : vector<24x96xf32> to vector<24x32xf32>
    %181 = arith.addf %168, %180 : vector<24x32xf32>
    %182 = arith.negf %181 : vector<24x32xf32>
    %183 = math.exp %182 : vector<24x32xf32>
    %cst_89 = arith.constant 1.000000e+00 : f32
    %184 = vector.broadcast %cst_89 : f32 to vector<24x32xf32>
    %185 = arith.addf %184, %183 : vector<24x32xf32>
    %186 = arith.divf %184, %185 : vector<24x32xf32>
    %187 = vector.extract_strided_slice %172 {offsets = [0, 64], sizes = [24, 32], strides = [1, 1]} : vector<24x96xf32> to vector<24x32xf32>
    %188 = arith.addf %187, %31 : vector<24x32xf32>
    %189 = arith.mulf %179, %188 : vector<24x32xf32>
    %190 = arith.addf %170, %189 : vector<24x32xf32>
    %191 = math.tanh %190 : vector<24x32xf32>
    %cst_90 = arith.constant 1.000000e+00 : f32
    %192 = vector.broadcast %cst_90 : f32 to vector<24x32xf32>
    %193 = arith.subf %192, %186 : vector<24x32xf32>
    %194 = arith.mulf %193, %191 : vector<24x32xf32>
    %195 = arith.mulf %186, %163 : vector<24x32xf32>
    %196 = arith.addf %194, %195 : vector<24x32xf32>
    %c96_91 = arith.constant 96 : index
    %c0_92 = arith.constant 0 : index
    %197 = vector.load %arg20[%c96_91, %c0_92] : memref<120x32xf32, #tpu.memory_space<vmem>>, vector<24x32xf32>
    tpu.vector_store %arg20[%c96_91, %c0_92], %196 {strides = array<i32>} : memref<120x32xf32, #tpu.memory_space<vmem>>, vector<24x32xf32>,
    %c0_93 = arith.constant 0 : index
    %c0_94 = arith.constant 0 : index
    %198 = vector.load %arg20[%c0_93, %c0_94] : memref<120x32xf32, #tpu.memory_space<vmem>>, vector<120x32xf32>
    %199 = arith.truncf %198 : vector<120x32xf32> to vector<120x32xbf16>
    %c0_95 = arith.constant 0 : index
    %c0_96 = arith.constant 0 : index
    %200 = vector.load %arg7[%c0_95, %c0_96] : memref<32x96xbf16, #tpu.memory_space<vmem>>, vector<32x96xbf16>
    %cst_97 = arith.constant dense<0.000000e+00> : vector<120x96xf32>
    %201 = tpu.matmul %199, %200, %cst_97 {dimension_numbers = #tpu.dot_dimension_numbers<[1], [0], [0], [1], [0, 0, 1, 1], [], []>} : vector<120x32xbf16>, vector<32x96xbf16>, vector<120x96xf32> -> vector<120x96xf32>
    %c0_98 = arith.constant 0 : index
    %c0_99 = arith.constant 0 : index
    %202 = vector.load %arg9[%c0_98, %c0_99] : memref<1x96xf32, #tpu.memory_space<vmem>>, vector<1x96xf32>
    %203 = vector.broadcast %202 : vector<1x96xf32> to vector<120x96xf32>
    %204 = arith.addf %201, %203 : vector<120x96xf32>
    %205 = vector.extract_strided_slice %204 {offsets = [0, 0], sizes = [120, 32], strides = [1, 1]} : vector<120x96xf32> to vector<120x32xf32>
    %c0_100 = arith.constant 0 : index
    %c0_101 = arith.constant 0 : index
    %c0_102 = arith.constant 0 : index
    %206 = vector.load %arg24[%c0_100, %c0_101, %c0_102] : memref<3x120x32xf32, #tpu.memory_space<vmem>>, vector<1x120x32xf32>
    %207 = vector.shape_cast %206 : vector<1x120x32xf32> to vector<120x32xf32>
    %208 = vector.shape_cast %205 : vector<120x32xf32> to vector<1x120x32xf32>
    tpu.vector_store %arg24[%c0_100, %c0_101, %c0_102], %208 {strides = array<i32>} : memref<3x120x32xf32, #tpu.memory_space<vmem>>, vector<1x120x32xf32>,
    %209 = vector.extract_strided_slice %204 {offsets = [0, 32], sizes = [120, 32], strides = [1, 1]} : vector<120x96xf32> to vector<120x32xf32>
    %c1_103 = arith.constant 1 : index
    %c0_104 = arith.constant 0 : index
    %c0_105 = arith.constant 0 : index
    %210 = vector.load %arg24[%c1_103, %c0_104, %c0_105] : memref<3x120x32xf32, #tpu.memory_space<vmem>>, vector<1x120x32xf32>
    %211 = vector.shape_cast %210 : vector<1x120x32xf32> to vector<120x32xf32>
    %212 = vector.shape_cast %209 : vector<120x32xf32> to vector<1x120x32xf32>
    tpu.vector_store %arg24[%c1_103, %c0_104, %c0_105], %212 {strides = array<i32>} : memref<3x120x32xf32, #tpu.memory_space<vmem>>, vector<1x120x32xf32>,
    %213 = vector.extract_strided_slice %204 {offsets = [0, 64], sizes = [120, 32], strides = [1, 1]} : vector<120x96xf32> to vector<120x32xf32>
    %c2_106 = arith.constant 2 : index
    %c0_107 = arith.constant 0 : index
    %c0_108 = arith.constant 0 : index
    %214 = vector.load %arg24[%c2_106, %c0_107, %c0_108] : memref<3x120x32xf32, #tpu.memory_space<vmem>>, vector<1x120x32xf32>
    %215 = vector.shape_cast %214 : vector<1x120x32xf32> to vector<120x32xf32>
    %216 = vector.shape_cast %213 : vector<120x32xf32> to vector<1x120x32xf32>
    tpu.vector_store %arg24[%c2_106, %c0_107, %c0_108], %216 {strides = array<i32>} : memref<3x120x32xf32, #tpu.memory_space<vmem>>, vector<1x120x32xf32>,
    %c0_109 = arith.constant 0 : index
    %c0_110 = arith.constant 0 : index
    %217 = vector.load %arg8[%c0_109, %c0_110] : memref<32x96xbf16, #tpu.memory_space<vmem>>, vector<32x96xbf16>
    %c0_111 = arith.constant 0 : index
    %c0_112 = arith.constant 0 : index
    %218 = vector.load %arg10[%c0_111, %c0_112] : memref<1x32xf32, #tpu.memory_space<vmem>>, vector<1x32xf32>
    %219 = vector.shape_cast %218 : vector<1x32xf32> to vector<1x32xf32>
    %220 = vector.broadcast %219 : vector<1x32xf32> to vector<8x32xf32>
    %cst_113 = arith.constant 0.000000e+00 : f32
    %221 = vector.broadcast %cst_113 : f32 to vector<8x32xf32>
    %c0_114 = arith.constant 0 : index
    %c0_115 = arith.constant 0 : index
    %c0_116 = arith.constant 0 : index
    %222 = vector.load %arg24[%c0_114, %c0_115, %c0_116] : memref<3x120x32xf32, #tpu.memory_space<vmem>>, vector<1x8x32xf32>
    %223 = vector.shape_cast %222 : vector<1x8x32xf32> to vector<8x32xf32>
    %c1_117 = arith.constant 1 : index
    %c0_118 = arith.constant 0 : index
    %c0_119 = arith.constant 0 : index
    %224 = vector.load %arg24[%c1_117, %c0_118, %c0_119] : memref<3x120x32xf32, #tpu.memory_space<vmem>>, vector<1x8x32xf32>
    %225 = vector.shape_cast %224 : vector<1x8x32xf32> to vector<8x32xf32>
    %c2_120 = arith.constant 2 : index
    %c0_121 = arith.constant 0 : index
    %c0_122 = arith.constant 0 : index
    %226 = vector.load %arg24[%c2_120, %c0_121, %c0_122] : memref<3x120x32xf32, #tpu.memory_space<vmem>>, vector<1x8x32xf32>
    %227 = vector.shape_cast %226 : vector<1x8x32xf32> to vector<8x32xf32>
    %228 = arith.truncf %221 : vector<8x32xf32> to vector<8x32xbf16>
    %cst_123 = arith.constant dense<0.000000e+00> : vector<8x96xf32>
    %229 = tpu.matmul %228, %217, %cst_123 {dimension_numbers = #tpu.dot_dimension_numbers<[1], [0], [0], [1], [0, 0, 1, 1], [], []>} : vector<8x32xbf16>, vector<32x96xbf16>, vector<8x96xf32> -> vector<8x96xf32>
    %230 = vector.extract_strided_slice %229 {offsets = [0, 0], sizes = [8, 32], strides = [1, 1]} : vector<8x96xf32> to vector<8x32xf32>
    %231 = arith.addf %223, %230 : vector<8x32xf32>
    %232 = arith.negf %231 : vector<8x32xf32>
    %233 = math.exp %232 : vector<8x32xf32>
    %cst_124 = arith.constant 1.000000e+00 : f32
    %234 = vector.broadcast %cst_124 : f32 to vector<8x32xf32>
    %235 = arith.addf %234, %233 : vector<8x32xf32>
    %236 = arith.divf %234, %235 : vector<8x32xf32>
    %237 = vector.extract_strided_slice %229 {offsets = [0, 32], sizes = [8, 32], strides = [1, 1]} : vector<8x96xf32> to vector<8x32xf32>
    %238 = arith.addf %225, %237 : vector<8x32xf32>
    %239 = arith.negf %238 : vector<8x32xf32>
    %240 = math.exp %239 : vector<8x32xf32>
    %cst_125 = arith.constant 1.000000e+00 : f32
    %241 = vector.broadcast %cst_125 : f32 to vector<8x32xf32>
    %242 = arith.addf %241, %240 : vector<8x32xf32>
    %243 = arith.divf %241, %242 : vector<8x32xf32>
    %244 = vector.extract_strided_slice %229 {offsets = [0, 64], sizes = [8, 32], strides = [1, 1]} : vector<8x96xf32> to vector<8x32xf32>
    %245 = arith.addf %244, %220 : vector<8x32xf32>
    %246 = arith.mulf %236, %245 : vector<8x32xf32>
    %247 = arith.addf %227, %246 : vector<8x32xf32>
    %248 = math.tanh %247 : vector<8x32xf32>
    %cst_126 = arith.constant 1.000000e+00 : f32
    %249 = vector.broadcast %cst_126 : f32 to vector<8x32xf32>
    %250 = arith.subf %249, %243 : vector<8x32xf32>
    %251 = arith.mulf %250, %248 : vector<8x32xf32>
    %252 = arith.mulf %243, %221 : vector<8x32xf32>
    %253 = arith.addf %251, %252 : vector<8x32xf32>
    %c0_127 = arith.constant 0 : index
    %c24_128 = arith.constant 24 : index
    %c0_129 = arith.constant 0 : index
    %254 = vector.load %arg24[%c0_127, %c24_128, %c0_129] : memref<3x120x32xf32, #tpu.memory_space<vmem>>, vector<1x8x32xf32>
    %255 = vector.shape_cast %254 : vector<1x8x32xf32> to vector<8x32xf32>
    %c1_130 = arith.constant 1 : index
    %c24_131 = arith.constant 24 : index
    %c0_132 = arith.constant 0 : index
    %256 = vector.load %arg24[%c1_130, %c24_131, %c0_132] : memref<3x120x32xf32, #tpu.memory_space<vmem>>, vector<1x8x32xf32>
    %257 = vector.shape_cast %256 : vector<1x8x32xf32> to vector<8x32xf32>
    %c2_133 = arith.constant 2 : index
    %c24_134 = arith.constant 24 : index
    %c0_135 = arith.constant 0 : index
    %258 = vector.load %arg24[%c2_133, %c24_134, %c0_135] : memref<3x120x32xf32, #tpu.memory_space<vmem>>, vector<1x8x32xf32>
    %259 = vector.shape_cast %258 : vector<1x8x32xf32> to vector<8x32xf32>
    %260 = arith.truncf %253 : vector<8x32xf32> to vector<8x32xbf16>
    %cst_136 = arith.constant dense<0.000000e+00> : vector<8x96xf32>
    %261 = tpu.matmul %260, %217, %cst_136 {dimension_numbers = #tpu.dot_dimension_numbers<[1], [0], [0], [1], [0, 0, 1, 1], [], []>} : vector<8x32xbf16>, vector<32x96xbf16>, vector<8x96xf32> -> vector<8x96xf32>
    %262 = vector.extract_strided_slice %261 {offsets = [0, 0], sizes = [8, 32], strides = [1, 1]} : vector<8x96xf32> to vector<8x32xf32>
    %263 = arith.addf %255, %262 : vector<8x32xf32>
    %264 = arith.negf %263 : vector<8x32xf32>
    %265 = math.exp %264 : vector<8x32xf32>
    %cst_137 = arith.constant 1.000000e+00 : f32
    %266 = vector.broadcast %cst_137 : f32 to vector<8x32xf32>
    %267 = arith.addf %266, %265 : vector<8x32xf32>
    %268 = arith.divf %266, %267 : vector<8x32xf32>
    %269 = vector.extract_strided_slice %261 {offsets = [0, 32], sizes = [8, 32], strides = [1, 1]} : vector<8x96xf32> to vector<8x32xf32>
    %270 = arith.addf %257, %269 : vector<8x32xf32>
    %271 = arith.negf %270 : vector<8x32xf32>
    %272 = math.exp %271 : vector<8x32xf32>
    %cst_138 = arith.constant 1.000000e+00 : f32
    %273 = vector.broadcast %cst_138 : f32 to vector<8x32xf32>
    %274 = arith.addf %273, %272 : vector<8x32xf32>
    %275 = arith.divf %273, %274 : vector<8x32xf32>
    %276 = vector.extract_strided_slice %261 {offsets = [0, 64], sizes = [8, 32], strides = [1, 1]} : vector<8x96xf32> to vector<8x32xf32>
    %277 = arith.addf %276, %220 : vector<8x32xf32>
    %278 = arith.mulf %268, %277 : vector<8x32xf32>
    %279 = arith.addf %259, %278 : vector<8x32xf32>
    %280 = math.tanh %279 : vector<8x32xf32>
    %cst_139 = arith.constant 1.000000e+00 : f32
    %281 = vector.broadcast %cst_139 : f32 to vector<8x32xf32>
    %282 = arith.subf %281, %275 : vector<8x32xf32>
    %283 = arith.mulf %282, %280 : vector<8x32xf32>
    %284 = arith.mulf %275, %253 : vector<8x32xf32>
    %285 = arith.addf %283, %284 : vector<8x32xf32>
    %c0_140 = arith.constant 0 : index
    %c48_141 = arith.constant 48 : index
    %c0_142 = arith.constant 0 : index
    %286 = vector.load %arg24[%c0_140, %c48_141, %c0_142] : memref<3x120x32xf32, #tpu.memory_space<vmem>>, vector<1x8x32xf32>
    %287 = vector.shape_cast %286 : vector<1x8x32xf32> to vector<8x32xf32>
    %c1_143 = arith.constant 1 : index
    %c48_144 = arith.constant 48 : index
    %c0_145 = arith.constant 0 : index
    %288 = vector.load %arg24[%c1_143, %c48_144, %c0_145] : memref<3x120x32xf32, #tpu.memory_space<vmem>>, vector<1x8x32xf32>
    %289 = vector.shape_cast %288 : vector<1x8x32xf32> to vector<8x32xf32>
    %c2_146 = arith.constant 2 : index
    %c48_147 = arith.constant 48 : index
    %c0_148 = arith.constant 0 : index
    %290 = vector.load %arg24[%c2_146, %c48_147, %c0_148] : memref<3x120x32xf32, #tpu.memory_space<vmem>>, vector<1x8x32xf32>
    %291 = vector.shape_cast %290 : vector<1x8x32xf32> to vector<8x32xf32>
    %292 = arith.truncf %285 : vector<8x32xf32> to vector<8x32xbf16>
    %cst_149 = arith.constant dense<0.000000e+00> : vector<8x96xf32>
    %293 = tpu.matmul %292, %217, %cst_149 {dimension_numbers = #tpu.dot_dimension_numbers<[1], [0], [0], [1], [0, 0, 1, 1], [], []>} : vector<8x32xbf16>, vector<32x96xbf16>, vector<8x96xf32> -> vector<8x96xf32>
    %294 = vector.extract_strided_slice %293 {offsets = [0, 0], sizes = [8, 32], strides = [1, 1]} : vector<8x96xf32> to vector<8x32xf32>
    %295 = arith.addf %287, %294 : vector<8x32xf32>
    %296 = arith.negf %295 : vector<8x32xf32>
    %297 = math.exp %296 : vector<8x32xf32>
    %cst_150 = arith.constant 1.000000e+00 : f32
    %298 = vector.broadcast %cst_150 : f32 to vector<8x32xf32>
    %299 = arith.addf %298, %297 : vector<8x32xf32>
    %300 = arith.divf %298, %299 : vector<8x32xf32>
    %301 = vector.extract_strided_slice %293 {offsets = [0, 32], sizes = [8, 32], strides = [1, 1]} : vector<8x96xf32> to vector<8x32xf32>
    %302 = arith.addf %289, %301 : vector<8x32xf32>
    %303 = arith.negf %302 : vector<8x32xf32>
    %304 = math.exp %303 : vector<8x32xf32>
    %cst_151 = arith.constant 1.000000e+00 : f32
    %305 = vector.broadcast %cst_151 : f32 to vector<8x32xf32>
    %306 = arith.addf %305, %304 : vector<8x32xf32>
    %307 = arith.divf %305, %306 : vector<8x32xf32>
    %308 = vector.extract_strided_slice %293 {offsets = [0, 64], sizes = [8, 32], strides = [1, 1]} : vector<8x96xf32> to vector<8x32xf32>
    %309 = arith.addf %308, %220 : vector<8x32xf32>
    %310 = arith.mulf %300, %309 : vector<8x32xf32>
    %311 = arith.addf %291, %310 : vector<8x32xf32>
    %312 = math.tanh %311 : vector<8x32xf32>
    %cst_152 = arith.constant 1.000000e+00 : f32
    %313 = vector.broadcast %cst_152 : f32 to vector<8x32xf32>
    %314 = arith.subf %313, %307 : vector<8x32xf32>
    %315 = arith.mulf %314, %312 : vector<8x32xf32>
    %316 = arith.mulf %307, %285 : vector<8x32xf32>
    %317 = arith.addf %315, %316 : vector<8x32xf32>
    %c0_153 = arith.constant 0 : index
    %c72_154 = arith.constant 72 : index
    %c0_155 = arith.constant 0 : index
    %318 = vector.load %arg24[%c0_153, %c72_154, %c0_155] : memref<3x120x32xf32, #tpu.memory_space<vmem>>, vector<1x8x32xf32>
    %319 = vector.shape_cast %318 : vector<1x8x32xf32> to vector<8x32xf32>
    %c1_156 = arith.constant 1 : index
    %c72_157 = arith.constant 72 : index
    %c0_158 = arith.constant 0 : index
    %320 = vector.load %arg24[%c1_156, %c72_157, %c0_158] : memref<3x120x32xf32, #tpu.memory_space<vmem>>, vector<1x8x32xf32>
    %321 = vector.shape_cast %320 : vector<1x8x32xf32> to vector<8x32xf32>
    %c2_159 = arith.constant 2 : index
    %c72_160 = arith.constant 72 : index
    %c0_161 = arith.constant 0 : index
    %322 = vector.load %arg24[%c2_159, %c72_160, %c0_161] : memref<3x120x32xf32, #tpu.memory_space<vmem>>, vector<1x8x32xf32>
    %323 = vector.shape_cast %322 : vector<1x8x32xf32> to vector<8x32xf32>
    %324 = arith.truncf %317 : vector<8x32xf32> to vector<8x32xbf16>
    %cst_162 = arith.constant dense<0.000000e+00> : vector<8x96xf32>
    %325 = tpu.matmul %324, %217, %cst_162 {dimension_numbers = #tpu.dot_dimension_numbers<[1], [0], [0], [1], [0, 0, 1, 1], [], []>} : vector<8x32xbf16>, vector<32x96xbf16>, vector<8x96xf32> -> vector<8x96xf32>
    %326 = vector.extract_strided_slice %325 {offsets = [0, 0], sizes = [8, 32], strides = [1, 1]} : vector<8x96xf32> to vector<8x32xf32>
    %327 = arith.addf %319, %326 : vector<8x32xf32>
    %328 = arith.negf %327 : vector<8x32xf32>
    %329 = math.exp %328 : vector<8x32xf32>
    %cst_163 = arith.constant 1.000000e+00 : f32
    %330 = vector.broadcast %cst_163 : f32 to vector<8x32xf32>
    %331 = arith.addf %330, %329 : vector<8x32xf32>
    %332 = arith.divf %330, %331 : vector<8x32xf32>
    %333 = vector.extract_strided_slice %325 {offsets = [0, 32], sizes = [8, 32], strides = [1, 1]} : vector<8x96xf32> to vector<8x32xf32>
    %334 = arith.addf %321, %333 : vector<8x32xf32>
    %335 = arith.negf %334 : vector<8x32xf32>
    %336 = math.exp %335 : vector<8x32xf32>
    %cst_164 = arith.constant 1.000000e+00 : f32
    %337 = vector.broadcast %cst_164 : f32 to vector<8x32xf32>
    %338 = arith.addf %337, %336 : vector<8x32xf32>
    %339 = arith.divf %337, %338 : vector<8x32xf32>
    %340 = vector.extract_strided_slice %325 {offsets = [0, 64], sizes = [8, 32], strides = [1, 1]} : vector<8x96xf32> to vector<8x32xf32>
    %341 = arith.addf %340, %220 : vector<8x32xf32>
    %342 = arith.mulf %332, %341 : vector<8x32xf32>
    %343 = arith.addf %323, %342 : vector<8x32xf32>
    %344 = math.tanh %343 : vector<8x32xf32>
    %cst_165 = arith.constant 1.000000e+00 : f32
    %345 = vector.broadcast %cst_165 : f32 to vector<8x32xf32>
    %346 = arith.subf %345, %339 : vector<8x32xf32>
    %347 = arith.mulf %346, %344 : vector<8x32xf32>
    %348 = arith.mulf %339, %317 : vector<8x32xf32>
    %349 = arith.addf %347, %348 : vector<8x32xf32>
    %c0_166 = arith.constant 0 : index
    %c96_167 = arith.constant 96 : index
    %c0_168 = arith.constant 0 : index
    %350 = vector.load %arg24[%c0_166, %c96_167, %c0_168] : memref<3x120x32xf32, #tpu.memory_space<vmem>>, vector<1x8x32xf32>
    %351 = vector.shape_cast %350 : vector<1x8x32xf32> to vector<8x32xf32>
    %c1_169 = arith.constant 1 : index
    %c96_170 = arith.constant 96 : index
    %c0_171 = arith.constant 0 : index
    %352 = vector.load %arg24[%c1_169, %c96_170, %c0_171] : memref<3x120x32xf32, #tpu.memory_space<vmem>>, vector<1x8x32xf32>
    %353 = vector.shape_cast %352 : vector<1x8x32xf32> to vector<8x32xf32>
    %c2_172 = arith.constant 2 : index
    %c96_173 = arith.constant 96 : index
    %c0_174 = arith.constant 0 : index
    %354 = vector.load %arg24[%c2_172, %c96_173, %c0_174] : memref<3x120x32xf32, #tpu.memory_space<vmem>>, vector<1x8x32xf32>
    %355 = vector.shape_cast %354 : vector<1x8x32xf32> to vector<8x32xf32>
    %356 = arith.truncf %349 : vector<8x32xf32> to vector<8x32xbf16>
    %cst_175 = arith.constant dense<0.000000e+00> : vector<8x96xf32>
    %357 = tpu.matmul %356, %217, %cst_175 {dimension_numbers = #tpu.dot_dimension_numbers<[1], [0], [0], [1], [0, 0, 1, 1], [], []>} : vector<8x32xbf16>, vector<32x96xbf16>, vector<8x96xf32> -> vector<8x96xf32>
    %358 = vector.extract_strided_slice %357 {offsets = [0, 0], sizes = [8, 32], strides = [1, 1]} : vector<8x96xf32> to vector<8x32xf32>
    %359 = arith.addf %351, %358 : vector<8x32xf32>
    %360 = arith.negf %359 : vector<8x32xf32>
    %361 = math.exp %360 : vector<8x32xf32>
    %cst_176 = arith.constant 1.000000e+00 : f32
    %362 = vector.broadcast %cst_176 : f32 to vector<8x32xf32>
    %363 = arith.addf %362, %361 : vector<8x32xf32>
    %364 = arith.divf %362, %363 : vector<8x32xf32>
    %365 = vector.extract_strided_slice %357 {offsets = [0, 32], sizes = [8, 32], strides = [1, 1]} : vector<8x96xf32> to vector<8x32xf32>
    %366 = arith.addf %353, %365 : vector<8x32xf32>
    %367 = arith.negf %366 : vector<8x32xf32>
    %368 = math.exp %367 : vector<8x32xf32>
    %cst_177 = arith.constant 1.000000e+00 : f32
    %369 = vector.broadcast %cst_177 : f32 to vector<8x32xf32>
    %370 = arith.addf %369, %368 : vector<8x32xf32>
    %371 = arith.divf %369, %370 : vector<8x32xf32>
    %372 = vector.extract_strided_slice %357 {offsets = [0, 64], sizes = [8, 32], strides = [1, 1]} : vector<8x96xf32> to vector<8x32xf32>
    %373 = arith.addf %372, %220 : vector<8x32xf32>
    %374 = arith.mulf %364, %373 : vector<8x32xf32>
    %375 = arith.addf %355, %374 : vector<8x32xf32>
    %376 = math.tanh %375 : vector<8x32xf32>
    %cst_178 = arith.constant 1.000000e+00 : f32
    %377 = vector.broadcast %cst_178 : f32 to vector<8x32xf32>
    %378 = arith.subf %377, %371 : vector<8x32xf32>
    %379 = arith.mulf %378, %376 : vector<8x32xf32>
    %380 = arith.mulf %371, %349 : vector<8x32xf32>
    %381 = arith.addf %379, %380 : vector<8x32xf32>
    %c0_179 = arith.constant 0 : index
    %c8 = arith.constant 8 : index
    %c0_180 = arith.constant 0 : index
    %382 = vector.load %arg24[%c0_179, %c8, %c0_180] : memref<3x120x32xf32, #tpu.memory_space<vmem>>, vector<1x8x32xf32>
    %383 = vector.shape_cast %382 : vector<1x8x32xf32> to vector<8x32xf32>
    %c1_181 = arith.constant 1 : index
    %c8_182 = arith.constant 8 : index
    %c0_183 = arith.constant 0 : index
    %384 = vector.load %arg24[%c1_181, %c8_182, %c0_183] : memref<3x120x32xf32, #tpu.memory_space<vmem>>, vector<1x8x32xf32>
    %385 = vector.shape_cast %384 : vector<1x8x32xf32> to vector<8x32xf32>
    %c2_184 = arith.constant 2 : index
    %c8_185 = arith.constant 8 : index
    %c0_186 = arith.constant 0 : index
    %386 = vector.load %arg24[%c2_184, %c8_185, %c0_186] : memref<3x120x32xf32, #tpu.memory_space<vmem>>, vector<1x8x32xf32>
    %387 = vector.shape_cast %386 : vector<1x8x32xf32> to vector<8x32xf32>
    %388 = arith.truncf %381 : vector<8x32xf32> to vector<8x32xbf16>
    %cst_187 = arith.constant dense<0.000000e+00> : vector<8x96xf32>
    %389 = tpu.matmul %388, %217, %cst_187 {dimension_numbers = #tpu.dot_dimension_numbers<[1], [0], [0], [1], [0, 0, 1, 1], [], []>} : vector<8x32xbf16>, vector<32x96xbf16>, vector<8x96xf32> -> vector<8x96xf32>
    %390 = vector.extract_strided_slice %389 {offsets = [0, 0], sizes = [8, 32], strides = [1, 1]} : vector<8x96xf32> to vector<8x32xf32>
    %391 = arith.addf %383, %390 : vector<8x32xf32>
    %392 = arith.negf %391 : vector<8x32xf32>
    %393 = math.exp %392 : vector<8x32xf32>
    %cst_188 = arith.constant 1.000000e+00 : f32
    %394 = vector.broadcast %cst_188 : f32 to vector<8x32xf32>
    %395 = arith.addf %394, %393 : vector<8x32xf32>
    %396 = arith.divf %394, %395 : vector<8x32xf32>
    %397 = vector.extract_strided_slice %389 {offsets = [0, 32], sizes = [8, 32], strides = [1, 1]} : vector<8x96xf32> to vector<8x32xf32>
    %398 = arith.addf %385, %397 : vector<8x32xf32>
    %399 = arith.negf %398 : vector<8x32xf32>
    %400 = math.exp %399 : vector<8x32xf32>
    %cst_189 = arith.constant 1.000000e+00 : f32
    %401 = vector.broadcast %cst_189 : f32 to vector<8x32xf32>
    %402 = arith.addf %401, %400 : vector<8x32xf32>
    %403 = arith.divf %401, %402 : vector<8x32xf32>
    %404 = vector.extract_strided_slice %389 {offsets = [0, 64], sizes = [8, 32], strides = [1, 1]} : vector<8x96xf32> to vector<8x32xf32>
    %405 = arith.addf %404, %220 : vector<8x32xf32>
    %406 = arith.mulf %396, %405 : vector<8x32xf32>
    %407 = arith.addf %387, %406 : vector<8x32xf32>
    %408 = math.tanh %407 : vector<8x32xf32>
    %cst_190 = arith.constant 1.000000e+00 : f32
    %409 = vector.broadcast %cst_190 : f32 to vector<8x32xf32>
    %410 = arith.subf %409, %403 : vector<8x32xf32>
    %411 = arith.mulf %410, %408 : vector<8x32xf32>
    %412 = arith.mulf %403, %381 : vector<8x32xf32>
    %413 = arith.addf %411, %412 : vector<8x32xf32>
    %c0_191 = arith.constant 0 : index
    %c32 = arith.constant 32 : index
    %c0_192 = arith.constant 0 : index
    %414 = vector.load %arg24[%c0_191, %c32, %c0_192] : memref<3x120x32xf32, #tpu.memory_space<vmem>>, vector<1x8x32xf32>
    %415 = vector.shape_cast %414 : vector<1x8x32xf32> to vector<8x32xf32>
    %c1_193 = arith.constant 1 : index
    %c32_194 = arith.constant 32 : index
    %c0_195 = arith.constant 0 : index
    %416 = vector.load %arg24[%c1_193, %c32_194, %c0_195] : memref<3x120x32xf32, #tpu.memory_space<vmem>>, vector<1x8x32xf32>
    %417 = vector.shape_cast %416 : vector<1x8x32xf32> to vector<8x32xf32>
    %c2_196 = arith.constant 2 : index
    %c32_197 = arith.constant 32 : index
    %c0_198 = arith.constant 0 : index
    %418 = vector.load %arg24[%c2_196, %c32_197, %c0_198] : memref<3x120x32xf32, #tpu.memory_space<vmem>>, vector<1x8x32xf32>
    %419 = vector.shape_cast %418 : vector<1x8x32xf32> to vector<8x32xf32>
    %420 = arith.truncf %413 : vector<8x32xf32> to vector<8x32xbf16>
    %cst_199 = arith.constant dense<0.000000e+00> : vector<8x96xf32>
    %421 = tpu.matmul %420, %217, %cst_199 {dimension_numbers = #tpu.dot_dimension_numbers<[1], [0], [0], [1], [0, 0, 1, 1], [], []>} : vector<8x32xbf16>, vector<32x96xbf16>, vector<8x96xf32> -> vector<8x96xf32>
    %422 = vector.extract_strided_slice %421 {offsets = [0, 0], sizes = [8, 32], strides = [1, 1]} : vector<8x96xf32> to vector<8x32xf32>
    %423 = arith.addf %415, %422 : vector<8x32xf32>
    %424 = arith.negf %423 : vector<8x32xf32>
    %425 = math.exp %424 : vector<8x32xf32>
    %cst_200 = arith.constant 1.000000e+00 : f32
    %426 = vector.broadcast %cst_200 : f32 to vector<8x32xf32>
    %427 = arith.addf %426, %425 : vector<8x32xf32>
    %428 = arith.divf %426, %427 : vector<8x32xf32>
    %429 = vector.extract_strided_slice %421 {offsets = [0, 32], sizes = [8, 32], strides = [1, 1]} : vector<8x96xf32> to vector<8x32xf32>
    %430 = arith.addf %417, %429 : vector<8x32xf32>
    %431 = arith.negf %430 : vector<8x32xf32>
    %432 = math.exp %431 : vector<8x32xf32>
    %cst_201 = arith.constant 1.000000e+00 : f32
    %433 = vector.broadcast %cst_201 : f32 to vector<8x32xf32>
    %434 = arith.addf %433, %432 : vector<8x32xf32>
    %435 = arith.divf %433, %434 : vector<8x32xf32>
    %436 = vector.extract_strided_slice %421 {offsets = [0, 64], sizes = [8, 32], strides = [1, 1]} : vector<8x96xf32> to vector<8x32xf32>
    %437 = arith.addf %436, %220 : vector<8x32xf32>
    %438 = arith.mulf %428, %437 : vector<8x32xf32>
    %439 = arith.addf %419, %438 : vector<8x32xf32>
    %440 = math.tanh %439 : vector<8x32xf32>
    %cst_202 = arith.constant 1.000000e+00 : f32
    %441 = vector.broadcast %cst_202 : f32 to vector<8x32xf32>
    %442 = arith.subf %441, %435 : vector<8x32xf32>
    %443 = arith.mulf %442, %440 : vector<8x32xf32>
    %444 = arith.mulf %435, %413 : vector<8x32xf32>
    %445 = arith.addf %443, %444 : vector<8x32xf32>
    %c0_203 = arith.constant 0 : index
    %c56 = arith.constant 56 : index
    %c0_204 = arith.constant 0 : index
    %446 = vector.load %arg24[%c0_203, %c56, %c0_204] : memref<3x120x32xf32, #tpu.memory_space<vmem>>, vector<1x8x32xf32>
    %447 = vector.shape_cast %446 : vector<1x8x32xf32> to vector<8x32xf32>
    %c1_205 = arith.constant 1 : index
    %c56_206 = arith.constant 56 : index
    %c0_207 = arith.constant 0 : index
    %448 = vector.load %arg24[%c1_205, %c56_206, %c0_207] : memref<3x120x32xf32, #tpu.memory_space<vmem>>, vector<1x8x32xf32>
    %449 = vector.shape_cast %448 : vector<1x8x32xf32> to vector<8x32xf32>
    %c2_208 = arith.constant 2 : index
    %c56_209 = arith.constant 56 : index
    %c0_210 = arith.constant 0 : index
    %450 = vector.load %arg24[%c2_208, %c56_209, %c0_210] : memref<3x120x32xf32, #tpu.memory_space<vmem>>, vector<1x8x32xf32>
    %451 = vector.shape_cast %450 : vector<1x8x32xf32> to vector<8x32xf32>
    %452 = arith.truncf %445 : vector<8x32xf32> to vector<8x32xbf16>
    %cst_211 = arith.constant dense<0.000000e+00> : vector<8x96xf32>
    %453 = tpu.matmul %452, %217, %cst_211 {dimension_numbers = #tpu.dot_dimension_numbers<[1], [0], [0], [1], [0, 0, 1, 1], [], []>} : vector<8x32xbf16>, vector<32x96xbf16>, vector<8x96xf32> -> vector<8x96xf32>
    %454 = vector.extract_strided_slice %453 {offsets = [0, 0], sizes = [8, 32], strides = [1, 1]} : vector<8x96xf32> to vector<8x32xf32>
    %455 = arith.addf %447, %454 : vector<8x32xf32>
    %456 = arith.negf %455 : vector<8x32xf32>
    %457 = math.exp %456 : vector<8x32xf32>
    %cst_212 = arith.constant 1.000000e+00 : f32
    %458 = vector.broadcast %cst_212 : f32 to vector<8x32xf32>
    %459 = arith.addf %458, %457 : vector<8x32xf32>
    %460 = arith.divf %458, %459 : vector<8x32xf32>
    %461 = vector.extract_strided_slice %453 {offsets = [0, 32], sizes = [8, 32], strides = [1, 1]} : vector<8x96xf32> to vector<8x32xf32>
    %462 = arith.addf %449, %461 : vector<8x32xf32>
    %463 = arith.negf %462 : vector<8x32xf32>
    %464 = math.exp %463 : vector<8x32xf32>
    %cst_213 = arith.constant 1.000000e+00 : f32
    %465 = vector.broadcast %cst_213 : f32 to vector<8x32xf32>
    %466 = arith.addf %465, %464 : vector<8x32xf32>
    %467 = arith.divf %465, %466 : vector<8x32xf32>
    %468 = vector.extract_strided_slice %453 {offsets = [0, 64], sizes = [8, 32], strides = [1, 1]} : vector<8x96xf32> to vector<8x32xf32>
    %469 = arith.addf %468, %220 : vector<8x32xf32>
    %470 = arith.mulf %460, %469 : vector<8x32xf32>
    %471 = arith.addf %451, %470 : vector<8x32xf32>
    %472 = math.tanh %471 : vector<8x32xf32>
    %cst_214 = arith.constant 1.000000e+00 : f32
    %473 = vector.broadcast %cst_214 : f32 to vector<8x32xf32>
    %474 = arith.subf %473, %467 : vector<8x32xf32>
    %475 = arith.mulf %474, %472 : vector<8x32xf32>
    %476 = arith.mulf %467, %445 : vector<8x32xf32>
    %477 = arith.addf %475, %476 : vector<8x32xf32>
    %c0_215 = arith.constant 0 : index
    %c80 = arith.constant 80 : index
    %c0_216 = arith.constant 0 : index
    %478 = vector.load %arg24[%c0_215, %c80, %c0_216] : memref<3x120x32xf32, #tpu.memory_space<vmem>>, vector<1x8x32xf32>
    %479 = vector.shape_cast %478 : vector<1x8x32xf32> to vector<8x32xf32>
    %c1_217 = arith.constant 1 : index
    %c80_218 = arith.constant 80 : index
    %c0_219 = arith.constant 0 : index
    %480 = vector.load %arg24[%c1_217, %c80_218, %c0_219] : memref<3x120x32xf32, #tpu.memory_space<vmem>>, vector<1x8x32xf32>
    %481 = vector.shape_cast %480 : vector<1x8x32xf32> to vector<8x32xf32>
    %c2_220 = arith.constant 2 : index
    %c80_221 = arith.constant 80 : index
    %c0_222 = arith.constant 0 : index
    %482 = vector.load %arg24[%c2_220, %c80_221, %c0_222] : memref<3x120x32xf32, #tpu.memory_space<vmem>>, vector<1x8x32xf32>
    %483 = vector.shape_cast %482 : vector<1x8x32xf32> to vector<8x32xf32>
    %484 = arith.truncf %477 : vector<8x32xf32> to vector<8x32xbf16>
    %cst_223 = arith.constant dense<0.000000e+00> : vector<8x96xf32>
    %485 = tpu.matmul %484, %217, %cst_223 {dimension_numbers = #tpu.dot_dimension_numbers<[1], [0], [0], [1], [0, 0, 1, 1], [], []>} : vector<8x32xbf16>, vector<32x96xbf16>, vector<8x96xf32> -> vector<8x96xf32>
    %486 = vector.extract_strided_slice %485 {offsets = [0, 0], sizes = [8, 32], strides = [1, 1]} : vector<8x96xf32> to vector<8x32xf32>
    %487 = arith.addf %479, %486 : vector<8x32xf32>
    %488 = arith.negf %487 : vector<8x32xf32>
    %489 = math.exp %488 : vector<8x32xf32>
    %cst_224 = arith.constant 1.000000e+00 : f32
    %490 = vector.broadcast %cst_224 : f32 to vector<8x32xf32>
    %491 = arith.addf %490, %489 : vector<8x32xf32>
    %492 = arith.divf %490, %491 : vector<8x32xf32>
    %493 = vector.extract_strided_slice %485 {offsets = [0, 32], sizes = [8, 32], strides = [1, 1]} : vector<8x96xf32> to vector<8x32xf32>
    %494 = arith.addf %481, %493 : vector<8x32xf32>
    %495 = arith.negf %494 : vector<8x32xf32>
    %496 = math.exp %495 : vector<8x32xf32>
    %cst_225 = arith.constant 1.000000e+00 : f32
    %497 = vector.broadcast %cst_225 : f32 to vector<8x32xf32>
    %498 = arith.addf %497, %496 : vector<8x32xf32>
    %499 = arith.divf %497, %498 : vector<8x32xf32>
    %500 = vector.extract_strided_slice %485 {offsets = [0, 64], sizes = [8, 32], strides = [1, 1]} : vector<8x96xf32> to vector<8x32xf32>
    %501 = arith.addf %500, %220 : vector<8x32xf32>
    %502 = arith.mulf %492, %501 : vector<8x32xf32>
    %503 = arith.addf %483, %502 : vector<8x32xf32>
    %504 = math.tanh %503 : vector<8x32xf32>
    %cst_226 = arith.constant 1.000000e+00 : f32
    %505 = vector.broadcast %cst_226 : f32 to vector<8x32xf32>
    %506 = arith.subf %505, %499 : vector<8x32xf32>
    %507 = arith.mulf %506, %504 : vector<8x32xf32>
    %508 = arith.mulf %499, %477 : vector<8x32xf32>
    %509 = arith.addf %507, %508 : vector<8x32xf32>
    %c0_227 = arith.constant 0 : index
    %c104 = arith.constant 104 : index
    %c0_228 = arith.constant 0 : index
    %510 = vector.load %arg24[%c0_227, %c104, %c0_228] : memref<3x120x32xf32, #tpu.memory_space<vmem>>, vector<1x8x32xf32>
    %511 = vector.shape_cast %510 : vector<1x8x32xf32> to vector<8x32xf32>
    %c1_229 = arith.constant 1 : index
    %c104_230 = arith.constant 104 : index
    %c0_231 = arith.constant 0 : index
    %512 = vector.load %arg24[%c1_229, %c104_230, %c0_231] : memref<3x120x32xf32, #tpu.memory_space<vmem>>, vector<1x8x32xf32>
    %513 = vector.shape_cast %512 : vector<1x8x32xf32> to vector<8x32xf32>
    %c2_232 = arith.constant 2 : index
    %c104_233 = arith.constant 104 : index
    %c0_234 = arith.constant 0 : index
    %514 = vector.load %arg24[%c2_232, %c104_233, %c0_234] : memref<3x120x32xf32, #tpu.memory_space<vmem>>, vector<1x8x32xf32>
    %515 = vector.shape_cast %514 : vector<1x8x32xf32> to vector<8x32xf32>
    %516 = arith.truncf %509 : vector<8x32xf32> to vector<8x32xbf16>
    %cst_235 = arith.constant dense<0.000000e+00> : vector<8x96xf32>
    %517 = tpu.matmul %516, %217, %cst_235 {dimension_numbers = #tpu.dot_dimension_numbers<[1], [0], [0], [1], [0, 0, 1, 1], [], []>} : vector<8x32xbf16>, vector<32x96xbf16>, vector<8x96xf32> -> vector<8x96xf32>
    %518 = vector.extract_strided_slice %517 {offsets = [0, 0], sizes = [8, 32], strides = [1, 1]} : vector<8x96xf32> to vector<8x32xf32>
    %519 = arith.addf %511, %518 : vector<8x32xf32>
    %520 = arith.negf %519 : vector<8x32xf32>
    %521 = math.exp %520 : vector<8x32xf32>
    %cst_236 = arith.constant 1.000000e+00 : f32
    %522 = vector.broadcast %cst_236 : f32 to vector<8x32xf32>
    %523 = arith.addf %522, %521 : vector<8x32xf32>
    %524 = arith.divf %522, %523 : vector<8x32xf32>
    %525 = vector.extract_strided_slice %517 {offsets = [0, 32], sizes = [8, 32], strides = [1, 1]} : vector<8x96xf32> to vector<8x32xf32>
    %526 = arith.addf %513, %525 : vector<8x32xf32>
    %527 = arith.negf %526 : vector<8x32xf32>
    %528 = math.exp %527 : vector<8x32xf32>
    %cst_237 = arith.constant 1.000000e+00 : f32
    %529 = vector.broadcast %cst_237 : f32 to vector<8x32xf32>
    %530 = arith.addf %529, %528 : vector<8x32xf32>
    %531 = arith.divf %529, %530 : vector<8x32xf32>
    %532 = vector.extract_strided_slice %517 {offsets = [0, 64], sizes = [8, 32], strides = [1, 1]} : vector<8x96xf32> to vector<8x32xf32>
    %533 = arith.addf %532, %220 : vector<8x32xf32>
    %534 = arith.mulf %524, %533 : vector<8x32xf32>
    %535 = arith.addf %515, %534 : vector<8x32xf32>
    %536 = math.tanh %535 : vector<8x32xf32>
    %cst_238 = arith.constant 1.000000e+00 : f32
    %537 = vector.broadcast %cst_238 : f32 to vector<8x32xf32>
    %538 = arith.subf %537, %531 : vector<8x32xf32>
    %539 = arith.mulf %538, %536 : vector<8x32xf32>
    %540 = arith.mulf %531, %509 : vector<8x32xf32>
    %541 = arith.addf %539, %540 : vector<8x32xf32>
    %c0_239 = arith.constant 0 : index
    %c16 = arith.constant 16 : index
    %c0_240 = arith.constant 0 : index
    %542 = vector.load %arg24[%c0_239, %c16, %c0_240] : memref<3x120x32xf32, #tpu.memory_space<vmem>>, vector<1x8x32xf32>
    %543 = vector.shape_cast %542 : vector<1x8x32xf32> to vector<8x32xf32>
    %c1_241 = arith.constant 1 : index
    %c16_242 = arith.constant 16 : index
    %c0_243 = arith.constant 0 : index
    %544 = vector.load %arg24[%c1_241, %c16_242, %c0_243] : memref<3x120x32xf32, #tpu.memory_space<vmem>>, vector<1x8x32xf32>
    %545 = vector.shape_cast %544 : vector<1x8x32xf32> to vector<8x32xf32>
    %c2_244 = arith.constant 2 : index
    %c16_245 = arith.constant 16 : index
    %c0_246 = arith.constant 0 : index
    %546 = vector.load %arg24[%c2_244, %c16_245, %c0_246] : memref<3x120x32xf32, #tpu.memory_space<vmem>>, vector<1x8x32xf32>
    %547 = vector.shape_cast %546 : vector<1x8x32xf32> to vector<8x32xf32>
    %548 = arith.truncf %541 : vector<8x32xf32> to vector<8x32xbf16>
    %cst_247 = arith.constant dense<0.000000e+00> : vector<8x96xf32>
    %549 = tpu.matmul %548, %217, %cst_247 {dimension_numbers = #tpu.dot_dimension_numbers<[1], [0], [0], [1], [0, 0, 1, 1], [], []>} : vector<8x32xbf16>, vector<32x96xbf16>, vector<8x96xf32> -> vector<8x96xf32>
    %550 = vector.extract_strided_slice %549 {offsets = [0, 0], sizes = [8, 32], strides = [1, 1]} : vector<8x96xf32> to vector<8x32xf32>
    %551 = arith.addf %543, %550 : vector<8x32xf32>
    %552 = arith.negf %551 : vector<8x32xf32>
    %553 = math.exp %552 : vector<8x32xf32>
    %cst_248 = arith.constant 1.000000e+00 : f32
    %554 = vector.broadcast %cst_248 : f32 to vector<8x32xf32>
    %555 = arith.addf %554, %553 : vector<8x32xf32>
    %556 = arith.divf %554, %555 : vector<8x32xf32>
    %557 = vector.extract_strided_slice %549 {offsets = [0, 32], sizes = [8, 32], strides = [1, 1]} : vector<8x96xf32> to vector<8x32xf32>
    %558 = arith.addf %545, %557 : vector<8x32xf32>
    %559 = arith.negf %558 : vector<8x32xf32>
    %560 = math.exp %559 : vector<8x32xf32>
    %cst_249 = arith.constant 1.000000e+00 : f32
    %561 = vector.broadcast %cst_249 : f32 to vector<8x32xf32>
    %562 = arith.addf %561, %560 : vector<8x32xf32>
    %563 = arith.divf %561, %562 : vector<8x32xf32>
    %564 = vector.extract_strided_slice %549 {offsets = [0, 64], sizes = [8, 32], strides = [1, 1]} : vector<8x96xf32> to vector<8x32xf32>
    %565 = arith.addf %564, %220 : vector<8x32xf32>
    %566 = arith.mulf %556, %565 : vector<8x32xf32>
    %567 = arith.addf %547, %566 : vector<8x32xf32>
    %568 = math.tanh %567 : vector<8x32xf32>
    %cst_250 = arith.constant 1.000000e+00 : f32
    %569 = vector.broadcast %cst_250 : f32 to vector<8x32xf32>
    %570 = arith.subf %569, %563 : vector<8x32xf32>
    %571 = arith.mulf %570, %568 : vector<8x32xf32>
    %572 = arith.mulf %563, %541 : vector<8x32xf32>
    %573 = arith.addf %571, %572 : vector<8x32xf32>
    %c0_251 = arith.constant 0 : index
    %c40 = arith.constant 40 : index
    %c0_252 = arith.constant 0 : index
    %574 = vector.load %arg24[%c0_251, %c40, %c0_252] : memref<3x120x32xf32, #tpu.memory_space<vmem>>, vector<1x8x32xf32>
    %575 = vector.shape_cast %574 : vector<1x8x32xf32> to vector<8x32xf32>
    %c1_253 = arith.constant 1 : index
    %c40_254 = arith.constant 40 : index
    %c0_255 = arith.constant 0 : index
    %576 = vector.load %arg24[%c1_253, %c40_254, %c0_255] : memref<3x120x32xf32, #tpu.memory_space<vmem>>, vector<1x8x32xf32>
    %577 = vector.shape_cast %576 : vector<1x8x32xf32> to vector<8x32xf32>
    %c2_256 = arith.constant 2 : index
    %c40_257 = arith.constant 40 : index
    %c0_258 = arith.constant 0 : index
    %578 = vector.load %arg24[%c2_256, %c40_257, %c0_258] : memref<3x120x32xf32, #tpu.memory_space<vmem>>, vector<1x8x32xf32>
    %579 = vector.shape_cast %578 : vector<1x8x32xf32> to vector<8x32xf32>
    %580 = arith.truncf %573 : vector<8x32xf32> to vector<8x32xbf16>
    %cst_259 = arith.constant dense<0.000000e+00> : vector<8x96xf32>
    %581 = tpu.matmul %580, %217, %cst_259 {dimension_numbers = #tpu.dot_dimension_numbers<[1], [0], [0], [1], [0, 0, 1, 1], [], []>} : vector<8x32xbf16>, vector<32x96xbf16>, vector<8x96xf32> -> vector<8x96xf32>
    %582 = vector.extract_strided_slice %581 {offsets = [0, 0], sizes = [8, 32], strides = [1, 1]} : vector<8x96xf32> to vector<8x32xf32>
    %583 = arith.addf %575, %582 : vector<8x32xf32>
    %584 = arith.negf %583 : vector<8x32xf32>
    %585 = math.exp %584 : vector<8x32xf32>
    %cst_260 = arith.constant 1.000000e+00 : f32
    %586 = vector.broadcast %cst_260 : f32 to vector<8x32xf32>
    %587 = arith.addf %586, %585 : vector<8x32xf32>
    %588 = arith.divf %586, %587 : vector<8x32xf32>
    %589 = vector.extract_strided_slice %581 {offsets = [0, 32], sizes = [8, 32], strides = [1, 1]} : vector<8x96xf32> to vector<8x32xf32>
    %590 = arith.addf %577, %589 : vector<8x32xf32>
    %591 = arith.negf %590 : vector<8x32xf32>
    %592 = math.exp %591 : vector<8x32xf32>
    %cst_261 = arith.constant 1.000000e+00 : f32
    %593 = vector.broadcast %cst_261 : f32 to vector<8x32xf32>
    %594 = arith.addf %593, %592 : vector<8x32xf32>
    %595 = arith.divf %593, %594 : vector<8x32xf32>
    %596 = vector.extract_strided_slice %581 {offsets = [0, 64], sizes = [8, 32], strides = [1, 1]} : vector<8x96xf32> to vector<8x32xf32>
    %597 = arith.addf %596, %220 : vector<8x32xf32>
    %598 = arith.mulf %588, %597 : vector<8x32xf32>
    %599 = arith.addf %579, %598 : vector<8x32xf32>
    %600 = math.tanh %599 : vector<8x32xf32>
    %cst_262 = arith.constant 1.000000e+00 : f32
    %601 = vector.broadcast %cst_262 : f32 to vector<8x32xf32>
    %602 = arith.subf %601, %595 : vector<8x32xf32>
    %603 = arith.mulf %602, %600 : vector<8x32xf32>
    %604 = arith.mulf %595, %573 : vector<8x32xf32>
    %605 = arith.addf %603, %604 : vector<8x32xf32>
    %c0_263 = arith.constant 0 : index
    %c64 = arith.constant 64 : index
    %c0_264 = arith.constant 0 : index
    %606 = vector.load %arg24[%c0_263, %c64, %c0_264] : memref<3x120x32xf32, #tpu.memory_space<vmem>>, vector<1x8x32xf32>
    %607 = vector.shape_cast %606 : vector<1x8x32xf32> to vector<8x32xf32>
    %c1_265 = arith.constant 1 : index
    %c64_266 = arith.constant 64 : index
    %c0_267 = arith.constant 0 : index
    %608 = vector.load %arg24[%c1_265, %c64_266, %c0_267] : memref<3x120x32xf32, #tpu.memory_space<vmem>>, vector<1x8x32xf32>
    %609 = vector.shape_cast %608 : vector<1x8x32xf32> to vector<8x32xf32>
    %c2_268 = arith.constant 2 : index
    %c64_269 = arith.constant 64 : index
    %c0_270 = arith.constant 0 : index
    %610 = vector.load %arg24[%c2_268, %c64_269, %c0_270] : memref<3x120x32xf32, #tpu.memory_space<vmem>>, vector<1x8x32xf32>
    %611 = vector.shape_cast %610 : vector<1x8x32xf32> to vector<8x32xf32>
    %612 = arith.truncf %605 : vector<8x32xf32> to vector<8x32xbf16>
    %cst_271 = arith.constant dense<0.000000e+00> : vector<8x96xf32>
    %613 = tpu.matmul %612, %217, %cst_271 {dimension_numbers = #tpu.dot_dimension_numbers<[1], [0], [0], [1], [0, 0, 1, 1], [], []>} : vector<8x32xbf16>, vector<32x96xbf16>, vector<8x96xf32> -> vector<8x96xf32>
    %614 = vector.extract_strided_slice %613 {offsets = [0, 0], sizes = [8, 32], strides = [1, 1]} : vector<8x96xf32> to vector<8x32xf32>
    %615 = arith.addf %607, %614 : vector<8x32xf32>
    %616 = arith.negf %615 : vector<8x32xf32>
    %617 = math.exp %616 : vector<8x32xf32>
    %cst_272 = arith.constant 1.000000e+00 : f32
    %618 = vector.broadcast %cst_272 : f32 to vector<8x32xf32>
    %619 = arith.addf %618, %617 : vector<8x32xf32>
    %620 = arith.divf %618, %619 : vector<8x32xf32>
    %621 = vector.extract_strided_slice %613 {offsets = [0, 32], sizes = [8, 32], strides = [1, 1]} : vector<8x96xf32> to vector<8x32xf32>
    %622 = arith.addf %609, %621 : vector<8x32xf32>
    %623 = arith.negf %622 : vector<8x32xf32>
    %624 = math.exp %623 : vector<8x32xf32>
    %cst_273 = arith.constant 1.000000e+00 : f32
    %625 = vector.broadcast %cst_273 : f32 to vector<8x32xf32>
    %626 = arith.addf %625, %624 : vector<8x32xf32>
    %627 = arith.divf %625, %626 : vector<8x32xf32>
    %628 = vector.extract_strided_slice %613 {offsets = [0, 64], sizes = [8, 32], strides = [1, 1]} : vector<8x96xf32> to vector<8x32xf32>
    %629 = arith.addf %628, %220 : vector<8x32xf32>
    %630 = arith.mulf %620, %629 : vector<8x32xf32>
    %631 = arith.addf %611, %630 : vector<8x32xf32>
    %632 = math.tanh %631 : vector<8x32xf32>
    %cst_274 = arith.constant 1.000000e+00 : f32
    %633 = vector.broadcast %cst_274 : f32 to vector<8x32xf32>
    %634 = arith.subf %633, %627 : vector<8x32xf32>
    %635 = arith.mulf %634, %632 : vector<8x32xf32>
    %636 = arith.mulf %627, %605 : vector<8x32xf32>
    %637 = arith.addf %635, %636 : vector<8x32xf32>
    %c0_275 = arith.constant 0 : index
    %c88 = arith.constant 88 : index
    %c0_276 = arith.constant 0 : index
    %638 = vector.load %arg24[%c0_275, %c88, %c0_276] : memref<3x120x32xf32, #tpu.memory_space<vmem>>, vector<1x8x32xf32>
    %639 = vector.shape_cast %638 : vector<1x8x32xf32> to vector<8x32xf32>
    %c1_277 = arith.constant 1 : index
    %c88_278 = arith.constant 88 : index
    %c0_279 = arith.constant 0 : index
    %640 = vector.load %arg24[%c1_277, %c88_278, %c0_279] : memref<3x120x32xf32, #tpu.memory_space<vmem>>, vector<1x8x32xf32>
    %641 = vector.shape_cast %640 : vector<1x8x32xf32> to vector<8x32xf32>
    %c2_280 = arith.constant 2 : index
    %c88_281 = arith.constant 88 : index
    %c0_282 = arith.constant 0 : index
    %642 = vector.load %arg24[%c2_280, %c88_281, %c0_282] : memref<3x120x32xf32, #tpu.memory_space<vmem>>, vector<1x8x32xf32>
    %643 = vector.shape_cast %642 : vector<1x8x32xf32> to vector<8x32xf32>
    %644 = arith.truncf %637 : vector<8x32xf32> to vector<8x32xbf16>
    %cst_283 = arith.constant dense<0.000000e+00> : vector<8x96xf32>
    %645 = tpu.matmul %644, %217, %cst_283 {dimension_numbers = #tpu.dot_dimension_numbers<[1], [0], [0], [1], [0, 0, 1, 1], [], []>} : vector<8x32xbf16>, vector<32x96xbf16>, vector<8x96xf32> -> vector<8x96xf32>
    %646 = vector.extract_strided_slice %645 {offsets = [0, 0], sizes = [8, 32], strides = [1, 1]} : vector<8x96xf32> to vector<8x32xf32>
    %647 = arith.addf %639, %646 : vector<8x32xf32>
    %648 = arith.negf %647 : vector<8x32xf32>
    %649 = math.exp %648 : vector<8x32xf32>
    %cst_284 = arith.constant 1.000000e+00 : f32
    %650 = vector.broadcast %cst_284 : f32 to vector<8x32xf32>
    %651 = arith.addf %650, %649 : vector<8x32xf32>
    %652 = arith.divf %650, %651 : vector<8x32xf32>
    %653 = vector.extract_strided_slice %645 {offsets = [0, 32], sizes = [8, 32], strides = [1, 1]} : vector<8x96xf32> to vector<8x32xf32>
    %654 = arith.addf %641, %653 : vector<8x32xf32>
    %655 = arith.negf %654 : vector<8x32xf32>
    %656 = math.exp %655 : vector<8x32xf32>
    %cst_285 = arith.constant 1.000000e+00 : f32
    %657 = vector.broadcast %cst_285 : f32 to vector<8x32xf32>
    %658 = arith.addf %657, %656 : vector<8x32xf32>
    %659 = arith.divf %657, %658 : vector<8x32xf32>
    %660 = vector.extract_strided_slice %645 {offsets = [0, 64], sizes = [8, 32], strides = [1, 1]} : vector<8x96xf32> to vector<8x32xf32>
    %661 = arith.addf %660, %220 : vector<8x32xf32>
    %662 = arith.mulf %652, %661 : vector<8x32xf32>
    %663 = arith.addf %643, %662 : vector<8x32xf32>
    %664 = math.tanh %663 : vector<8x32xf32>
    %cst_286 = arith.constant 1.000000e+00 : f32
    %665 = vector.broadcast %cst_286 : f32 to vector<8x32xf32>
    %666 = arith.subf %665, %659 : vector<8x32xf32>
    %667 = arith.mulf %666, %664 : vector<8x32xf32>
    %668 = arith.mulf %659, %637 : vector<8x32xf32>
    %669 = arith.addf %667, %668 : vector<8x32xf32>
    %c0_287 = arith.constant 0 : index
    %c112 = arith.constant 112 : index
    %c0_288 = arith.constant 0 : index
    %670 = vector.load %arg24[%c0_287, %c112, %c0_288] : memref<3x120x32xf32, #tpu.memory_space<vmem>>, vector<1x8x32xf32>
    %671 = vector.shape_cast %670 : vector<1x8x32xf32> to vector<8x32xf32>
    %c1_289 = arith.constant 1 : index
    %c112_290 = arith.constant 112 : index
    %c0_291 = arith.constant 0 : index
    %672 = vector.load %arg24[%c1_289, %c112_290, %c0_291] : memref<3x120x32xf32, #tpu.memory_space<vmem>>, vector<1x8x32xf32>
    %673 = vector.shape_cast %672 : vector<1x8x32xf32> to vector<8x32xf32>
    %c2_292 = arith.constant 2 : index
    %c112_293 = arith.constant 112 : index
    %c0_294 = arith.constant 0 : index
    %674 = vector.load %arg24[%c2_292, %c112_293, %c0_294] : memref<3x120x32xf32, #tpu.memory_space<vmem>>, vector<1x8x32xf32>
    %675 = vector.shape_cast %674 : vector<1x8x32xf32> to vector<8x32xf32>
    %676 = arith.truncf %669 : vector<8x32xf32> to vector<8x32xbf16>
    %cst_295 = arith.constant dense<0.000000e+00> : vector<8x96xf32>
    %677 = tpu.matmul %676, %217, %cst_295 {dimension_numbers = #tpu.dot_dimension_numbers<[1], [0], [0], [1], [0, 0, 1, 1], [], []>} : vector<8x32xbf16>, vector<32x96xbf16>, vector<8x96xf32> -> vector<8x96xf32>
    %678 = vector.extract_strided_slice %677 {offsets = [0, 0], sizes = [8, 32], strides = [1, 1]} : vector<8x96xf32> to vector<8x32xf32>
    %679 = arith.addf %671, %678 : vector<8x32xf32>
    %680 = arith.negf %679 : vector<8x32xf32>
    %681 = math.exp %680 : vector<8x32xf32>
    %cst_296 = arith.constant 1.000000e+00 : f32
    %682 = vector.broadcast %cst_296 : f32 to vector<8x32xf32>
    %683 = arith.addf %682, %681 : vector<8x32xf32>
    %684 = arith.divf %682, %683 : vector<8x32xf32>
    %685 = vector.extract_strided_slice %677 {offsets = [0, 32], sizes = [8, 32], strides = [1, 1]} : vector<8x96xf32> to vector<8x32xf32>
    %686 = arith.addf %673, %685 : vector<8x32xf32>
    %687 = arith.negf %686 : vector<8x32xf32>
    %688 = math.exp %687 : vector<8x32xf32>
    %cst_297 = arith.constant 1.000000e+00 : f32
    %689 = vector.broadcast %cst_297 : f32 to vector<8x32xf32>
    %690 = arith.addf %689, %688 : vector<8x32xf32>
    %691 = arith.divf %689, %690 : vector<8x32xf32>
    %692 = vector.extract_strided_slice %677 {offsets = [0, 64], sizes = [8, 32], strides = [1, 1]} : vector<8x96xf32> to vector<8x32xf32>
    %693 = arith.addf %692, %220 : vector<8x32xf32>
    %694 = arith.mulf %684, %693 : vector<8x32xf32>
    %695 = arith.addf %675, %694 : vector<8x32xf32>
    %696 = math.tanh %695 : vector<8x32xf32>
    %cst_298 = arith.constant 1.000000e+00 : f32
    %697 = vector.broadcast %cst_298 : f32 to vector<8x32xf32>
    %698 = arith.subf %697, %691 : vector<8x32xf32>
    %699 = arith.mulf %698, %696 : vector<8x32xf32>
    %700 = arith.mulf %691, %669 : vector<8x32xf32>
    %701 = arith.addf %699, %700 : vector<8x32xf32>
    %702 = arith.truncf %701 : vector<8x32xf32> to vector<8x32xbf16>
    %c0_299 = arith.constant 0 : index
    %c0_300 = arith.constant 0 : index
    %703 = vector.load %arg11[%c0_299, %c0_300] : memref<32x32xbf16, #tpu.memory_space<vmem>>, vector<32x32xbf16>
    %cst_301 = arith.constant dense<0.000000e+00> : vector<8x32xf32>
    %704 = tpu.matmul %702, %703, %cst_301 {dimension_numbers = #tpu.dot_dimension_numbers<[1], [0], [0], [1], [0, 0, 1, 1], [], []>} : vector<8x32xbf16>, vector<32x32xbf16>, vector<8x32xf32> -> vector<8x32xf32>
    %c0_302 = arith.constant 0 : index
    %c0_303 = arith.constant 0 : index
    %705 = vector.load %arg12[%c0_302, %c0_303] : memref<1x32xf32, #tpu.memory_space<vmem>>, vector<1x32xf32>
    %706 = vector.broadcast %705 : vector<1x32xf32> to vector<8x32xf32>
    %707 = arith.addf %704, %706 : vector<8x32xf32>
    %c0_304 = arith.constant 0 : index
    %c0_305 = arith.constant 0 : index
    %708 = vector.load %arg1[%c0_304, %c0_305] : memref<48x1xi32, #tpu.memory_space<vmem>>, vector<48x1xi32>
    %709 = tpu.iota {dimensions = array<i32: 1>} : vector<48x128xi32>
    %710 = vector.broadcast %708 : vector<48x1xi32> to vector<48x128xi32>
    %711 = arith.cmpi eq, %710, %709 : vector<48x128xi32>
    %cst_306 = arith.constant 1.000000e+00 : f32
    %cst_307 = arith.constant 0.000000e+00 : f32
    %712 = vector.broadcast %cst_306 : f32 to vector<48x128xf32>
    %713 = vector.broadcast %cst_307 : f32 to vector<48x128xf32>
    %714 = arith.select %711, %712, %713 : vector<48x128xi1>, vector<48x128xf32>
    %715 = arith.truncf %714 : vector<48x128xf32> to vector<48x128xbf16>
    %c0_308 = arith.constant 0 : index
    %c0_309 = arith.constant 0 : index
    %716 = vector.load %arg13[%c0_308, %c0_309] : memref<128x32xbf16, #tpu.memory_space<vmem>>, vector<128x32xbf16>
    %cst_310 = arith.constant dense<0.000000e+00> : vector<48x32xf32>
    %717 = tpu.matmul %715, %716, %cst_310 {dimension_numbers = #tpu.dot_dimension_numbers<[1], [0], [0], [1], [0, 0, 1, 1], [], []>} : vector<48x128xbf16>, vector<128x32xbf16>, vector<48x32xf32> -> vector<48x32xf32>
    %718 = arith.truncf %717 : vector<48x32xf32> to vector<48x32xbf16>
    %c0_311 = arith.constant 0 : index
    %c0_312 = arith.constant 0 : index
    %719 = vector.load %arg14[%c0_311, %c0_312] : memref<32x96xbf16, #tpu.memory_space<vmem>>, vector<32x96xbf16>
    %cst_313 = arith.constant dense<0.000000e+00> : vector<48x96xf32>
    %720 = tpu.matmul %718, %719, %cst_313 {dimension_numbers = #tpu.dot_dimension_numbers<[1], [0], [0], [1], [0, 0, 1, 1], [], []>} : vector<48x32xbf16>, vector<32x96xbf16>, vector<48x96xf32> -> vector<48x96xf32>
    %c0_314 = arith.constant 0 : index
    %c0_315 = arith.constant 0 : index
    %721 = vector.load %arg16[%c0_314, %c0_315] : memref<1x96xf32, #tpu.memory_space<vmem>>, vector<1x96xf32>
    %722 = vector.broadcast %721 : vector<1x96xf32> to vector<48x96xf32>
    %723 = arith.addf %720, %722 : vector<48x96xf32>
    %724 = vector.extract_strided_slice %723 {offsets = [0, 0], sizes = [48, 32], strides = [1, 1]} : vector<48x96xf32> to vector<48x32xf32>
    %c0_316 = arith.constant 0 : index
    %c0_317 = arith.constant 0 : index
    %c0_318 = arith.constant 0 : index
    %725 = vector.load %arg25[%c0_316, %c0_317, %c0_318] : memref<3x48x32xf32, #tpu.memory_space<vmem>>, vector<1x48x32xf32>
    %726 = vector.shape_cast %725 : vector<1x48x32xf32> to vector<48x32xf32>
    %727 = vector.shape_cast %724 : vector<48x32xf32> to vector<1x48x32xf32>
    tpu.vector_store %arg25[%c0_316, %c0_317, %c0_318], %727 {strides = array<i32>} : memref<3x48x32xf32, #tpu.memory_space<vmem>>, vector<1x48x32xf32>,
    %728 = vector.extract_strided_slice %723 {offsets = [0, 32], sizes = [48, 32], strides = [1, 1]} : vector<48x96xf32> to vector<48x32xf32>
    %c1_319 = arith.constant 1 : index
    %c0_320 = arith.constant 0 : index
    %c0_321 = arith.constant 0 : index
    %729 = vector.load %arg25[%c1_319, %c0_320, %c0_321] : memref<3x48x32xf32, #tpu.memory_space<vmem>>, vector<1x48x32xf32>
    %730 = vector.shape_cast %729 : vector<1x48x32xf32> to vector<48x32xf32>
    %731 = vector.shape_cast %728 : vector<48x32xf32> to vector<1x48x32xf32>
    tpu.vector_store %arg25[%c1_319, %c0_320, %c0_321], %731 {strides = array<i32>} : memref<3x48x32xf32, #tpu.memory_space<vmem>>, vector<1x48x32xf32>,
    %732 = vector.extract_strided_slice %723 {offsets = [0, 64], sizes = [48, 32], strides = [1, 1]} : vector<48x96xf32> to vector<48x32xf32>
    %c2_322 = arith.constant 2 : index
    %c0_323 = arith.constant 0 : index
    %c0_324 = arith.constant 0 : index
    %733 = vector.load %arg25[%c2_322, %c0_323, %c0_324] : memref<3x48x32xf32, #tpu.memory_space<vmem>>, vector<1x48x32xf32>
    %734 = vector.shape_cast %733 : vector<1x48x32xf32> to vector<48x32xf32>
    %735 = vector.shape_cast %732 : vector<48x32xf32> to vector<1x48x32xf32>
    tpu.vector_store %arg25[%c2_322, %c0_323, %c0_324], %735 {strides = array<i32>} : memref<3x48x32xf32, #tpu.memory_space<vmem>>, vector<1x48x32xf32>,
    %c0_325 = arith.constant 0 : index
    %c0_326 = arith.constant 0 : index
    %736 = vector.load %arg15[%c0_325, %c0_326] : memref<32x96xbf16, #tpu.memory_space<vmem>>, vector<32x96xbf16>
    %c0_327 = arith.constant 0 : index
    %c0_328 = arith.constant 0 : index
    %737 = vector.load %arg17[%c0_327, %c0_328] : memref<1x32xf32, #tpu.memory_space<vmem>>, vector<1x32xf32>
    %738 = vector.shape_cast %737 : vector<1x32xf32> to vector<1x32xf32>
    %739 = vector.broadcast %738 : vector<1x32xf32> to vector<8x32xf32>
    %c0_329 = arith.constant 0 : index
    %c0_330 = arith.constant 0 : index
    %c0_331 = arith.constant 0 : index
    %740 = vector.load %arg25[%c0_329, %c0_330, %c0_331] : memref<3x48x32xf32, #tpu.memory_space<vmem>>, vector<1x8x32xf32>
    %741 = vector.shape_cast %740 : vector<1x8x32xf32> to vector<8x32xf32>
    %c1_332 = arith.constant 1 : index
    %c0_333 = arith.constant 0 : index
    %c0_334 = arith.constant 0 : index
    %742 = vector.load %arg25[%c1_332, %c0_333, %c0_334] : memref<3x48x32xf32, #tpu.memory_space<vmem>>, vector<1x8x32xf32>
    %743 = vector.shape_cast %742 : vector<1x8x32xf32> to vector<8x32xf32>
    %c2_335 = arith.constant 2 : index
    %c0_336 = arith.constant 0 : index
    %c0_337 = arith.constant 0 : index
    %744 = vector.load %arg25[%c2_335, %c0_336, %c0_337] : memref<3x48x32xf32, #tpu.memory_space<vmem>>, vector<1x8x32xf32>
    %745 = vector.shape_cast %744 : vector<1x8x32xf32> to vector<8x32xf32>
    %746 = arith.truncf %707 : vector<8x32xf32> to vector<8x32xbf16>
    %cst_338 = arith.constant dense<0.000000e+00> : vector<8x96xf32>
    %747 = tpu.matmul %746, %736, %cst_338 {dimension_numbers = #tpu.dot_dimension_numbers<[1], [0], [0], [1], [0, 0, 1, 1], [], []>} : vector<8x32xbf16>, vector<32x96xbf16>, vector<8x96xf32> -> vector<8x96xf32>
    %748 = vector.extract_strided_slice %747 {offsets = [0, 0], sizes = [8, 32], strides = [1, 1]} : vector<8x96xf32> to vector<8x32xf32>
    %749 = arith.addf %741, %748 : vector<8x32xf32>
    %750 = arith.negf %749 : vector<8x32xf32>
    %751 = math.exp %750 : vector<8x32xf32>
    %cst_339 = arith.constant 1.000000e+00 : f32
    %752 = vector.broadcast %cst_339 : f32 to vector<8x32xf32>
    %753 = arith.addf %752, %751 : vector<8x32xf32>
    %754 = arith.divf %752, %753 : vector<8x32xf32>
    %755 = vector.extract_strided_slice %747 {offsets = [0, 32], sizes = [8, 32], strides = [1, 1]} : vector<8x96xf32> to vector<8x32xf32>
    %756 = arith.addf %743, %755 : vector<8x32xf32>
    %757 = arith.negf %756 : vector<8x32xf32>
    %758 = math.exp %757 : vector<8x32xf32>
    %cst_340 = arith.constant 1.000000e+00 : f32
    %759 = vector.broadcast %cst_340 : f32 to vector<8x32xf32>
    %760 = arith.addf %759, %758 : vector<8x32xf32>
    %761 = arith.divf %759, %760 : vector<8x32xf32>
    %762 = vector.extract_strided_slice %747 {offsets = [0, 64], sizes = [8, 32], strides = [1, 1]} : vector<8x96xf32> to vector<8x32xf32>
    %763 = arith.addf %762, %739 : vector<8x32xf32>
    %764 = arith.mulf %754, %763 : vector<8x32xf32>
    %765 = arith.addf %745, %764 : vector<8x32xf32>
    %766 = math.tanh %765 : vector<8x32xf32>
    %cst_341 = arith.constant 1.000000e+00 : f32
    %767 = vector.broadcast %cst_341 : f32 to vector<8x32xf32>
    %768 = arith.subf %767, %761 : vector<8x32xf32>
    %769 = arith.mulf %768, %766 : vector<8x32xf32>
    %770 = arith.mulf %761, %707 : vector<8x32xf32>
    %771 = arith.addf %769, %770 : vector<8x32xf32>
    %c0_342 = arith.constant 0 : index
    %c0_343 = arith.constant 0 : index
    %772 = vector.load %arg21[%c0_342, %c0_343] : memref<48x32xf32, #tpu.memory_space<vmem>>, vector<8x32xf32>
    tpu.vector_store %arg21[%c0_342, %c0_343], %771 {strides = array<i32>} : memref<48x32xf32, #tpu.memory_space<vmem>>, vector<8x32xf32>,
    %c0_344 = arith.constant 0 : index
    %c8_345 = arith.constant 8 : index
    %c0_346 = arith.constant 0 : index
    %773 = vector.load %arg25[%c0_344, %c8_345, %c0_346] : memref<3x48x32xf32, #tpu.memory_space<vmem>>, vector<1x8x32xf32>
    %774 = vector.shape_cast %773 : vector<1x8x32xf32> to vector<8x32xf32>
    %c1_347 = arith.constant 1 : index
    %c8_348 = arith.constant 8 : index
    %c0_349 = arith.constant 0 : index
    %775 = vector.load %arg25[%c1_347, %c8_348, %c0_349] : memref<3x48x32xf32, #tpu.memory_space<vmem>>, vector<1x8x32xf32>
    %776 = vector.shape_cast %775 : vector<1x8x32xf32> to vector<8x32xf32>
    %c2_350 = arith.constant 2 : index
    %c8_351 = arith.constant 8 : index
    %c0_352 = arith.constant 0 : index
    %777 = vector.load %arg25[%c2_350, %c8_351, %c0_352] : memref<3x48x32xf32, #tpu.memory_space<vmem>>, vector<1x8x32xf32>
    %778 = vector.shape_cast %777 : vector<1x8x32xf32> to vector<8x32xf32>
    %779 = arith.truncf %771 : vector<8x32xf32> to vector<8x32xbf16>
    %cst_353 = arith.constant dense<0.000000e+00> : vector<8x96xf32>
    %780 = tpu.matmul %779, %736, %cst_353 {dimension_numbers = #tpu.dot_dimension_numbers<[1], [0], [0], [1], [0, 0, 1, 1], [], []>} : vector<8x32xbf16>, vector<32x96xbf16>, vector<8x96xf32> -> vector<8x96xf32>
    %781 = vector.extract_strided_slice %780 {offsets = [0, 0], sizes = [8, 32], strides = [1, 1]} : vector<8x96xf32> to vector<8x32xf32>
    %782 = arith.addf %774, %781 : vector<8x32xf32>
    %783 = arith.negf %782 : vector<8x32xf32>
    %784 = math.exp %783 : vector<8x32xf32>
    %cst_354 = arith.constant 1.000000e+00 : f32
    %785 = vector.broadcast %cst_354 : f32 to vector<8x32xf32>
    %786 = arith.addf %785, %784 : vector<8x32xf32>
    %787 = arith.divf %785, %786 : vector<8x32xf32>
    %788 = vector.extract_strided_slice %780 {offsets = [0, 32], sizes = [8, 32], strides = [1, 1]} : vector<8x96xf32> to vector<8x32xf32>
    %789 = arith.addf %776, %788 : vector<8x32xf32>
    %790 = arith.negf %789 : vector<8x32xf32>
    %791 = math.exp %790 : vector<8x32xf32>
    %cst_355 = arith.constant 1.000000e+00 : f32
    %792 = vector.broadcast %cst_355 : f32 to vector<8x32xf32>
    %793 = arith.addf %792, %791 : vector<8x32xf32>
    %794 = arith.divf %792, %793 : vector<8x32xf32>
    %795 = vector.extract_strided_slice %780 {offsets = [0, 64], sizes = [8, 32], strides = [1, 1]} : vector<8x96xf32> to vector<8x32xf32>
    %796 = arith.addf %795, %739 : vector<8x32xf32>
    %797 = arith.mulf %787, %796 : vector<8x32xf32>
    %798 = arith.addf %778, %797 : vector<8x32xf32>
    %799 = math.tanh %798 : vector<8x32xf32>
    %cst_356 = arith.constant 1.000000e+00 : f32
    %800 = vector.broadcast %cst_356 : f32 to vector<8x32xf32>
    %801 = arith.subf %800, %794 : vector<8x32xf32>
    %802 = arith.mulf %801, %799 : vector<8x32xf32>
    %803 = arith.mulf %794, %771 : vector<8x32xf32>
    %804 = arith.addf %802, %803 : vector<8x32xf32>
    %c8_357 = arith.constant 8 : index
    %c0_358 = arith.constant 0 : index
    %805 = vector.load %arg21[%c8_357, %c0_358] : memref<48x32xf32, #tpu.memory_space<vmem>>, vector<8x32xf32>
    tpu.vector_store %arg21[%c8_357, %c0_358], %804 {strides = array<i32>} : memref<48x32xf32, #tpu.memory_space<vmem>>, vector<8x32xf32>,
    %c0_359 = arith.constant 0 : index
    %c16_360 = arith.constant 16 : index
    %c0_361 = arith.constant 0 : index
    %806 = vector.load %arg25[%c0_359, %c16_360, %c0_361] : memref<3x48x32xf32, #tpu.memory_space<vmem>>, vector<1x8x32xf32>
    %807 = vector.shape_cast %806 : vector<1x8x32xf32> to vector<8x32xf32>
    %c1_362 = arith.constant 1 : index
    %c16_363 = arith.constant 16 : index
    %c0_364 = arith.constant 0 : index
    %808 = vector.load %arg25[%c1_362, %c16_363, %c0_364] : memref<3x48x32xf32, #tpu.memory_space<vmem>>, vector<1x8x32xf32>
    %809 = vector.shape_cast %808 : vector<1x8x32xf32> to vector<8x32xf32>
    %c2_365 = arith.constant 2 : index
    %c16_366 = arith.constant 16 : index
    %c0_367 = arith.constant 0 : index
    %810 = vector.load %arg25[%c2_365, %c16_366, %c0_367] : memref<3x48x32xf32, #tpu.memory_space<vmem>>, vector<1x8x32xf32>
    %811 = vector.shape_cast %810 : vector<1x8x32xf32> to vector<8x32xf32>
    %812 = arith.truncf %804 : vector<8x32xf32> to vector<8x32xbf16>
    %cst_368 = arith.constant dense<0.000000e+00> : vector<8x96xf32>
    %813 = tpu.matmul %812, %736, %cst_368 {dimension_numbers = #tpu.dot_dimension_numbers<[1], [0], [0], [1], [0, 0, 1, 1], [], []>} : vector<8x32xbf16>, vector<32x96xbf16>, vector<8x96xf32> -> vector<8x96xf32>
    %814 = vector.extract_strided_slice %813 {offsets = [0, 0], sizes = [8, 32], strides = [1, 1]} : vector<8x96xf32> to vector<8x32xf32>
    %815 = arith.addf %807, %814 : vector<8x32xf32>
    %816 = arith.negf %815 : vector<8x32xf32>
    %817 = math.exp %816 : vector<8x32xf32>
    %cst_369 = arith.constant 1.000000e+00 : f32
    %818 = vector.broadcast %cst_369 : f32 to vector<8x32xf32>
    %819 = arith.addf %818, %817 : vector<8x32xf32>
    %820 = arith.divf %818, %819 : vector<8x32xf32>
    %821 = vector.extract_strided_slice %813 {offsets = [0, 32], sizes = [8, 32], strides = [1, 1]} : vector<8x96xf32> to vector<8x32xf32>
    %822 = arith.addf %809, %821 : vector<8x32xf32>
    %823 = arith.negf %822 : vector<8x32xf32>
    %824 = math.exp %823 : vector<8x32xf32>
    %cst_370 = arith.constant 1.000000e+00 : f32
    %825 = vector.broadcast %cst_370 : f32 to vector<8x32xf32>
    %826 = arith.addf %825, %824 : vector<8x32xf32>
    %827 = arith.divf %825, %826 : vector<8x32xf32>
    %828 = vector.extract_strided_slice %813 {offsets = [0, 64], sizes = [8, 32], strides = [1, 1]} : vector<8x96xf32> to vector<8x32xf32>
    %829 = arith.addf %828, %739 : vector<8x32xf32>
    %830 = arith.mulf %820, %829 : vector<8x32xf32>
    %831 = arith.addf %811, %830 : vector<8x32xf32>
    %832 = math.tanh %831 : vector<8x32xf32>
    %cst_371 = arith.constant 1.000000e+00 : f32
    %833 = vector.broadcast %cst_371 : f32 to vector<8x32xf32>
    %834 = arith.subf %833, %827 : vector<8x32xf32>
    %835 = arith.mulf %834, %832 : vector<8x32xf32>
    %836 = arith.mulf %827, %804 : vector<8x32xf32>
    %837 = arith.addf %835, %836 : vector<8x32xf32>
    %c16_372 = arith.constant 16 : index
    %c0_373 = arith.constant 0 : index
    %838 = vector.load %arg21[%c16_372, %c0_373] : memref<48x32xf32, #tpu.memory_space<vmem>>, vector<8x32xf32>
    tpu.vector_store %arg21[%c16_372, %c0_373], %837 {strides = array<i32>} : memref<48x32xf32, #tpu.memory_space<vmem>>, vector<8x32xf32>,
    %c0_374 = arith.constant 0 : index
    %c24_375 = arith.constant 24 : index
    %c0_376 = arith.constant 0 : index
    %839 = vector.load %arg25[%c0_374, %c24_375, %c0_376] : memref<3x48x32xf32, #tpu.memory_space<vmem>>, vector<1x8x32xf32>
    %840 = vector.shape_cast %839 : vector<1x8x32xf32> to vector<8x32xf32>
    %c1_377 = arith.constant 1 : index
    %c24_378 = arith.constant 24 : index
    %c0_379 = arith.constant 0 : index
    %841 = vector.load %arg25[%c1_377, %c24_378, %c0_379] : memref<3x48x32xf32, #tpu.memory_space<vmem>>, vector<1x8x32xf32>
    %842 = vector.shape_cast %841 : vector<1x8x32xf32> to vector<8x32xf32>
    %c2_380 = arith.constant 2 : index
    %c24_381 = arith.constant 24 : index
    %c0_382 = arith.constant 0 : index
    %843 = vector.load %arg25[%c2_380, %c24_381, %c0_382] : memref<3x48x32xf32, #tpu.memory_space<vmem>>, vector<1x8x32xf32>
    %844 = vector.shape_cast %843 : vector<1x8x32xf32> to vector<8x32xf32>
    %845 = arith.truncf %837 : vector<8x32xf32> to vector<8x32xbf16>
    %cst_383 = arith.constant dense<0.000000e+00> : vector<8x96xf32>
    %846 = tpu.matmul %845, %736, %cst_383 {dimension_numbers = #tpu.dot_dimension_numbers<[1], [0], [0], [1], [0, 0, 1, 1], [], []>} : vector<8x32xbf16>, vector<32x96xbf16>, vector<8x96xf32> -> vector<8x96xf32>
    %847 = vector.extract_strided_slice %846 {offsets = [0, 0], sizes = [8, 32], strides = [1, 1]} : vector<8x96xf32> to vector<8x32xf32>
    %848 = arith.addf %840, %847 : vector<8x32xf32>
    %849 = arith.negf %848 : vector<8x32xf32>
    %850 = math.exp %849 : vector<8x32xf32>
    %cst_384 = arith.constant 1.000000e+00 : f32
    %851 = vector.broadcast %cst_384 : f32 to vector<8x32xf32>
    %852 = arith.addf %851, %850 : vector<8x32xf32>
    %853 = arith.divf %851, %852 : vector<8x32xf32>
    %854 = vector.extract_strided_slice %846 {offsets = [0, 32], sizes = [8, 32], strides = [1, 1]} : vector<8x96xf32> to vector<8x32xf32>
    %855 = arith.addf %842, %854 : vector<8x32xf32>
    %856 = arith.negf %855 : vector<8x32xf32>
    %857 = math.exp %856 : vector<8x32xf32>
    %cst_385 = arith.constant 1.000000e+00 : f32
    %858 = vector.broadcast %cst_385 : f32 to vector<8x32xf32>
    %859 = arith.addf %858, %857 : vector<8x32xf32>
    %860 = arith.divf %858, %859 : vector<8x32xf32>
    %861 = vector.extract_strided_slice %846 {offsets = [0, 64], sizes = [8, 32], strides = [1, 1]} : vector<8x96xf32> to vector<8x32xf32>
    %862 = arith.addf %861, %739 : vector<8x32xf32>
    %863 = arith.mulf %853, %862 : vector<8x32xf32>
    %864 = arith.addf %844, %863 : vector<8x32xf32>
    %865 = math.tanh %864 : vector<8x32xf32>
    %cst_386 = arith.constant 1.000000e+00 : f32
    %866 = vector.broadcast %cst_386 : f32 to vector<8x32xf32>
    %867 = arith.subf %866, %860 : vector<8x32xf32>
    %868 = arith.mulf %867, %865 : vector<8x32xf32>
    %869 = arith.mulf %860, %837 : vector<8x32xf32>
    %870 = arith.addf %868, %869 : vector<8x32xf32>
    %c24_387 = arith.constant 24 : index
    %c0_388 = arith.constant 0 : index
    %871 = vector.load %arg21[%c24_387, %c0_388] : memref<48x32xf32, #tpu.memory_space<vmem>>, vector<8x32xf32>
    tpu.vector_store %arg21[%c24_387, %c0_388], %870 {strides = array<i32>} : memref<48x32xf32, #tpu.memory_space<vmem>>, vector<8x32xf32>,
    %c0_389 = arith.constant 0 : index
    %c32_390 = arith.constant 32 : index
    %c0_391 = arith.constant 0 : index
    %872 = vector.load %arg25[%c0_389, %c32_390, %c0_391] : memref<3x48x32xf32, #tpu.memory_space<vmem>>, vector<1x8x32xf32>
    %873 = vector.shape_cast %872 : vector<1x8x32xf32> to vector<8x32xf32>
    %c1_392 = arith.constant 1 : index
    %c32_393 = arith.constant 32 : index
    %c0_394 = arith.constant 0 : index
    %874 = vector.load %arg25[%c1_392, %c32_393, %c0_394] : memref<3x48x32xf32, #tpu.memory_space<vmem>>, vector<1x8x32xf32>
    %875 = vector.shape_cast %874 : vector<1x8x32xf32> to vector<8x32xf32>
    %c2_395 = arith.constant 2 : index
    %c32_396 = arith.constant 32 : index
    %c0_397 = arith.constant 0 : index
    %876 = vector.load %arg25[%c2_395, %c32_396, %c0_397] : memref<3x48x32xf32, #tpu.memory_space<vmem>>, vector<1x8x32xf32>
    %877 = vector.shape_cast %876 : vector<1x8x32xf32> to vector<8x32xf32>
    %878 = arith.truncf %870 : vector<8x32xf32> to vector<8x32xbf16>
    %cst_398 = arith.constant dense<0.000000e+00> : vector<8x96xf32>
    %879 = tpu.matmul %878, %736, %cst_398 {dimension_numbers = #tpu.dot_dimension_numbers<[1], [0], [0], [1], [0, 0, 1, 1], [], []>} : vector<8x32xbf16>, vector<32x96xbf16>, vector<8x96xf32> -> vector<8x96xf32>
    %880 = vector.extract_strided_slice %879 {offsets = [0, 0], sizes = [8, 32], strides = [1, 1]} : vector<8x96xf32> to vector<8x32xf32>
    %881 = arith.addf %873, %880 : vector<8x32xf32>
    %882 = arith.negf %881 : vector<8x32xf32>
    %883 = math.exp %882 : vector<8x32xf32>
    %cst_399 = arith.constant 1.000000e+00 : f32
    %884 = vector.broadcast %cst_399 : f32 to vector<8x32xf32>
    %885 = arith.addf %884, %883 : vector<8x32xf32>
    %886 = arith.divf %884, %885 : vector<8x32xf32>
    %887 = vector.extract_strided_slice %879 {offsets = [0, 32], sizes = [8, 32], strides = [1, 1]} : vector<8x96xf32> to vector<8x32xf32>
    %888 = arith.addf %875, %887 : vector<8x32xf32>
    %889 = arith.negf %888 : vector<8x32xf32>
    %890 = math.exp %889 : vector<8x32xf32>
    %cst_400 = arith.constant 1.000000e+00 : f32
    %891 = vector.broadcast %cst_400 : f32 to vector<8x32xf32>
    %892 = arith.addf %891, %890 : vector<8x32xf32>
    %893 = arith.divf %891, %892 : vector<8x32xf32>
    %894 = vector.extract_strided_slice %879 {offsets = [0, 64], sizes = [8, 32], strides = [1, 1]} : vector<8x96xf32> to vector<8x32xf32>
    %895 = arith.addf %894, %739 : vector<8x32xf32>
    %896 = arith.mulf %886, %895 : vector<8x32xf32>
    %897 = arith.addf %877, %896 : vector<8x32xf32>
    %898 = math.tanh %897 : vector<8x32xf32>
    %cst_401 = arith.constant 1.000000e+00 : f32
    %899 = vector.broadcast %cst_401 : f32 to vector<8x32xf32>
    %900 = arith.subf %899, %893 : vector<8x32xf32>
    %901 = arith.mulf %900, %898 : vector<8x32xf32>
    %902 = arith.mulf %893, %870 : vector<8x32xf32>
    %903 = arith.addf %901, %902 : vector<8x32xf32>
    %c32_402 = arith.constant 32 : index
    %c0_403 = arith.constant 0 : index
    %904 = vector.load %arg21[%c32_402, %c0_403] : memref<48x32xf32, #tpu.memory_space<vmem>>, vector<8x32xf32>
    tpu.vector_store %arg21[%c32_402, %c0_403], %903 {strides = array<i32>} : memref<48x32xf32, #tpu.memory_space<vmem>>, vector<8x32xf32>,
    %c0_404 = arith.constant 0 : index
    %c40_405 = arith.constant 40 : index
    %c0_406 = arith.constant 0 : index
    %905 = vector.load %arg25[%c0_404, %c40_405, %c0_406] : memref<3x48x32xf32, #tpu.memory_space<vmem>>, vector<1x8x32xf32>
    %906 = vector.shape_cast %905 : vector<1x8x32xf32> to vector<8x32xf32>
    %c1_407 = arith.constant 1 : index
    %c40_408 = arith.constant 40 : index
    %c0_409 = arith.constant 0 : index
    %907 = vector.load %arg25[%c1_407, %c40_408, %c0_409] : memref<3x48x32xf32, #tpu.memory_space<vmem>>, vector<1x8x32xf32>
    %908 = vector.shape_cast %907 : vector<1x8x32xf32> to vector<8x32xf32>
    %c2_410 = arith.constant 2 : index
    %c40_411 = arith.constant 40 : index
    %c0_412 = arith.constant 0 : index
    %909 = vector.load %arg25[%c2_410, %c40_411, %c0_412] : memref<3x48x32xf32, #tpu.memory_space<vmem>>, vector<1x8x32xf32>
    %910 = vector.shape_cast %909 : vector<1x8x32xf32> to vector<8x32xf32>
    %911 = arith.truncf %903 : vector<8x32xf32> to vector<8x32xbf16>
    %cst_413 = arith.constant dense<0.000000e+00> : vector<8x96xf32>
    %912 = tpu.matmul %911, %736, %cst_413 {dimension_numbers = #tpu.dot_dimension_numbers<[1], [0], [0], [1], [0, 0, 1, 1], [], []>} : vector<8x32xbf16>, vector<32x96xbf16>, vector<8x96xf32> -> vector<8x96xf32>
    %913 = vector.extract_strided_slice %912 {offsets = [0, 0], sizes = [8, 32], strides = [1, 1]} : vector<8x96xf32> to vector<8x32xf32>
    %914 = arith.addf %906, %913 : vector<8x32xf32>
    %915 = arith.negf %914 : vector<8x32xf32>
    %916 = math.exp %915 : vector<8x32xf32>
    %cst_414 = arith.constant 1.000000e+00 : f32
    %917 = vector.broadcast %cst_414 : f32 to vector<8x32xf32>
    %918 = arith.addf %917, %916 : vector<8x32xf32>
    %919 = arith.divf %917, %918 : vector<8x32xf32>
    %920 = vector.extract_strided_slice %912 {offsets = [0, 32], sizes = [8, 32], strides = [1, 1]} : vector<8x96xf32> to vector<8x32xf32>
    %921 = arith.addf %908, %920 : vector<8x32xf32>
    %922 = arith.negf %921 : vector<8x32xf32>
    %923 = math.exp %922 : vector<8x32xf32>
    %cst_415 = arith.constant 1.000000e+00 : f32
    %924 = vector.broadcast %cst_415 : f32 to vector<8x32xf32>
    %925 = arith.addf %924, %923 : vector<8x32xf32>
    %926 = arith.divf %924, %925 : vector<8x32xf32>
    %927 = vector.extract_strided_slice %912 {offsets = [0, 64], sizes = [8, 32], strides = [1, 1]} : vector<8x96xf32> to vector<8x32xf32>
    %928 = arith.addf %927, %739 : vector<8x32xf32>
    %929 = arith.mulf %919, %928 : vector<8x32xf32>
    %930 = arith.addf %910, %929 : vector<8x32xf32>
    %931 = math.tanh %930 : vector<8x32xf32>
    %cst_416 = arith.constant 1.000000e+00 : f32
    %932 = vector.broadcast %cst_416 : f32 to vector<8x32xf32>
    %933 = arith.subf %932, %926 : vector<8x32xf32>
    %934 = arith.mulf %933, %931 : vector<8x32xf32>
    %935 = arith.mulf %926, %903 : vector<8x32xf32>
    %936 = arith.addf %934, %935 : vector<8x32xf32>
    %c40_417 = arith.constant 40 : index
    %c0_418 = arith.constant 0 : index
    %937 = vector.load %arg21[%c40_417, %c0_418] : memref<48x32xf32, #tpu.memory_space<vmem>>, vector<8x32xf32>
    tpu.vector_store %arg21[%c40_417, %c0_418], %936 {strides = array<i32>} : memref<48x32xf32, #tpu.memory_space<vmem>>, vector<8x32xf32>,
    %c0_419 = arith.constant 0 : index
    %c0_420 = arith.constant 0 : index
    %938 = vector.load %arg21[%c0_419, %c0_420] : memref<48x32xf32, #tpu.memory_space<vmem>>, vector<48x32xf32>
    %939 = arith.truncf %938 : vector<48x32xf32> to vector<48x32xbf16>
    %c0_421 = arith.constant 0 : index
    %c0_422 = arith.constant 0 : index
    %940 = vector.load %arg18[%c0_421, %c0_422] : memref<32x128xbf16, #tpu.memory_space<vmem>>, vector<32x128xbf16>
    %cst_423 = arith.constant dense<0.000000e+00> : vector<48x128xf32>
    %941 = tpu.matmul %939, %940, %cst_423 {dimension_numbers = #tpu.dot_dimension_numbers<[1], [0], [0], [1], [0, 0, 1, 1], [], []>} : vector<48x32xbf16>, vector<32x128xbf16>, vector<48x128xf32> -> vector<48x128xf32>
    %c0_424 = arith.constant 0 : index
    %c0_425 = arith.constant 0 : index
    %942 = vector.load %arg19[%c0_424, %c0_425] : memref<1x128xf32, #tpu.memory_space<vmem>>, vector<1x128xf32>
    %943 = vector.broadcast %942 : vector<1x128xf32> to vector<48x128xf32>
    %944 = arith.addf %941, %943 : vector<48x128xf32>
    %c0_426 = arith.constant 0 : index
    %c0_427 = arith.constant 0 : index
    %945 = vector.load %arg22[%c0_426, %c0_427] : memref<48x128xf32, #tpu.memory_space<vmem>>, vector<48x128xf32>
    tpu.vector_store %arg22[%c0_426, %c0_427], %944 {strides = array<i32>} : memref<48x128xf32, #tpu.memory_space<vmem>>, vector<48x128xf32>,
    return
  }
}

</mosaic_0001>

<llo_original>
// kernel: hred_forward.1
$region0: #{hred_forward.1}
  #allocation0 [shape = 'u32[]', space=smem, size = 0x4, offset = 0x4, fixed_abs, tag = 'smem constant byte address 0x4 - core index']
  #allocation1 [shape = 'u32[144,128]{1,0:T(1,128)}', space=vmem, size = 0x12000, scoped, tag = 'internal scratch']
  #allocation2 [shape = 'f32[3,120,32]{2,1,0:T(8,128)}', space=vmem, size = 0x2d000, scoped, tag = 'scratch operand']
  #allocation3 [shape = 'f32[3,120,32]{2,1,0:T(8,128)}', space=vmem, size = 0x2d000, scoped, tag = 'scratch operand']
  #allocation4 [shape = 'f32[3,48,32]{2,1,0:T(8,128)}', space=vmem, size = 0x12000, scoped, tag = 'scratch operand']
  %s0 = inlined_call_operand.vmem [shape: s32[120,1], index: 0, kind: input, shape index: {}]
  %s1 = inlined_call_operand.vmem [shape: s32[48,1], index: 1, kind: input, shape index: {}]
  %s2 = inlined_call_operand.vmem [shape: bf16[128,32], index: 2, kind: input, shape index: {}]
  %s3 = inlined_call_operand.vmem [shape: bf16[32,96], index: 3, kind: input, shape index: {}]
  %s4 = inlined_call_operand.vmem [shape: bf16[32,96], index: 4, kind: input, shape index: {}]
  %s5 = inlined_call_operand.vmem [shape: f32[1,96], index: 5, kind: input, shape index: {}]
  %s6 = inlined_call_operand.vmem [shape: f32[1,32], index: 6, kind: input, shape index: {}]
  %s7 = inlined_call_operand.vmem [shape: bf16[32,96], index: 7, kind: input, shape index: {}]
  %s8 = inlined_call_operand.vmem [shape: bf16[32,96], index: 8, kind: input, shape index: {}]
  %s9 = inlined_call_operand.vmem [shape: f32[1,96], index: 9, kind: input, shape index: {}]
  %s10 = inlined_call_operand.vmem [shape: f32[1,32], index: 10, kind: input, shape index: {}]
  %s11 = inlined_call_operand.vmem [shape: bf16[32,32], index: 11, kind: input, shape index: {}]
  %s12 = inlined_call_operand.vmem [shape: f32[1,32], index: 12, kind: input, shape index: {}]
  %s13 = inlined_call_operand.vmem [shape: bf16[128,32], index: 13, kind: input, shape index: {}]
  %s14 = inlined_call_operand.vmem [shape: bf16[32,96], index: 14, kind: input, shape index: {}]
  %s15 = inlined_call_operand.vmem [shape: bf16[32,96], index: 15, kind: input, shape index: {}]
  %s16 = inlined_call_operand.vmem [shape: f32[1,96], index: 16, kind: input, shape index: {}]
  %s17 = inlined_call_operand.vmem [shape: f32[1,32], index: 17, kind: input, shape index: {}]
  %s18 = inlined_call_operand.vmem [shape: bf16[32,128], index: 18, kind: input, shape index: {}]
  %s19 = inlined_call_operand.vmem [shape: f32[1,128], index: 19, kind: input, shape index: {}]
  %s20 = inlined_call_operand.vmem [shape: f32[120,32], index: 20, kind: output, shape index: {0}]
  %s21 = inlined_call_operand.vmem [shape: f32[48,32], index: 21, kind: output, shape index: {1}]
  %s22 = inlined_call_operand.vmem [shape: f32[48,128], index: 22, kind: output, shape index: {2}]
  %23 = xla_tuple %s20, %s21, %s22
  %s24 = sld [smem:[#allocation0]]
  $region106: #{hred_forward.1} parent=0
    _
  %s26 = ssub.s32 1, %s24
  %s27 = scalar_select 0, %s26, %s24
  // Predicated region
  $region2: #{hred_forward.1} parent=0 // pred_check
    _
  $region3: #{hred_forward.1} parent=0 // pred_check_branch
    %29 = sbr.rel (0) target = $region5
  $region4: #{hred_forward.1} parent=0 // pred_region
    _
  $region5: #{hred_forward.1} parent=0 // pred_fallthru
    _
  // Predicated region
  $region6: #{hred_forward.1} parent=0 // pred_check
    _
  $region7: #{hred_forward.1} parent=0 // pred_check_branch
    %31 = sbr.rel (0) target = $region9
  $region8: #{hred_forward.1} parent=0 // pred_region
    _
  $region9: #{hred_forward.1} parent=0 // pred_fallthru
    _
  // Predicated region
  $region10: #{hred_forward.1} parent=0 // pred_check
    _
  $region11: #{hred_forward.1} parent=0 // pred_check_branch
    %33 = sbr.rel (0) target = $region13
  $region12: #{hred_forward.1} parent=0 // pred_region
    _
  $region13: #{hred_forward.1} parent=0 // pred_fallthru
    _
  // Predicated region
  $region14: #{hred_forward.1} parent=0 // pred_check
    _
  $region15: #{hred_forward.1} parent=0 // pred_check_branch
    %35 = sbr.rel (0) target = $region17
  $region16: #{hred_forward.1} parent=0 // pred_region
    _
  $region17: #{hred_forward.1} parent=0 // pred_fallthru
    _
  // Predicated region
  $region18: #{hred_forward.1} parent=0 // pred_check
    _
  $region19: #{hred_forward.1} parent=0 // pred_check_branch
    %37 = sbr.rel (0) target = $region21
  $region20: #{hred_forward.1} parent=0 // pred_region
    _
  $region21: #{hred_forward.1} parent=0 // pred_fallthru
    _
  // Predicated region
  $region22: #{hred_forward.1} parent=0 // pred_check
    _
  $region23: #{hred_forward.1} parent=0 // pred_check_branch
    %39 = sbr.rel (0) target = $region25
  $region24: #{hred_forward.1} parent=0 // pred_region
    _
  $region25: #{hred_forward.1} parent=0 // pred_fallthru
    _
  // Predicated region
  $region26: #{hred_forward.1} parent=0 // pred_check
    _
  $region27: #{hred_forward.1} parent=0 // pred_check_branch
    %41 = sbr.rel (0) target = $region29
  $region28: #{hred_forward.1} parent=0 // pred_region
    _
  $region29: #{hred_forward.1} parent=0 // pred_fallthru
    _
  // Predicated region
  $region30: #{hred_forward.1} parent=0 // pred_check
    _
  $region31: #{hred_forward.1} parent=0 // pred_check_branch
    %43 = sbr.rel (0) target = $region33
  $region32: #{hred_forward.1} parent=0 // pred_region
    _
  $region33: #{hred_forward.1} parent=0 // pred_fallthru
    _
  // Predicated region
  $region34: #{hred_forward.1} parent=0 // pred_check
    _
  $region35: #{hred_forward.1} parent=0 // pred_check_branch
    %45 = sbr.rel (0) target = $region37
  $region36: #{hred_forward.1} parent=0 // pred_region
    _
  $region37: #{hred_forward.1} parent=0 // pred_fallthru
    _
  // Predicated region
  $region38: #{hred_forward.1} parent=0 // pred_check
    _
  $region39: #{hred_forward.1} parent=0 // pred_check_branch
    %47 = sbr.rel (0) target = $region41
  $region40: #{hred_forward.1} parent=0 // pred_region
    _
  $region41: #{hred_forward.1} parent=0 // pred_fallthru
    _
  // Predicated region
  $region42: #{hred_forward.1} parent=0 // pred_check
    _
  $region43: #{hred_forward.1} parent=0 // pred_check_branch
    %49 = sbr.rel (0) target = $region45
  $region44: #{hred_forward.1} parent=0 // pred_region
    _
  $region45: #{hred_forward.1} parent=0 // pred_fallthru
    _
  // Predicated region
  $region46: #{hred_forward.1} parent=0 // pred_check
    _
  $region47: #{hred_forward.1} parent=0 // pred_check_branch
    %51 = sbr.rel (0) target = $region49
  $region48: #{hred_forward.1} parent=0 // pred_region
    _
  $region49: #{hred_forward.1} parent=0 // pred_fallthru
    _
  // Predicated region
  $region50: #{hred_forward.1} parent=0 // pred_check
    _
  $region51: #{hred_forward.1} parent=0 // pred_check_branch
    %53 = sbr.rel (0) target = $region53
  $region52: #{hred_forward.1} parent=0 // pred_region
    _
  $region53: #{hred_forward.1} parent=0 // pred_fallthru
    _
  // Predicated region
  $region54: #{hred_forward.1} parent=0 // pred_check
    _
  $region55: #{hred_forward.1} parent=0 // pred_check_branch
    %55 = sbr.rel (0) target = $region57
  $region56: #{hred_forward.1} parent=0 // pred_region
    _
  $region57: #{hred_forward.1} parent=0 // pred_fallthru
    _
  // Predicated region
  $region58: #{hred_forward.1} parent=0 // pred_check
    _
  $region59: #{hred_forward.1} parent=0 // pred_check_branch
    %57 = sbr.rel (0) target = $region61
  $region60: #{hred_forward.1} parent=0 // pred_region
    _
  $region61: #{hred_forward.1} parent=0 // pred_fallthru
    _
  // Predicated region
  $region62: #{hred_forward.1} parent=0 // pred_check
    _
  $region63: #{hred_forward.1} parent=0 // pred_check_branch
    %59 = sbr.rel (0) target = $region65
  $region64: #{hred_forward.1} parent=0 // pred_region
    _
  $region65: #{hred_forward.1} parent=0 // pred_fallthru
    _
  // Predicated region
  $region66: #{hred_forward.1} parent=0 // pred_check
    _
  $region67: #{hred_forward.1} parent=0 // pred_check_branch
    %61 = sbr.rel (0) target = $region69
  $region68: #{hred_forward.1} parent=0 // pred_region
    _
  $region69: #{hred_forward.1} parent=0 // pred_fallthru
    _
  // Predicated region
  $region70: #{hred_forward.1} parent=0 // pred_check
    _
  $region71: #{hred_forward.1} parent=0 // pred_check_branch
    %63 = sbr.rel (0) target = $region73
  $region72: #{hred_forward.1} parent=0 // pred_region
    _
  $region73: #{hred_forward.1} parent=0 // pred_fallthru
    _
  // Predicated region
  $region74: #{hred_forward.1} parent=0 // pred_check
    _
  $region75: #{hred_forward.1} parent=0 // pred_check_branch
    %65 = sbr.rel (0) target = $region77
  $region76: #{hred_forward.1} parent=0 // pred_region
    _
  $region77: #{hred_forward.1} parent=0 // pred_fallthru
    _
  // Predicated region
  $region78: #{hred_forward.1} parent=0 // pred_check
    _
  $region79: #{hred_forward.1} parent=0 // pred_check_branch
    %67 = sbr.rel (0) target = $region81
  $region80: #{hred_forward.1} parent=0 // pred_region
    _
  $region81: #{hred_forward.1} parent=0 // pred_fallthru
    _
  %v69 = vld [vmem:[%s0] sm:$0xff]
  %v70 = vld [vmem:[%s0 + $0x8] sm:$0xff]
  %v71 = vld [vmem:[%s0 + $0x10] sm:$0xff]
  %v72 = vld [vmem:[%s0 + $0x18] sm:$0xff]
  %v73 = vld [vmem:[%s0 + $0x20] sm:$0xff]
  %v74 = vld [vmem:[%s0 + $0x28] sm:$0xff]
  %v75 = vld [vmem:[%s0 + $0x30] sm:$0xff]
  %v76 = vld [vmem:[%s0 + $0x38] sm:$0xff]
  %v77 = vld [vmem:[%s0 + $0x40] sm:$0xff]
  %v78 = vld [vmem:[%s0 + $0x48] sm:$0xff]
  %v79 = vld [vmem:[%s0 + $0x50] sm:$0xff]
  %v80 = vld [vmem:[%s0 + $0x58] sm:$0xff]
  %v81 = vld [vmem:[%s0 + $0x60] sm:$0xff]
  %v82 = vld [vmem:[%s0 + $0x68] sm:$0xff]
  %v83 = vld [vmem:[%s0 + $0x70] sm:$0xff]
  %v84 = vlaneseq
  %v85 = vand.u32 %v84, 127
  %86 = vset.pattern.permute.xlu0 0
  %87 = vperm.xlu0 %86, %v69
  %v88 = vpop.permute.xlu0 %87
  %89 = vset.pattern.permute.xlu0 0
  %90 = vperm.xlu0 %89, %v70
  %v91 = vpop.permute.xlu0 %90
  %92 = vset.pattern.permute.xlu0 0
  %93 = vperm.xlu0 %92, %v71
  %v94 = vpop.permute.xlu0 %93
  %95 = vset.pattern.permute.xlu0 0
  %96 = vperm.xlu0 %95, %v72
  %v97 = vpop.permute.xlu0 %96
  %98 = vset.pattern.permute.xlu0 0
  %99 = vperm.xlu0 %98, %v73
  %v100 = vpop.permute.xlu0 %99
  %101 = vset.pattern.permute.xlu0 0
  %102 = vperm.xlu0 %101, %v74
  %v103 = vpop.permute.xlu0 %102
  %104 = vset.pattern.permute.xlu0 0
  %105 = vperm.xlu0 %104, %v75
  %v106 = vpop.permute.xlu0 %105
  %107 = vset.pattern.permute.xlu0 0
  %108 = vperm.xlu0 %107, %v76
  %v109 = vpop.permute.xlu0 %108
  %110 = vset.pattern.permute.xlu0 0
  %111 = vperm.xlu0 %110, %v77
  %v112 = vpop.permute.xlu0 %111
  %113 = vset.pattern.permute.xlu0 0
  %114 = vperm.xlu0 %113, %v78
  %v115 = vpop.permute.xlu0 %114
  %116 = vset.pattern.permute.xlu0 0
  %117 = vperm.xlu0 %116, %v79
  %v118 = vpop.permute.xlu0 %117
  %119 = vset.pattern.permute.xlu0 0
  %120 = vperm.xlu0 %119, %v80
  %v121 = vpop.permute.xlu0 %120
  %122 = vset.pattern.permute.xlu0 0
  %123 = vperm.xlu0 %122, %v81
  %v124 = vpop.permute.xlu0 %123
  %125 = vset.pattern.permute.xlu0 0
  %126 = vperm.xlu0 %125, %v82
  %v127 = vpop.permute.xlu0 %126
  %128 = vset.pattern.permute.xlu0 0
  %129 = vperm.xlu0 %128, %v83
  %v130 = vpop.permute.xlu0 %129
  %vm131 = vcmp.eq.s32.totalorder %v88, %v85
  %vm132 = vcmp.eq.s32.totalorder %v91, %v85
  %vm133 = vcmp.eq.s32.totalorder %v94, %v85
  %vm134 = vcmp.eq.s32.totalorder %v97, %v85
  %vm135 = vcmp.eq.s32.totalorder %v100, %v85
  %vm136 = vcmp.eq.s32.totalorder %v103, %v85
  %vm137 = vcmp.eq.s32.totalorder %v106, %v85
  %vm138 = vcmp.eq.s32.totalorder %v109, %v85
  %vm139 = vcmp.eq.s32.totalorder %v112, %v85
  %vm140 = vcmp.eq.s32.totalorder %v115, %v85
  %vm141 = vcmp.eq.s32.totalorder %v118, %v85
  %vm142 = vcmp.eq.s32.totalorder %v121, %v85
  %vm143 = vcmp.eq.s32.totalorder %v124, %v85
  %vm144 = vcmp.eq.s32.totalorder %v127, %v85
  %vm145 = vcmp.eq.s32.totalorder %v130, %v85
  %v146 = vsel %vm131, 1.0, 0.0
  %v147 = vsel %vm132, 1.0, 0.0
  %v148 = vsel %vm133, 1.0, 0.0
  %v149 = vsel %vm134, 1.0, 0.0
  %v150 = vsel %vm135, 1.0, 0.0
  %v151 = vsel %vm136, 1.0, 0.0
  %v152 = vsel %vm137, 1.0, 0.0
  %v153 = vsel %vm138, 1.0, 0.0
  %v154 = vsel %vm139, 1.0, 0.0
  %v155 = vsel %vm140, 1.0, 0.0
  %v156 = vsel %vm141, 1.0, 0.0
  %v157 = vsel %vm142, 1.0, 0.0
  %v158 = vsel %vm143, 1.0, 0.0
  %v159 = vsel %vm144, 1.0, 0.0
  %v160 = vsel %vm145, 1.0, 0.0
  %v161 = vpack.c.bf16 %v147, %v146
  %v162 = vpack.c.bf16 %v149, %v148
  %v163 = vpack.c.bf16 %v151, %v150
  %v164 = vpack.c.bf16 %v153, %v152
  %v165 = vpack.c.bf16 %v155, %v154
  %v166 = vpack.c.bf16 %v157, %v156
  %v167 = vpack.c.bf16 %v159, %v158
  %v168 = vpack.c.bf16 %v160, %v160
  %v169 = vld [vmem:[%s2] sm:$0xf]
  %v170 = vld [vmem:[%s2 + $0x4] sm:$0xf]
  %v171 = vld [vmem:[%s2 + $0x8] sm:$0xf]
  %v172 = vld [vmem:[%s2 + $0xc] sm:$0xf]
  %v173 = vld [vmem:[%s2 + $0x10] sm:$0xf]
  %v174 = vld [vmem:[%s2 + $0x14] sm:$0xf]
  %v175 = vld [vmem:[%s2 + $0x18] sm:$0xf]
  %v176 = vld [vmem:[%s2 + $0x1c] sm:$0xf]
  %v177 = vld [vmem:[%s2 + $0x20] sm:$0xf]
  %v178 = vld [vmem:[%s2 + $0x24] sm:$0xf]
  %v179 = vld [vmem:[%s2 + $0x28] sm:$0xf]
  %v180 = vld [vmem:[%s2 + $0x2c] sm:$0xf]
  %v181 = vld [vmem:[%s2 + $0x30] sm:$0xf]
  %v182 = vld [vmem:[%s2 + $0x34] sm:$0xf]
  %v183 = vld [vmem:[%s2 + $0x38] sm:$0xf]
  %v184 = vld [vmem:[%s2 + $0x3c] sm:$0xf]
  %v201 = vunpack.c.l.b16 %v169
  %v202 = vunpack.c.l.b16 %v170
  %v203 = vunpack.c.l.b16 %v171
  %v204 = vunpack.c.l.b16 %v172
  %v205 = vunpack.c.l.b16 %v173
  %v206 = vunpack.c.l.b16 %v174
  %v207 = vunpack.c.l.b16 %v175
  %v208 = vunpack.c.l.b16 %v176
  %v209 = vunpack.c.l.b16 %v177
  %v210 = vunpack.c.l.b16 %v178
  %v211 = vunpack.c.l.b16 %v179
  %v212 = vunpack.c.l.b16 %v180
  %v213 = vunpack.c.l.b16 %v181
  %v214 = vunpack.c.l.b16 %v182
  %v215 = vunpack.c.l.b16 %v183
  %v216 = vunpack.c.l.b16 %v184
  %v217 = vpack.c.b16 %v202, %v201
  %v218 = vpack.c.b16 %v204, %v203
  %v219 = vpack.c.b16 %v206, %v205
  %v220 = vpack.c.b16 %v208, %v207
  %v221 = vpack.c.b16 %v210, %v209
  %v222 = vpack.c.b16 %v212, %v211
  %v223 = vpack.c.b16 %v214, %v213
  %v224 = vpack.c.b16 %v216, %v215
  %233 = vmatprep.subr.bf16.mxu0 0
  %234 = vmatpush1.bf16.msra.mxu0 %v217
  %235 = vmatprep.subr.bf16.mxu0 0
  %236 = vmatpush1.bf16.msra.mxu0 %v218
  %237 = vmatprep.subr.bf16.mxu0 0
  %238 = vmatpush1.bf16.msra.mxu0 %v219
  %239 = vmatprep.subr.bf16.mxu0 0
  %240 = vmatpush1.bf16.msra.mxu0 %v220
  %241 = vmatprep.subr.bf16.mxu0 0
  %242 = vmatpush1.bf16.msra.mxu0 %v221
  %243 = vmatprep.subr.bf16.mxu0 0
  %244 = vmatpush1.bf16.msra.mxu0 %v222
  %245 = vmatprep.subr.bf16.mxu0 0
  %246 = vmatpush1.bf16.msra.mxu0 %v223
  %247 = vmatprep.subr.bf16.mxu0 0
  %248 = vmatpush1.bf16.msra.mxu0 %v224
  %249 = vmatprep.subr.bf16.mxu0 0
  %250 = vmatpush1.bf16.msra.mxu0 0
  %251 = vmatprep.subr.bf16.mxu0 0
  %252 = vmatpush1.bf16.msra.mxu0 0
  %253 = vmatprep.subr.bf16.mxu0 0
  %254 = vmatpush1.bf16.msra.mxu0 0
  %255 = vmatprep.subr.bf16.mxu0 0
  %256 = vmatpush1.bf16.msra.mxu0 0
  %257 = vmatprep.subr.bf16.mxu0 0
  %258 = vmatpush1.bf16.msra.mxu0 0
  %259 = vmatprep.subr.bf16.mxu0 0
  %260 = vmatpush1.bf16.msra.mxu0 0
  %261 = vmatprep.subr.bf16.mxu0 0
  %262 = vmatpush1.bf16.msra.mxu0 0
  %263 = vmatprep.subr.bf16.mxu0 0
  %264 = vmatpush1.bf16.msra.mxu0 0
  %265 = vmatprep.mubr.bf16.mxu0 0
  %266 = vmatmul.mubr.bf16.gmra.mrb[0].mxu0 %v161
  %v267 = vpop.f32.mrb[0].mxu0
  %v268 = vadd.f32 0.0, %v267
  %v269 = vpop.f32.mrb[0].mxu0
  %v270 = vpop.f32.mrb[0].mxu0
  %v271 = vadd.f32 0.0, %v270
  %v272 = vpop.f32.mrb[0].mxu0
  %273 = vmatprep.mubr.bf16.mxu0 0
  %274 = vmatmul.mubr.bf16.gmra.mrb[0].mxu0 %v162
  %v275 = vpop.f32.mrb[0].mxu0
  %v276 = vadd.f32 0.0, %v275
  %v277 = vpop.f32.mrb[0].mxu0
  %v278 = vpop.f32.mrb[0].mxu0
  %v279 = vadd.f32 0.0, %v278
  %v280 = vpop.f32.mrb[0].mxu0
  %281 = vmatprep.mubr.bf16.mxu0 0
  %282 = vmatmul.mubr.bf16.gmra.mrb[0].mxu0 %v163
  %v283 = vpop.f32.mrb[0].mxu0
  %v284 = vadd.f32 0.0, %v283
  %v285 = vpop.f32.mrb[0].mxu0
  %v286 = vpop.f32.mrb[0].mxu0
  %v287 = vadd.f32 0.0, %v286
  %v288 = vpop.f32.mrb[0].mxu0
  %289 = vmatprep.mubr.bf16.mxu0 0
  %290 = vmatmul.mubr.bf16.gmra.mrb[0].mxu0 %v164
  %v291 = vpop.f32.mrb[0].mxu0
  %v292 = vadd.f32 0.0, %v291
  %v293 = vpop.f32.mrb[0].mxu0
  %v294 = vpop.f32.mrb[0].mxu0
  %v295 = vadd.f32 0.0, %v294
  %v296 = vpop.f32.mrb[0].mxu0
  %297 = vmatprep.mubr.bf16.mxu0 0
  %298 = vmatmul.mubr.bf16.gmra.mrb[0].mxu0 %v165
  %v299 = vpop.f32.mrb[0].mxu0
  %v300 = vadd.f32 0.0, %v299
  %v301 = vpop.f32.mrb[0].mxu0
  %v302 = vpop.f32.mrb[0].mxu0
  %v303 = vadd.f32 0.0, %v302
  %v304 = vpop.f32.mrb[0].mxu0
  %305 = vmatprep.mubr.bf16.mxu0 0
  %306 = vmatmul.mubr.bf16.gmra.mrb[0].mxu0 %v166
  %v307 = vpop.f32.mrb[0].mxu0
  %v308 = vadd.f32 0.0, %v307
  %v309 = vpop.f32.mrb[0].mxu0
  %v310 = vpop.f32.mrb[0].mxu0
  %v311 = vadd.f32 0.0, %v310
  %v312 = vpop.f32.mrb[0].mxu0
  %313 = vmatprep.mubr.bf16.mxu0 0
  %314 = vmatmul.mubr.bf16.gmra.mrb[0].mxu0 %v167
  %v315 = vpop.f32.mrb[0].mxu0
  %v316 = vadd.f32 0.0, %v315
  %v317 = vpop.f32.mrb[0].mxu0
  %v318 = vpop.f32.mrb[0].mxu0
  %v319 = vadd.f32 0.0, %v318
  %v320 = vpop.f32.mrb[0].mxu0
  %321 = vmatprep.mubr.bf16.mxu0 0
  %322 = vmatmul.mubr.bf16.gmra.mrb[0].mxu0 %v168
  %v323 = vpop.f32.mrb[0].mxu0
  %v324 = vadd.f32 0.0, %v323
  %v325 = vpop.f32.mrb[0].mxu0
  %v326 = vpop.f32.mrb[0].mxu0
  %v327 = vpop.f32.mrb[0].mxu0
  %328 = vdwg.mxu0
  %v329 = vpack.c.bf16 %v271, %v268
  %v330 = vpack.c.bf16 %v279, %v276
  %v331 = vpack.c.bf16 %v287, %v284
  %v332 = vpack.c.bf16 %v295, %v292
  %v333 = vpack.c.bf16 %v303, %v300
  %v334 = vpack.c.bf16 %v311, %v308
  %v335 = vpack.c.bf16 %v319, %v316
  %v336 = vpack.c.bf16 %v324, %v324
  %v337 = vld [vmem:[%s3] sm:$0xf]
  %v338 = vld [vmem:[%s3 + $0x4] sm:$0xf]
  %v339 = vld [vmem:[%s3 + $0x8] sm:$0xf]
  %v340 = vld [vmem:[%s3 + $0xc] sm:$0xf]
  %v341 = vld [vmem:[%s5] sm:$0x1]
  %v343 = vlaneseq
  %v344 = vshrl.u32 %v343, 7
  %v345 = vsub.s32 0, %v344
  %v346 = vrot.slane %v341, %v345
  %v352 = vunpack.c.l.b16 %v337
  %v353 = vunpack.c.l.b16 %v338
  %v354 = vunpack.c.l.b16 %v339
  %v355 = vunpack.c.l.b16 %v340
  %v356 = vpack.c.b16 %v353, %v352
  %v357 = vpack.c.b16 %v355, %v354
  %vm360 = vcmask 261120
  %v362 = vsel %vm360, %v329, 0
  %v365 = vsel %vm360, %v330, 0
  %v368 = vsel %vm360, %v331, 0
  %v371 = vsel %vm360, %v332, 0
  %v374 = vsel %vm360, %v333, 0
  %v377 = vsel %vm360, %v334, 0
  %v380 = vsel %vm360, %v335, 0
  %v383 = vsel %vm360, %v336, 0
  %385 = vmatprep.subr.bf16.mxu0 0
  %386 = vmatpush1.bf16.msra.mxu0 %v356
  %387 = vmatprep.subr.bf16.mxu0 0
  %388 = vmatpush1.bf16.msra.mxu0 %v357
  %389 = vmatprep.subr.bf16.mxu0 0
  %390 = vmatpush1.bf16.msra.mxu0 0
  %391 = vmatprep.subr.bf16.mxu0 0
  %392 = vmatpush1.bf16.msra.mxu0 0
  %393 = vmatprep.subr.bf16.mxu0 0
  %394 = vmatpush1.bf16.msra.mxu0 0
  %395 = vmatprep.subr.bf16.mxu0 0
  %396 = vmatpush1.bf16.msra.mxu0 0
  %397 = vmatprep.subr.bf16.mxu0 0
  %398 = vmatpush1.bf16.msra.mxu0 0
  %399 = vmatprep.subr.bf16.mxu0 0
  %400 = vmatpush1.bf16.msra.mxu0 0
  %401 = vmatprep.subr.bf16.mxu0 0
  %402 = vmatpush1.bf16.msra.mxu0 0
  %403 = vmatprep.subr.bf16.mxu0 0
  %404 = vmatpush1.bf16.msra.mxu0 0
  %405 = vmatprep.subr.bf16.mxu0 0
  %406 = vmatpush1.bf16.msra.mxu0 0
  %407 = vmatprep.subr.bf16.mxu0 0
  %408 = vmatpush1.bf16.msra.mxu0 0
  %409 = vmatprep.subr.bf16.mxu0 0
  %410 = vmatpush1.bf16.msra.mxu0 0
  %411 = vmatprep.subr.bf16.mxu0 0
  %412 = vmatpush1.bf16.msra.mxu0 0
  %413 = vmatprep.subr.bf16.mxu0 0
  %414 = vmatpush1.bf16.msra.mxu0 0
  %415 = vmatprep.subr.bf16.mxu0 0
  %416 = vmatpush1.bf16.msra.mxu0 0
  %417 = vmatprep.mubr.bf16.mxu0 0
  %418 = vmatmul.mubr.bf16.gmra.mrb[0].mxu0 %v362
  %v419 = vpop.f32.mrb[0].mxu0
  %v420 = vadd.f32 %v346, %v419
  %v421 = vpop.f32.mrb[0].mxu0
  %v422 = vpop.f32.mrb[0].mxu0
  %v423 = vadd.f32 %v346, %v422
  %v424 = vpop.f32.mrb[0].mxu0
  %425 = vmatprep.mubr.bf16.mxu0 0
  %426 = vmatmul.mubr.bf16.gmra.mrb[0].mxu0 %v365
  %v427 = vpop.f32.mrb[0].mxu0
  %v428 = vadd.f32 %v346, %v427
  %v429 = vpop.f32.mrb[0].mxu0
  %v430 = vpop.f32.mrb[0].mxu0
  %v431 = vadd.f32 %v346, %v430
  %v432 = vpop.f32.mrb[0].mxu0
  %433 = vmatprep.mubr.bf16.mxu0 0
  %434 = vmatmul.mubr.bf16.gmra.mrb[0].mxu0 %v368
  %v435 = vpop.f32.mrb[0].mxu0
  %v436 = vadd.f32 %v346, %v435
  %v437 = vpop.f32.mrb[0].mxu0
  %v438 = vpop.f32.mrb[0].mxu0
  %v439 = vadd.f32 %v346, %v438
  %v440 = vpop.f32.mrb[0].mxu0
  %441 = vmatprep.mubr.bf16.mxu0 0
  %442 = vmatmul.mubr.bf16.gmra.mrb[0].mxu0 %v371
  %v443 = vpop.f32.mrb[0].mxu0
  %v444 = vadd.f32 %v346, %v443
  %v445 = vpop.f32.mrb[0].mxu0
  %v446 = vpop.f32.mrb[0].mxu0
  %v447 = vadd.f32 %v346, %v446
  %v448 = vpop.f32.mrb[0].mxu0
  %449 = vmatprep.mubr.bf16.mxu0 0
  %450 = vmatmul.mubr.bf16.gmra.mrb[0].mxu0 %v374
  %v451 = vpop.f32.mrb[0].mxu0
  %v452 = vadd.f32 %v346, %v451
  %v453 = vpop.f32.mrb[0].mxu0
  %v454 = vpop.f32.mrb[0].mxu0
  %v455 = vadd.f32 %v346, %v454
  %v456 = vpop.f32.mrb[0].mxu0
  %457 = vmatprep.mubr.bf16.mxu0 0
  %458 = vmatmul.mubr.bf16.gmra.mrb[0].mxu0 %v377
  %v459 = vpop.f32.mrb[0].mxu0
  %v460 = vadd.f32 %v346, %v459
  %v461 = vpop.f32.mrb[0].mxu0
  %v462 = vpop.f32.mrb[0].mxu0
  %v463 = vadd.f32 %v346, %v462
  %v464 = vpop.f32.mrb[0].mxu0
  %465 = vmatprep.mubr.bf16.mxu0 0
  %466 = vmatmul.mubr.bf16.gmra.mrb[0].mxu0 %v380
  %v467 = vpop.f32.mrb[0].mxu0
  %v468 = vadd.f32 %v346, %v467
  %v469 = vpop.f32.mrb[0].mxu0
  %v470 = vpop.f32.mrb[0].mxu0
  %v471 = vadd.f32 %v346, %v470
  %v472 = vpop.f32.mrb[0].mxu0
  %473 = vmatprep.mubr.bf16.mxu0 0
  %474 = vmatmul.mubr.bf16.gmra.mrb[0].mxu0 %v383
  %v475 = vpop.f32.mrb[0].mxu0
  %v476 = vadd.f32 %v346, %v475
  %v477 = vpop.f32.mrb[0].mxu0
  %v478 = vpop.f32.mrb[0].mxu0
  %v479 = vpop.f32.mrb[0].mxu0
  %480 = vdwg.mxu0
  %481 = vst.msk [vmem:[#allocation2] sm:$0xff] %vm360, %v420
  %482 = vst.msk [vmem:[#allocation2 + $0x8] sm:$0xff] %vm360, %v423
  %483 = vst.msk [vmem:[#allocation2 + $0x10] sm:$0xff] %vm360, %v428
  %484 = vst.msk [vmem:[#allocation2 + $0x18] sm:$0xff] %vm360, %v431
  %485 = vst.msk [vmem:[#allocation2 + $0x20] sm:$0xff] %vm360, %v436
  %486 = vst.msk [vmem:[#allocation2 + $0x28] sm:$0xff] %vm360, %v439
  %487 = vst.msk [vmem:[#allocation2 + $0x30] sm:$0xff] %vm360, %v444
  %488 = vst.msk [vmem:[#allocation2 + $0x38] sm:$0xff] %vm360, %v447
  %489 = vst.msk [vmem:[#allocation2 + $0x40] sm:$0xff] %vm360, %v452
  %490 = vst.msk [vmem:[#allocation2 + $0x48] sm:$0xff] %vm360, %v455
  %491 = vst.msk [vmem:[#allocation2 + $0x50] sm:$0xff] %vm360, %v460
  %492 = vst.msk [vmem:[#allocation2 + $0x58] sm:$0xff] %vm360, %v463
  %493 = vst.msk [vmem:[#allocation2 + $0x60] sm:$0xff] %vm360, %v468
  %494 = vst.msk [vmem:[#allocation2 + $0x68] sm:$0xff] %vm360, %v471
  %495 = vst.msk [vmem:[#allocation2 + $0x70] sm:$0xff] %vm360, %v476
  %511 = vrot.lane.b32.xlu0 %v420, 96
  %v512 = vpop.permute.xlu0 %511
  %513 = vrot.lane.b32.xlu0 %v423, 96
  %v514 = vpop.permute.xlu0 %513
  %515 = vrot.lane.b32.xlu0 %v428, 96
  %v516 = vpop.permute.xlu0 %515
  %517 = vrot.lane.b32.xlu0 %v431, 96
  %v518 = vpop.permute.xlu0 %517
  %519 = vrot.lane.b32.xlu0 %v436, 96
  %v520 = vpop.permute.xlu0 %519
  %521 = vrot.lane.b32.xlu0 %v439, 96
  %v522 = vpop.permute.xlu0 %521
  %523 = vrot.lane.b32.xlu0 %v444, 96
  %v524 = vpop.permute.xlu0 %523
  %525 = vrot.lane.b32.xlu0 %v447, 96
  %v526 = vpop.permute.xlu0 %525
  %527 = vrot.lane.b32.xlu0 %v452, 96
  %v528 = vpop.permute.xlu0 %527
  %529 = vrot.lane.b32.xlu0 %v455, 96
  %v530 = vpop.permute.xlu0 %529
  %531 = vrot.lane.b32.xlu0 %v460, 96
  %v532 = vpop.permute.xlu0 %531
  %533 = vrot.lane.b32.xlu0 %v463, 96
  %v534 = vpop.permute.xlu0 %533
  %535 = vrot.lane.b32.xlu0 %v468, 96
  %v536 = vpop.permute.xlu0 %535
  %537 = vrot.lane.b32.xlu0 %v471, 96
  %v538 = vpop.permute.xlu0 %537
  %539 = vrot.lane.b32.xlu0 %v476, 96
  %v540 = vpop.permute.xlu0 %539
  %s556 = scalar_lea.vmem [#allocation2], 120
  %557 = vst.msk [vmem:[%s556] sm:$0xff] %vm360, %v512
  %558 = vst.msk [vmem:[%s556 + $0x8] sm:$0xff] %vm360, %v514
  %559 = vst.msk [vmem:[%s556 + $0x10] sm:$0xff] %vm360, %v516
  %560 = vst.msk [vmem:[%s556 + $0x18] sm:$0xff] %vm360, %v518
  %561 = vst.msk [vmem:[%s556 + $0x20] sm:$0xff] %vm360, %v520
  %562 = vst.msk [vmem:[%s556 + $0x28] sm:$0xff] %vm360, %v522
  %563 = vst.msk [vmem:[%s556 + $0x30] sm:$0xff] %vm360, %v524
  %564 = vst.msk [vmem:[%s556 + $0x38] sm:$0xff] %vm360, %v526
  %565 = vst.msk [vmem:[%s556 + $0x40] sm:$0xff] %vm360, %v528
  %566 = vst.msk [vmem:[%s556 + $0x48] sm:$0xff] %vm360, %v530
  %567 = vst.msk [vmem:[%s556 + $0x50] sm:$0xff] %vm360, %v532
  %568 = vst.msk [vmem:[%s556 + $0x58] sm:$0xff] %vm360, %v534
  %569 = vst.msk [vmem:[%s556 + $0x60] sm:$0xff] %vm360, %v536
  %570 = vst.msk [vmem:[%s556 + $0x68] sm:$0xff] %vm360, %v538
  %571 = vst.msk [vmem:[%s556 + $0x70] sm:$0xff] %vm360, %v540
  %572 = vrot.lane.b32.xlu0 %v420, 64
  %v573 = vpop.permute.xlu0 %572
  %574 = vrot.lane.b32.xlu0 %v423, 64
  %v575 = vpop.permute.xlu0 %574
  %576 = vrot.lane.b32.xlu0 %v428, 64
  %v577 = vpop.permute.xlu0 %576
  %578 = vrot.lane.b32.xlu0 %v431, 64
  %v579 = vpop.permute.xlu0 %578
  %580 = vrot.lane.b32.xlu0 %v436, 64
  %v581 = vpop.permute.xlu0 %580
  %582 = vrot.lane.b32.xlu0 %v439, 64
  %v583 = vpop.permute.xlu0 %582
  %584 = vrot.lane.b32.xlu0 %v444, 64
  %v585 = vpop.permute.xlu0 %584
  %586 = vrot.lane.b32.xlu0 %v447, 64
  %v587 = vpop.permute.xlu0 %586
  %588 = vrot.lane.b32.xlu0 %v452, 64
  %v589 = vpop.permute.xlu0 %588
  %590 = vrot.lane.b32.xlu0 %v455, 64
  %v591 = vpop.permute.xlu0 %590
  %592 = vrot.lane.b32.xlu0 %v460, 64
  %v593 = vpop.permute.xlu0 %592
  %594 = vrot.lane.b32.xlu0 %v463, 64
  %v595 = vpop.permute.xlu0 %594
  %596 = vrot.lane.b32.xlu0 %v468, 64
  %v597 = vpop.permute.xlu0 %596
  %598 = vrot.lane.b32.xlu0 %v471, 64
  %v599 = vpop.permute.xlu0 %598
  %600 = vrot.lane.b32.xlu0 %v476, 64
  %v601 = vpop.permute.xlu0 %600
  %s617 = scalar_lea.vmem [#allocation2], 240
  %618 = vst.msk [vmem:[%s617] sm:$0xff] %vm360, %v573
  %619 = vst.msk [vmem:[%s617 + $0x8] sm:$0xff] %vm360, %v575
  %620 = vst.msk [vmem:[%s617 + $0x10] sm:$0xff] %vm360, %v577
  %621 = vst.msk [vmem:[%s617 + $0x18] sm:$0xff] %vm360, %v579
  %622 = vst.msk [vmem:[%s617 + $0x20] sm:$0xff] %vm360, %v581
  %623 = vst.msk [vmem:[%s617 + $0x28] sm:$0xff] %vm360, %v583
  %624 = vst.msk [vmem:[%s617 + $0x30] sm:$0xff] %vm360, %v585
  %625 = vst.msk [vmem:[%s617 + $0x38] sm:$0xff] %vm360, %v587
  %626 = vst.msk [vmem:[%s617 + $0x40] sm:$0xff] %vm360, %v589
  %627 = vst.msk [vmem:[%s617 + $0x48] sm:$0xff] %vm360, %v591
  %628 = vst.msk [vmem:[%s617 + $0x50] sm:$0xff] %vm360, %v593
  %629 = vst.msk [vmem:[%s617 + $0x58] sm:$0xff] %vm360, %v595
  %630 = vst.msk [vmem:[%s617 + $0x60] sm:$0xff] %vm360, %v597
  %631 = vst.msk [vmem:[%s617 + $0x68] sm:$0xff] %vm360, %v599
  %632 = vst.msk [vmem:[%s617 + $0x70] sm:$0xff] %vm360, %v601
  %v633 = vld [vmem:[%s4] sm:$0xf]
  %v634 = vld [vmem:[%s4 + $0x4] sm:$0xf]
  %v635 = vld [vmem:[%s4 + $0x8] sm:$0xf]
  %v636 = vld [vmem:[%s4 + $0xc] sm:$0xf]
  %v637 = vld [vmem:[%s6] sm:$0x1]
  %v639 = vlaneseq
  %v640 = vshrl.u32 %v639, 7
  %v641 = vsub.s32 0, %v640
  %v642 = vrot.slane %v637, %v641
  %v643 = vld [vmem:[#allocation2] sm:$0xff]
  %v644 = vld [vmem:[#allocation2 + $0x8] sm:$0xff]
  %v645 = vld [vmem:[#allocation2 + $0x10] sm:$0xff]
  %v646 = vld [vmem:[%s556] sm:$0xff]
  %v647 = vld [vmem:[%s556 + $0x8] sm:$0xff]
  %v648 = vld [vmem:[%s556 + $0x10] sm:$0xff]
  %v649 = vld [vmem:[%s617] sm:$0xff]
  %v650 = vld [vmem:[%s617 + $0x8] sm:$0xff]
  %v651 = vld [vmem:[%s617 + $0x10] sm:$0xff]
  %v656 = vunpack.c.l.b16 %v633
  %v657 = vunpack.c.l.b16 %v634
  %v658 = vunpack.c.l.b16 %v635
  %v659 = vunpack.c.l.b16 %v636
  %v660 = vpack.c.b16 %v657, %v656
  %v661 = vpack.c.b16 %v659, %v658
  %v665 = vsel %vm360, 0, 0
  %667 = vmatprep.subr.bf16.mxu0 0
  %668 = vmatpush1.bf16.msra.mxu0 %v660
  %669 = vmatprep.subr.bf16.mxu0 0
  %670 = vmatpush1.bf16.msra.mxu0 %v661
  %671 = vmatprep.subr.bf16.mxu0 0
  %672 = vmatpush1.bf16.msra.mxu0 0
  %673 = vmatprep.subr.bf16.mxu0 0
  %674 = vmatpush1.bf16.msra.mxu0 0
  %675 = vmatprep.subr.bf16.mxu0 0
  %676 = vmatpush1.bf16.msra.mxu0 0
  %677 = vmatprep.subr.bf16.mxu0 0
  %678 = vmatpush1.bf16.msra.mxu0 0
  %679 = vmatprep.subr.bf16.mxu0 0
  %680 = vmatpush1.bf16.msra.mxu0 0
  %681 = vmatprep.subr.bf16.mxu0 0
  %682 = vmatpush1.bf16.msra.mxu0 0
  %683 = vmatprep.subr.bf16.mxu0 0
  %684 = vmatpush1.bf16.msra.mxu0 0
  %685 = vmatprep.subr.bf16.mxu0 0
  %686 = vmatpush1.bf16.msra.mxu0 0
  %687 = vmatprep.subr.bf16.mxu0 0
  %688 = vmatpush1.bf16.msra.mxu0 0
  %689 = vmatprep.subr.bf16.mxu0 0
  %690 = vmatpush1.bf16.msra.mxu0 0
  %691 = vmatprep.subr.bf16.mxu0 0
  %692 = vmatpush1.bf16.msra.mxu0 0
  %693 = vmatprep.subr.bf16.mxu0 0
  %694 = vmatpush1.bf16.msra.mxu0 0
  %695 = vmatprep.subr.bf16.mxu0 0
  %696 = vmatpush1.bf16.msra.mxu0 0
  %697 = vmatprep.subr.bf16.mxu0 0
  %698 = vmatpush1.bf16.msra.mxu0 0
  %699 = vmatprep.mubr.bf16.mxu0 0
  %700 = vmatmul.mubr.bf16.gmra.mrb[0].mxu0 %v665
  %v701 = vpop.f32.mrb[0].mxu0
  %v702 = vadd.f32 0.0, %v701
  %v703 = vpop.f32.mrb[0].mxu0
  %v704 = vpop.f32.mrb[0].mxu0
  %v705 = vadd.f32 0.0, %v704
  %v706 = vpop.f32.mrb[0].mxu0
  %707 = vmatprep.mubr.bf16.mxu0 0
  %708 = vmatmul.mubr.bf16.gmra.mrb[0].mxu0 %v665
  %v709 = vpop.f32.mrb[0].mxu0
  %v710 = vadd.f32 0.0, %v709
  %v711 = vpop.f32.mrb[0].mxu0
  %v712 = vpop.f32.mrb[0].mxu0
  %v713 = vpop.f32.mrb[0].mxu0
  %714 = vdwg.mxu0
  %v715 = vadd.f32 %v643, %v702
  %v716 = vadd.f32 %v644, %v705
  %v717 = vadd.f32 %v645, %v710
  %v718 = vxor.u32 %v715, 2147483648
  %v719 = vxor.u32 %v716, 2147483648
  %v720 = vxor.u32 %v717, 2147483648
  %v721 = vmul.f32 %v718, 1.442695
  %v722 = vpow.pop %v721
  %v723 = vmul.f32 %v719, 1.442695
  %v724 = vpow.pop %v723
  %v725 = vmul.f32 %v720, 1.442695
  %v726 = vpow.pop %v725
  %v727 = vadd.f32 %v722, 1.0
  %v728 = vadd.f32 %v724, 1.0
  %v729 = vadd.f32 %v726, 1.0
  %v730 = vrcp.pop %v727
  %v731 = vmul.f32 1.0, %v730
  %v732 = vrcp.pop %v728
  %v733 = vmul.f32 1.0, %v732
  %v734 = vrcp.pop %v729
  %v735 = vmul.f32 1.0, %v734
  %739 = vrot.lane.b32.xlu0 %v702, 96
  %v740 = vpop.permute.xlu0 %739
  %741 = vrot.lane.b32.xlu0 %v705, 96
  %v742 = vpop.permute.xlu0 %741
  %743 = vrot.lane.b32.xlu0 %v710, 96
  %v744 = vpop.permute.xlu0 %743
  %v748 = vadd.f32 %v646, %v740
  %v749 = vadd.f32 %v647, %v742
  %v750 = vadd.f32 %v648, %v744
  %v751 = vxor.u32 %v748, 2147483648
  %v752 = vxor.u32 %v749, 2147483648
  %v753 = vxor.u32 %v750, 2147483648
  %v754 = vmul.f32 %v751, 1.442695
  %v755 = vpow.pop %v754
  %v756 = vmul.f32 %v752, 1.442695
  %v757 = vpow.pop %v756
  %v758 = vmul.f32 %v753, 1.442695
  %v759 = vpow.pop %v758
  %v760 = vadd.f32 %v755, 1.0
  %v761 = vadd.f32 %v757, 1.0
  %v762 = vadd.f32 %v759, 1.0
  %v763 = vrcp.pop %v760
  %v764 = vmul.f32 1.0, %v763
  %v765 = vrcp.pop %v761
  %v766 = vmul.f32 1.0, %v765
  %v767 = vrcp.pop %v762
  %v768 = vmul.f32 1.0, %v767
  %769 = vrot.lane.b32.xlu0 %v642, 64
  %v770 = vpop.permute.xlu0 %769
  %v772 = vadd.f32 %v702, %v770
  %v773 = vadd.f32 %v705, %v770
  %v774 = vadd.f32 %v710, %v770
  %778 = vrot.lane.b32.xlu0 %v772, 64
  %v779 = vpop.permute.xlu0 %778
  %780 = vrot.lane.b32.xlu0 %v773, 64
  %v781 = vpop.permute.xlu0 %780
  %782 = vrot.lane.b32.xlu0 %v774, 64
  %v783 = vpop.permute.xlu0 %782
  %v787 = vmul.f32 %v731, %v779
  %v788 = vmul.f32 %v733, %v781
  %v789 = vmul.f32 %v735, %v783
  %v790 = vadd.f32 %v649, %v787
  %v791 = vadd.f32 %v650, %v788
  %v792 = vadd.f32 %v651, %v789
  %v793 = vtanh.pop %v790
  %v794 = vtanh.pop %v791
  %v795 = vtanh.pop %v792
  %v796 = vsub.f32 1.0, %v764
  %v797 = vsub.f32 1.0, %v766
  %v798 = vsub.f32 1.0, %v768
  %v799 = vmul.f32 %v796, %v793
  %v800 = vmul.f32 %v797, %v794
  %v801 = vmul.f32 %v798, %v795
  %v802 = vmul.f32 %v764, 0.0
  %v803 = vmul.f32 %v766, 0.0
  %v804 = vmul.f32 %v768, 0.0
  %v805 = vadd.f32 %v799, %v802
  %v806 = vadd.f32 %v800, %v803
  %v807 = vadd.f32 %v801, %v804
  %808 = vst.msk [vmem:[%s20] sm:$0xff] %vm360, %v805
  %809 = vst.msk [vmem:[%s20 + $0x8] sm:$0xff] %vm360, %v806
  %810 = vst.msk [vmem:[%s20 + $0x10] sm:$0xff] %vm360, %v807
  %v811 = vld [vmem:[#allocation2 + $0x18] sm:$0xff]
  %v812 = vld [vmem:[#allocation2 + $0x20] sm:$0xff]
  %v813 = vld [vmem:[#allocation2 + $0x28] sm:$0xff]
  %v814 = vld [vmem:[%s556 + $0x18] sm:$0xff]
  %v815 = vld [vmem:[%s556 + $0x20] sm:$0xff]
  %v816 = vld [vmem:[%s556 + $0x28] sm:$0xff]
  %v817 = vld [vmem:[%s617 + $0x18] sm:$0xff]
  %v818 = vld [vmem:[%s617 + $0x20] sm:$0xff]
  %v819 = vld [vmem:[%s617 + $0x28] sm:$0xff]
  %v820 = vpack.c.bf16 %v806, %v805
  %v821 = vpack.c.bf16 %v807, %v807
  %v823 = vsel %vm360, %v820, 0
  %v826 = vsel %vm360, %v821, 0
  %828 = vmatprep.subr.bf16.mxu0 0
  %829 = vmatpush1.bf16.msra.mxu0 %v660
  %830 = vmatprep.subr.bf16.mxu0 0
  %831 = vmatpush1.bf16.msra.mxu0 %v661
  %832 = vmatprep.subr.bf16.mxu0 0
  %833 = vmatpush1.bf16.msra.mxu0 0
  %834 = vmatprep.subr.bf16.mxu0 0
  %835 = vmatpush1.bf16.msra.mxu0 0
  %836 = vmatprep.subr.bf16.mxu0 0
  %837 = vmatpush1.bf16.msra.mxu0 0
  %838 = vmatprep.subr.bf16.mxu0 0
  %839 = vmatpush1.bf16.msra.mxu0 0
  %840 = vmatprep.subr.bf16.mxu0 0
  %841 = vmatpush1.bf16.msra.mxu0 0
  %842 = vmatprep.subr.bf16.mxu0 0
  %843 = vmatpush1.bf16.msra.mxu0 0
  %844 = vmatprep.subr.bf16.mxu0 0
  %845 = vmatpush1.bf16.msra.mxu0 0
  %846 = vmatprep.subr.bf16.mxu0 0
  %847 = vmatpush1.bf16.msra.mxu0 0
  %848 = vmatprep.subr.bf16.mxu0 0
  %849 = vmatpush1.bf16.msra.mxu0 0
  %850 = vmatprep.subr.bf16.mxu0 0
  %851 = vmatpush1.bf16.msra.mxu0 0
  %852 = vmatprep.subr.bf16.mxu0 0
  %853 = vmatpush1.bf16.msra.mxu0 0
  %854 = vmatprep.subr.bf16.mxu0 0
  %855 = vmatpush1.bf16.msra.mxu0 0
  %856 = vmatprep.subr.bf16.mxu0 0
  %857 = vmatpush1.bf16.msra.mxu0 0
  %858 = vmatprep.subr.bf16.mxu0 0
  %859 = vmatpush1.bf16.msra.mxu0 0
  %860 = vmatprep.mubr.bf16.mxu0 0
  %861 = vmatmul.mubr.bf16.gmra.mrb[0].mxu0 %v823
  %v862 = vpop.f32.mrb[0].mxu0
  %v863 = vadd.f32 0.0, %v862
  %v864 = vpop.f32.mrb[0].mxu0
  %v865 = vpop.f32.mrb[0].mxu0
  %v866 = vadd.f32 0.0, %v865
  %v867 = vpop.f32.mrb[0].mxu0
  %868 = vmatprep.mubr.bf16.mxu0 0
  %869 = vmatmul.mubr.bf16.gmra.mrb[0].mxu0 %v826
  %v870 = vpop.f32.mrb[0].mxu0
  %v871 = vadd.f32 0.0, %v870
  %v872 = vpop.f32.mrb[0].mxu0
  %v873 = vpop.f32.mrb[0].mxu0
  %v874 = vpop.f32.mrb[0].mxu0
  %875 = vdwg.mxu0
  %v876 = vadd.f32 %v811, %v863
  %v877 = vadd.f32 %v812, %v866
  %v878 = vadd.f32 %v813, %v871
  %v879 = vxor.u32 %v876, 2147483648
  %v880 = vxor.u32 %v877, 2147483648
  %v881 = vxor.u32 %v878, 2147483648
  %v882 = vmul.f32 %v879, 1.442695
  %v883 = vpow.pop %v882
  %v884 = vmul.f32 %v880, 1.442695
  %v885 = vpow.pop %v884
  %v886 = vmul.f32 %v881, 1.442695
  %v887 = vpow.pop %v886
  %v888 = vadd.f32 %v883, 1.0
  %v889 = vadd.f32 %v885, 1.0
  %v890 = vadd.f32 %v887, 1.0
  %v891 = vrcp.pop %v888
  %v892 = vmul.f32 1.0, %v891
  %v893 = vrcp.pop %v889
  %v894 = vmul.f32 1.0, %v893
  %v895 = vrcp.pop %v890
  %v896 = vmul.f32 1.0, %v895
  %900 = vrot.lane.b32.xlu0 %v863, 96
  %v901 = vpop.permute.xlu0 %900
  %902 = vrot.lane.b32.xlu0 %v866, 96
  %v903 = vpop.permute.xlu0 %902
  %904 = vrot.lane.b32.xlu0 %v871, 96
  %v905 = vpop.permute.xlu0 %904
  %v909 = vadd.f32 %v814, %v901
  %v910 = vadd.f32 %v815, %v903
  %v911 = vadd.f32 %v816, %v905
  %v912 = vxor.u32 %v909, 2147483648
  %v913 = vxor.u32 %v910, 2147483648
  %v914 = vxor.u32 %v911, 2147483648
  %v915 = vmul.f32 %v912, 1.442695
  %v916 = vpow.pop %v915
  %v917 = vmul.f32 %v913, 1.442695
  %v918 = vpow.pop %v917
  %v919 = vmul.f32 %v914, 1.442695
  %v920 = vpow.pop %v919
  %v921 = vadd.f32 %v916, 1.0
  %v922 = vadd.f32 %v918, 1.0
  %v923 = vadd.f32 %v920, 1.0
  %v924 = vrcp.pop %v921
  %v925 = vmul.f32 1.0, %v924
  %v926 = vrcp.pop %v922
  %v927 = vmul.f32 1.0, %v926
  %v928 = vrcp.pop %v923
  %v929 = vmul.f32 1.0, %v928
  %v930 = vadd.f32 %v863, %v770
  %v931 = vadd.f32 %v866, %v770
  %v932 = vadd.f32 %v871, %v770
  %936 = vrot.lane.b32.xlu0 %v930, 64
  %v937 = vpop.permute.xlu0 %936
  %938 = vrot.lane.b32.xlu0 %v931, 64
  %v939 = vpop.permute.xlu0 %938
  %940 = vrot.lane.b32.xlu0 %v932, 64
  %v941 = vpop.permute.xlu0 %940
  %v945 = vmul.f32 %v892, %v937
  %v946 = vmul.f32 %v894, %v939
  %v947 = vmul.f32 %v896, %v941
  %v948 = vadd.f32 %v817, %v945
  %v949 = vadd.f32 %v818, %v946
  %v950 = vadd.f32 %v819, %v947
  %v951 = vtanh.pop %v948
  %v952 = vtanh.pop %v949
  %v953 = vtanh.pop %v950
  %v954 = vsub.f32 1.0, %v925
  %v955 = vsub.f32 1.0, %v927
  %v956 = vsub.f32 1.0, %v929
  %v957 = vmul.f32 %v954, %v951
  %v958 = vmul.f32 %v955, %v952
  %v959 = vmul.f32 %v956, %v953
  %v960 = vmul.f32 %v925, %v805
  %v961 = vmul.f32 %v927, %v806
  %v962 = vmul.f32 %v929, %v807
  %v963 = vadd.f32 %v957, %v960
  %v964 = vadd.f32 %v958, %v961
  %v965 = vadd.f32 %v959, %v962
  %966 = vst.msk [vmem:[%s20 + $0x18] sm:$0xff] %vm360, %v963
  %967 = vst.msk [vmem:[%s20 + $0x20] sm:$0xff] %vm360, %v964
  %968 = vst.msk [vmem:[%s20 + $0x28] sm:$0xff] %vm360, %v965
  %v969 = vld [vmem:[#allocation2 + $0x30] sm:$0xff]
  %v970 = vld [vmem:[#allocation2 + $0x38] sm:$0xff]
  %v971 = vld [vmem:[#allocation2 + $0x40] sm:$0xff]
  %v972 = vld [vmem:[%s556 + $0x30] sm:$0xff]
  %v973 = vld [vmem:[%s556 + $0x38] sm:$0xff]
  %v974 = vld [vmem:[%s556 + $0x40] sm:$0xff]
  %v975 = vld [vmem:[%s617 + $0x30] sm:$0xff]
  %v976 = vld [vmem:[%s617 + $0x38] sm:$0xff]
  %v977 = vld [vmem:[%s617 + $0x40] sm:$0xff]
  %v978 = vpack.c.bf16 %v964, %v963
  %v979 = vpack.c.bf16 %v965, %v965
  %v981 = vsel %vm360, %v978, 0
  %v984 = vsel %vm360, %v979, 0
  %986 = vmatprep.subr.bf16.mxu0 0
  %987 = vmatpush1.bf16.msra.mxu0 %v660
  %988 = vmatprep.subr.bf16.mxu0 0
  %989 = vmatpush1.bf16.msra.mxu0 %v661
  %990 = vmatprep.subr.bf16.mxu0 0
  %991 = vmatpush1.bf16.msra.mxu0 0
  %992 = vmatprep.subr.bf16.mxu0 0
  %993 = vmatpush1.bf16.msra.mxu0 0
  %994 = vmatprep.subr.bf16.mxu0 0
  %995 = vmatpush1.bf16.msra.mxu0 0
  %996 = vmatprep.subr.bf16.mxu0 0
  %997 = vmatpush1.bf16.msra.mxu0 0
  %998 = vmatprep.subr.bf16.mxu0 0
  %999 = vmatpush1.bf16.msra.mxu0 0
  %1000 = vmatprep.subr.bf16.mxu0 0
  %1001 = vmatpush1.bf16.msra.mxu0 0
  %1002 = vmatprep.subr.bf16.mxu0 0
  %1003 = vmatpush1.bf16.msra.mxu0 0
  %1004 = vmatprep.subr.bf16.mxu0 0
  %1005 = vmatpush1.bf16.msra.mxu0 0
  %1006 = vmatprep.subr.bf16.mxu0 0
  %1007 = vmatpush1.bf16.msra.mxu0 0
  %1008 = vmatprep.subr.bf16.mxu0 0
  %1009 = vmatpush1.bf16.msra.mxu0 0
  %1010 = vmatprep.subr.bf16.mxu0 0
  %1011 = vmatpush1.bf16.msra.mxu0 0
  %1012 = vmatprep.subr.bf16.mxu0 0
  %1013 = vmatpush1.bf16.msra.mxu0 0
  %1014 = vmatprep.subr.bf16.mxu0 0
  %1015 = vmatpush1.bf16.msra.mxu0 0
  %1016 = vmatprep.subr.bf16.mxu0 0
  %1017 = vmatpush1.bf16.msra.mxu0 0
  %1018 = vmatprep.mubr.bf16.mxu0 0
  %1019 = vmatmul.mubr.bf16.gmra.mrb[0].mxu0 %v981
  %v1020 = vpop.f32.mrb[0].mxu0
  %v1021 = vadd.f32 0.0, %v1020
  %v1022 = vpop.f32.mrb[0].mxu0
  %v1023 = vpop.f32.mrb[0].mxu0
  %v1024 = vadd.f32 0.0, %v1023
  %v1025 = vpop.f32.mrb[0].mxu0
  %1026 = vmatprep.mubr.bf16.mxu0 0
  %1027 = vmatmul.mubr.bf16.gmra.mrb[0].mxu0 %v984
  %v1028 = vpop.f32.mrb[0].mxu0
  %v1029 = vadd.f32 0.0, %v1028
  %v1030 = vpop.f32.mrb[0].mxu0
  %v1031 = vpop.f32.mrb[0].mxu0
  %v1032 = vpop.f32.mrb[0].mxu0
  %1033 = vdwg.mxu0
  %v1034 = vadd.f32 %v969, %v1021
  %v1035 = vadd.f32 %v970, %v1024
  %v1036 = vadd.f32 %v971, %v1029
  %v1037 = vxor.u32 %v1034, 2147483648
  %v1038 = vxor.u32 %v1035, 2147483648
  %v1039 = vxor.u32 %v1036, 2147483648
  %v1040 = vmul.f32 %v1037, 1.442695
  %v1041 = vpow.pop %v1040
  %v1042 = vmul.f32 %v1038, 1.442695
  %v1043 = vpow.pop %v1042
  %v1044 = vmul.f32 %v1039, 1.442695
  %v1045 = vpow.pop %v1044
  %v1046 = vadd.f32 %v1041, 1.0
  %v1047 = vadd.f32 %v1043, 1.0
  %v1048 = vadd.f32 %v1045, 1.0
  %v1049 = vrcp.pop %v1046
  %v1050 = vmul.f32 1.0, %v1049
  %v1051 = vrcp.pop %v1047
  %v1052 = vmul.f32 1.0, %v1051
  %v1053 = vrcp.pop %v1048
  %v1054 = vmul.f32 1.0, %v1053
  %1058 = vrot.lane.b32.xlu0 %v1021, 96
  %v1059 = vpop.permute.xlu0 %1058
  %1060 = vrot.lane.b32.xlu0 %v1024, 96
  %v1061 = vpop.permute.xlu0 %1060
  %1062 = vrot.lane.b32.xlu0 %v1029, 96
  %v1063 = vpop.permute.xlu0 %1062
  %v1067 = vadd.f32 %v972, %v1059
  %v1068 = vadd.f32 %v973, %v1061
  %v1069 = vadd.f32 %v974, %v1063
  %v1070 = vxor.u32 %v1067, 2147483648
  %v1071 = vxor.u32 %v1068, 2147483648
  %v1072 = vxor.u32 %v1069, 2147483648
  %v1073 = vmul.f32 %v1070, 1.442695
  %v1074 = vpow.pop %v1073
  %v1075 = vmul.f32 %v1071, 1.442695
  %v1076 = vpow.pop %v1075
  %v1077 = vmul.f32 %v1072, 1.442695
  %v1078 = vpow.pop %v1077
  %v1079 = vadd.f32 %v1074, 1.0
  %v1080 = vadd.f32 %v1076, 1.0
  %v1081 = vadd.f32 %v1078, 1.0
  %v1082 = vrcp.pop %v1079
  %v1083 = vmul.f32 1.0, %v1082
  %v1084 = vrcp.pop %v1080
  %v1085 = vmul.f32 1.0, %v1084
  %v1086 = vrcp.pop %v1081
  %v1087 = vmul.f32 1.0, %v1086
  %v1088 = vadd.f32 %v1021, %v770
  %v1089 = vadd.f32 %v1024, %v770
  %v1090 = vadd.f32 %v1029, %v770
  %1094 = vrot.lane.b32.xlu0 %v1088, 64
  %v1095 = vpop.permute.xlu0 %1094
  %1096 = vrot.lane.b32.xlu0 %v1089, 64
  %v1097 = vpop.permute.xlu0 %1096
  %1098 = vrot.lane.b32.xlu0 %v1090, 64
  %v1099 = vpop.permute.xlu0 %1098
  %v1103 = vmul.f32 %v1050, %v1095
  %v1104 = vmul.f32 %v1052, %v1097
  %v1105 = vmul.f32 %v1054, %v1099
  %v1106 = vadd.f32 %v975, %v1103
  %v1107 = vadd.f32 %v976, %v1104
  %v1108 = vadd.f32 %v977, %v1105
  %v1109 = vtanh.pop %v1106
  %v1110 = vtanh.pop %v1107
  %v1111 = vtanh.pop %v1108
  %v1112 = vsub.f32 1.0, %v1083
  %v1113 = vsub.f32 1.0, %v1085
  %v1114 = vsub.f32 1.0, %v1087
  %v1115 = vmul.f32 %v1112, %v1109
  %v1116 = vmul.f32 %v1113, %v1110
  %v1117 = vmul.f32 %v1114, %v1111
  %v1118 = vmul.f32 %v1083, %v963
  %v1119 = vmul.f32 %v1085, %v964
  %v1120 = vmul.f32 %v1087, %v965
  %v1121 = vadd.f32 %v1115, %v1118
  %v1122 = vadd.f32 %v1116, %v1119
  %v1123 = vadd.f32 %v1117, %v1120
  %1124 = vst.msk [vmem:[%s20 + $0x30] sm:$0xff] %vm360, %v1121
  %1125 = vst.msk [vmem:[%s20 + $0x38] sm:$0xff] %vm360, %v1122
  %1126 = vst.msk [vmem:[%s20 + $0x40] sm:$0xff] %vm360, %v1123
  %v1127 = vld [vmem:[#allocation2 + $0x48] sm:$0xff]
  %v1128 = vld [vmem:[#allocation2 + $0x50] sm:$0xff]
  %v1129 = vld [vmem:[#allocation2 + $0x58] sm:$0xff]
  %v1130 = vld [vmem:[%s556 + $0x48] sm:$0xff]
  %v1131 = vld [vmem:[%s556 + $0x50] sm:$0xff]
  %v1132 = vld [vmem:[%s556 + $0x58] sm:$0xff]
  %v1133 = vld [vmem:[%s617 + $0x48] sm:$0xff]
  %v1134 = vld [vmem:[%s617 + $0x50] sm:$0xff]
  %v1135 = vld [vmem:[%s617 + $0x58] sm:$0xff]
  %v1136 = vpack.c.bf16 %v1122, %v1121
  %v1137 = vpack.c.bf16 %v1123, %v1123
  %v1139 = vsel %vm360, %v1136, 0
  %v1142 = vsel %vm360, %v1137, 0
  %1144 = vmatprep.subr.bf16.mxu0 0
  %1145 = vmatpush1.bf16.msra.mxu0 %v660
  %1146 = vmatprep.subr.bf16.mxu0 0
  %1147 = vmatpush1.bf16.msra.mxu0 %v661
  %1148 = vmatprep.subr.bf16.mxu0 0
  %1149 = vmatpush1.bf16.msra.mxu0 0
  %1150 = vmatprep.subr.bf16.mxu0 0
  %1151 = vmatpush1.bf16.msra.mxu0 0
  %1152 = vmatprep.subr.bf16.mxu0 0
  %1153 = vmatpush1.bf16.msra.mxu0 0
  %1154 = vmatprep.subr.bf16.mxu0 0
  %1155 = vmatpush1.bf16.msra.mxu0 0
  %1156 = vmatprep.subr.bf16.mxu0 0
  %1157 = vmatpush1.bf16.msra.mxu0 0
  %1158 = vmatprep.subr.bf16.mxu0 0
  %1159 = vmatpush1.bf16.msra.mxu0 0
  %1160 = vmatprep.subr.bf16.mxu0 0
  %1161 = vmatpush1.bf16.msra.mxu0 0
  %1162 = vmatprep.subr.bf16.mxu0 0
  %1163 = vmatpush1.bf16.msra.mxu0 0
  %1164 = vmatprep.subr.bf16.mxu0 0
  %1165 = vmatpush1.bf16.msra.mxu0 0
  %1166 = vmatprep.subr.bf16.mxu0 0
  %1167 = vmatpush1.bf16.msra.mxu0 0
  %1168 = vmatprep.subr.bf16.mxu0 0
  %1169 = vmatpush1.bf16.msra.mxu0 0
  %1170 = vmatprep.subr.bf16.mxu0 0
  %1171 = vmatpush1.bf16.msra.mxu0 0
  %1172 = vmatprep.subr.bf16.mxu0 0
  %1173 = vmatpush1.bf16.msra.mxu0 0
  %1174 = vmatprep.subr.bf16.mxu0 0
  %1175 = vmatpush1.bf16.msra.mxu0 0
  %1176 = vmatprep.mubr.bf16.mxu0 0
  %1177 = vmatmul.mubr.bf16.gmra.mrb[0].mxu0 %v1139
  %v1178 = vpop.f32.mrb[0].mxu0
  %v1179 = vadd.f32 0.0, %v1178
  %v1180 = vpop.f32.mrb[0].mxu0
  %v1181 = vpop.f32.mrb[0].mxu0
  %v1182 = vadd.f32 0.0, %v1181
  %v1183 = vpop.f32.mrb[0].mxu0
  %1184 = vmatprep.mubr.bf16.mxu0 0
  %1185 = vmatmul.mubr.bf16.gmra.mrb[0].mxu0 %v1142
  %v1186 = vpop.f32.mrb[0].mxu0
  %v1187 = vadd.f32 0.0, %v1186
  %v1188 = vpop.f32.mrb[0].mxu0
  %v1189 = vpop.f32.mrb[0].mxu0
  %v1190 = vpop.f32.mrb[0].mxu0
  %1191 = vdwg.mxu0
  %v1192 = vadd.f32 %v1127, %v1179
  %v1193 = vadd.f32 %v1128, %v1182
  %v1194 = vadd.f32 %v1129, %v1187
  %v1195 = vxor.u32 %v1192, 2147483648
  %v1196 = vxor.u32 %v1193, 2147483648
  %v1197 = vxor.u32 %v1194, 2147483648
  %v1198 = vmul.f32 %v1195, 1.442695
  %v1199 = vpow.pop %v1198
  %v1200 = vmul.f32 %v1196, 1.442695
  %v1201 = vpow.pop %v1200
  %v1202 = vmul.f32 %v1197, 1.442695
  %v1203 = vpow.pop %v1202
  %v1204 = vadd.f32 %v1199, 1.0
  %v1205 = vadd.f32 %v1201, 1.0
  %v1206 = vadd.f32 %v1203, 1.0
  %v1207 = vrcp.pop %v1204
  %v1208 = vmul.f32 1.0, %v1207
  %v1209 = vrcp.pop %v1205
  %v1210 = vmul.f32 1.0, %v1209
  %v1211 = vrcp.pop %v1206
  %v1212 = vmul.f32 1.0, %v1211
  %1216 = vrot.lane.b32.xlu0 %v1179, 96
  %v1217 = vpop.permute.xlu0 %1216
  %1218 = vrot.lane.b32.xlu0 %v1182, 96
  %v1219 = vpop.permute.xlu0 %1218
  %1220 = vrot.lane.b32.xlu0 %v1187, 96
  %v1221 = vpop.permute.xlu0 %1220
  %v1225 = vadd.f32 %v1130, %v1217
  %v1226 = vadd.f32 %v1131, %v1219
  %v1227 = vadd.f32 %v1132, %v1221
  %v1228 = vxor.u32 %v1225, 2147483648
  %v1229 = vxor.u32 %v1226, 2147483648
  %v1230 = vxor.u32 %v1227, 2147483648
  %v1231 = vmul.f32 %v1228, 1.442695
  %v1232 = vpow.pop %v1231
  %v1233 = vmul.f32 %v1229, 1.442695
  %v1234 = vpow.pop %v1233
  %v1235 = vmul.f32 %v1230, 1.442695
  %v1236 = vpow.pop %v1235
  %v1237 = vadd.f32 %v1232, 1.0
  %v1238 = vadd.f32 %v1234, 1.0
  %v1239 = vadd.f32 %v1236, 1.0
  %v1240 = vrcp.pop %v1237
  %v1241 = vmul.f32 1.0, %v1240
  %v1242 = vrcp.pop %v1238
  %v1243 = vmul.f32 1.0, %v1242
  %v1244 = vrcp.pop %v1239
  %v1245 = vmul.f32 1.0, %v1244
  %v1246 = vadd.f32 %v1179, %v770
  %v1247 = vadd.f32 %v1182, %v770
  %v1248 = vadd.f32 %v1187, %v770
  %1252 = vrot.lane.b32.xlu0 %v1246, 64
  %v1253 = vpop.permute.xlu0 %1252
  %1254 = vrot.lane.b32.xlu0 %v1247, 64
  %v1255 = vpop.permute.xlu0 %1254
  %1256 = vrot.lane.b32.xlu0 %v1248, 64
  %v1257 = vpop.permute.xlu0 %1256
  %v1261 = vmul.f32 %v1208, %v1253
  %v1262 = vmul.f32 %v1210, %v1255
  %v1263 = vmul.f32 %v1212, %v1257
  %v1264 = vadd.f32 %v1133, %v1261
  %v1265 = vadd.f32 %v1134, %v1262
  %v1266 = vadd.f32 %v1135, %v1263
  %v1267 = vtanh.pop %v1264
  %v1268 = vtanh.pop %v1265
  %v1269 = vtanh.pop %v1266
  %v1270 = vsub.f32 1.0, %v1241
  %v1271 = vsub.f32 1.0, %v1243
  %v1272 = vsub.f32 1.0, %v1245
  %v1273 = vmul.f32 %v1270, %v1267
  %v1274 = vmul.f32 %v1271, %v1268
  %v1275 = vmul.f32 %v1272, %v1269
  %v1276 = vmul.f32 %v1241, %v1121
  %v1277 = vmul.f32 %v1243, %v1122
  %v1278 = vmul.f32 %v1245, %v1123
  %v1279 = vadd.f32 %v1273, %v1276
  %v1280 = vadd.f32 %v1274, %v1277
  %v1281 = vadd.f32 %v1275, %v1278
  %1282 = vst.msk [vmem:[%s20 + $0x48] sm:$0xff] %vm360, %v1279
  %1283 = vst.msk [vmem:[%s20 + $0x50] sm:$0xff] %vm360, %v1280
  %1284 = vst.msk [vmem:[%s20 + $0x58] sm:$0xff] %vm360, %v1281
  %v1285 = vld [vmem:[#allocation2 + $0x60] sm:$0xff]
  %v1286 = vld [vmem:[#allocation2 + $0x68] sm:$0xff]
  %v1287 = vld [vmem:[#allocation2 + $0x70] sm:$0xff]
  %v1288 = vld [vmem:[%s556 + $0x60] sm:$0xff]
  %v1289 = vld [vmem:[%s556 + $0x68] sm:$0xff]
  %v1290 = vld [vmem:[%s556 + $0x70] sm:$0xff]
  %v1291 = vld [vmem:[%s617 + $0x60] sm:$0xff]
  %v1292 = vld [vmem:[%s617 + $0x68] sm:$0xff]
  %v1293 = vld [vmem:[%s617 + $0x70] sm:$0xff]
  %v1294 = vpack.c.bf16 %v1280, %v1279
  %v1295 = vpack.c.bf16 %v1281, %v1281
  %v1297 = vsel %vm360, %v1294, 0
  %v1300 = vsel %vm360, %v1295, 0
  %1302 = vmatprep.subr.bf16.mxu0 0
  %1303 = vmatpush1.bf16.msra.mxu0 %v660
  %1304 = vmatprep.subr.bf16.mxu0 0
  %1305 = vmatpush1.bf16.msra.mxu0 %v661
  %1306 = vmatprep.subr.bf16.mxu0 0
  %1307 = vmatpush1.bf16.msra.mxu0 0
  %1308 = vmatprep.subr.bf16.mxu0 0
  %1309 = vmatpush1.bf16.msra.mxu0 0
  %1310 = vmatprep.subr.bf16.mxu0 0
  %1311 = vmatpush1.bf16.msra.mxu0 0
  %1312 = vmatprep.subr.bf16.mxu0 0
  %1313 = vmatpush1.bf16.msra.mxu0 0
  %1314 = vmatprep.subr.bf16.mxu0 0
  %1315 = vmatpush1.bf16.msra.mxu0 0
  %1316 = vmatprep.subr.bf16.mxu0 0
  %1317 = vmatpush1.bf16.msra.mxu0 0
  %1318 = vmatprep.subr.bf16.mxu0 0
  %1319 = vmatpush1.bf16.msra.mxu0 0
  %1320 = vmatprep.subr.bf16.mxu0 0
  %1321 = vmatpush1.bf16.msra.mxu0 0
  %1322 = vmatprep.subr.bf16.mxu0 0
  %1323 = vmatpush1.bf16.msra.mxu0 0
  %1324 = vmatprep.subr.bf16.mxu0 0
  %1325 = vmatpush1.bf16.msra.mxu0 0
  %1326 = vmatprep.subr.bf16.mxu0 0
  %1327 = vmatpush1.bf16.msra.mxu0 0
  %1328 = vmatprep.subr.bf16.mxu0 0
  %1329 = vmatpush1.bf16.msra.mxu0 0
  %1330 = vmatprep.subr.bf16.mxu0 0
  %1331 = vmatpush1.bf16.msra.mxu0 0
  %1332 = vmatprep.subr.bf16.mxu0 0
  %1333 = vmatpush1.bf16.msra.mxu0 0
  %1334 = vmatprep.mubr.bf16.mxu0 0
  %1335 = vmatmul.mubr.bf16.gmra.mrb[0].mxu0 %v1297
  %v1336 = vpop.f32.mrb[0].mxu0
  %v1337 = vadd.f32 0.0, %v1336
  %v1338 = vpop.f32.mrb[0].mxu0
  %v1339 = vpop.f32.mrb[0].mxu0
  %v1340 = vadd.f32 0.0, %v1339
  %v1341 = vpop.f32.mrb[0].mxu0
  %1342 = vmatprep.mubr.bf16.mxu0 0
  %1343 = vmatmul.mubr.bf16.gmra.mrb[0].mxu0 %v1300
  %v1344 = vpop.f32.mrb[0].mxu0
  %v1345 = vadd.f32 0.0, %v1344
  %v1346 = vpop.f32.mrb[0].mxu0
  %v1347 = vpop.f32.mrb[0].mxu0
  %v1348 = vpop.f32.mrb[0].mxu0
  %1349 = vdwg.mxu0
  %v1350 = vadd.f32 %v1285, %v1337
  %v1351 = vadd.f32 %v1286, %v1340
  %v1352 = vadd.f32 %v1287, %v1345
  %v1353 = vxor.u32 %v1350, 2147483648
  %v1354 = vxor.u32 %v1351, 2147483648
  %v1355 = vxor.u32 %v1352, 2147483648
  %v1356 = vmul.f32 %v1353, 1.442695
  %v1357 = vpow.pop %v1356
  %v1358 = vmul.f32 %v1354, 1.442695
  %v1359 = vpow.pop %v1358
  %v1360 = vmul.f32 %v1355, 1.442695
  %v1361 = vpow.pop %v1360
  %v1362 = vadd.f32 %v1357, 1.0
  %v1363 = vadd.f32 %v1359, 1.0
  %v1364 = vadd.f32 %v1361, 1.0
  %v1365 = vrcp.pop %v1362
  %v1366 = vmul.f32 1.0, %v1365
  %v1367 = vrcp.pop %v1363
  %v1368 = vmul.f32 1.0, %v1367
  %v1369 = vrcp.pop %v1364
  %v1370 = vmul.f32 1.0, %v1369
  %1374 = vrot.lane.b32.xlu0 %v1337, 96
  %v1375 = vpop.permute.xlu0 %1374
  %1376 = vrot.lane.b32.xlu0 %v1340, 96
  %v1377 = vpop.permute.xlu0 %1376
  %1378 = vrot.lane.b32.xlu0 %v1345, 96
  %v1379 = vpop.permute.xlu0 %1378
  %v1383 = vadd.f32 %v1288, %v1375
  %v1384 = vadd.f32 %v1289, %v1377
  %v1385 = vadd.f32 %v1290, %v1379
  %v1386 = vxor.u32 %v1383, 2147483648
  %v1387 = vxor.u32 %v1384, 2147483648
  %v1388 = vxor.u32 %v1385, 2147483648
  %v1389 = vmul.f32 %v1386, 1.442695
  %v1390 = vpow.pop %v1389
  %v1391 = vmul.f32 %v1387, 1.442695
  %v1392 = vpow.pop %v1391
  %v1393 = vmul.f32 %v1388, 1.442695
  %v1394 = vpow.pop %v1393
  %v1395 = vadd.f32 %v1390, 1.0
  %v1396 = vadd.f32 %v1392, 1.0
  %v1397 = vadd.f32 %v1394, 1.0
  %v1398 = vrcp.pop %v1395
  %v1399 = vmul.f32 1.0, %v1398
  %v1400 = vrcp.pop %v1396
  %v1401 = vmul.f32 1.0, %v1400
  %v1402 = vrcp.pop %v1397
  %v1403 = vmul.f32 1.0, %v1402
  %v1404 = vadd.f32 %v1337, %v770
  %v1405 = vadd.f32 %v1340, %v770
  %v1406 = vadd.f32 %v1345, %v770
  %1410 = vrot.lane.b32.xlu0 %v1404, 64
  %v1411 = vpop.permute.xlu0 %1410
  %1412 = vrot.lane.b32.xlu0 %v1405, 64
  %v1413 = vpop.permute.xlu0 %1412
  %1414 = vrot.lane.b32.xlu0 %v1406, 64
  %v1415 = vpop.permute.xlu0 %1414
  %v1419 = vmul.f32 %v1366, %v1411
  %v1420 = vmul.f32 %v1368, %v1413
  %v1421 = vmul.f32 %v1370, %v1415
  %v1422 = vadd.f32 %v1291, %v1419
  %v1423 = vadd.f32 %v1292, %v1420
  %v1424 = vadd.f32 %v1293, %v1421
  %v1425 = vtanh.pop %v1422
  %v1426 = vtanh.pop %v1423
  %v1427 = vtanh.pop %v1424
  %v1428 = vsub.f32 1.0, %v1399
  %v1429 = vsub.f32 1.0, %v1401
  %v1430 = vsub.f32 1.0, %v1403
  %v1431 = vmul.f32 %v1428, %v1425
  %v1432 = vmul.f32 %v1429, %v1426
  %v1433 = vmul.f32 %v1430, %v1427
  %v1434 = vmul.f32 %v1399, %v1279
  %v1435 = vmul.f32 %v1401, %v1280
  %v1436 = vmul.f32 %v1403, %v1281
  %v1437 = vadd.f32 %v1431, %v1434
  %v1438 = vadd.f32 %v1432, %v1435
  %v1439 = vadd.f32 %v1433, %v1436
  %1440 = vst.msk [vmem:[%s20 + $0x60] sm:$0xff] %vm360, %v1437
  %1441 = vst.msk [vmem:[%s20 + $0x68] sm:$0xff] %vm360, %v1438
  %1442 = vst.msk [vmem:[%s20 + $0x70] sm:$0xff] %vm360, %v1439
  %v1443 = vld [vmem:[%s20] sm:$0xff]
  %v1444 = vld [vmem:[%s20 + $0x8] sm:$0xff]
  %v1445 = vld [vmem:[%s20 + $0x10] sm:$0xff]
  %v1446 = vld [vmem:[%s20 + $0x18] sm:$0xff]
  %v1447 = vld [vmem:[%s20 + $0x20] sm:$0xff]
  %v1448 = vld [vmem:[%s20 + $0x28] sm:$0xff]
  %v1449 = vld [vmem:[%s20 + $0x30] sm:$0xff]
  %v1450 = vld [vmem:[%s20 + $0x38] sm:$0xff]
  %v1451 = vld [vmem:[%s20 + $0x40] sm:$0xff]
  %v1452 = vld [vmem:[%s20 + $0x48] sm:$0xff]
  %v1453 = vld [vmem:[%s20 + $0x50] sm:$0xff]
  %v1454 = vld [vmem:[%s20 + $0x58] sm:$0xff]
  %v1455 = vld [vmem:[%s20 + $0x60] sm:$0xff]
  %v1456 = vld [vmem:[%s20 + $0x68] sm:$0xff]
  %v1457 = vld [vmem:[%s20 + $0x70] sm:$0xff]
  %v1458 = vpack.c.bf16 %v1444, %v1443
  %v1459 = vpack.c.bf16 %v1446, %v1445
  %v1460 = vpack.c.bf16 %v1448, %v1447
  %v1461 = vpack.c.bf16 %v1450, %v1449
  %v1462 = vpack.c.bf16 %v1452, %v1451
  %v1463 = vpack.c.bf16 %v1454, %v1453
  %v1464 = vpack.c.bf16 %v1456, %v1455
  %v1465 = vpack.c.bf16 %v1457, %v1457
  %v1466 = vld [vmem:[%s7] sm:$0xf]
  %v1467 = vld [vmem:[%s7 + $0x4] sm:$0xf]
  %v1468 = vld [vmem:[%s7 + $0x8] sm:$0xf]
  %v1469 = vld [vmem:[%s7 + $0xc] sm:$0xf]
  %v1470 = vld [vmem:[%s9] sm:$0x1]
  %v1472 = vlaneseq
  %v1473 = vshrl.u32 %v1472, 7
  %v1474 = vsub.s32 0, %v1473
  %v1475 = vrot.slane %v1470, %v1474
  %v1481 = vunpack.c.l.b16 %v1466
  %v1482 = vunpack.c.l.b16 %v1467
  %v1483 = vunpack.c.l.b16 %v1468
  %v1484 = vunpack.c.l.b16 %v1469
  %v1485 = vpack.c.b16 %v1482, %v1481
  %v1486 = vpack.c.b16 %v1484, %v1483
  %v1490 = vsel %vm360, %v1458, 0
  %v1493 = vsel %vm360, %v1459, 0
  %v1496 = vsel %vm360, %v1460, 0
  %v1499 = vsel %vm360, %v1461, 0
  %v1502 = vsel %vm360, %v1462, 0
  %v1505 = vsel %vm360, %v1463, 0
  %v1508 = vsel %vm360, %v1464, 0
  %v1511 = vsel %vm360, %v1465, 0
  %1513 = vmatprep.subr.bf16.mxu0 0
  %1514 = vmatpush1.bf16.msra.mxu0 %v1485
  %1515 = vmatprep.subr.bf16.mxu0 0
  %1516 = vmatpush1.bf16.msra.mxu0 %v1486
  %1517 = vmatprep.subr.bf16.mxu0 0
  %1518 = vmatpush1.bf16.msra.mxu0 0
  %1519 = vmatprep.subr.bf16.mxu0 0
  %1520 = vmatpush1.bf16.msra.mxu0 0
  %1521 = vmatprep.subr.bf16.mxu0 0
  %1522 = vmatpush1.bf16.msra.mxu0 0
  %1523 = vmatprep.subr.bf16.mxu0 0
  %1524 = vmatpush1.bf16.msra.mxu0 0
  %1525 = vmatprep.subr.bf16.mxu0 0
  %1526 = vmatpush1.bf16.msra.mxu0 0
  %1527 = vmatprep.subr.bf16.mxu0 0
  %1528 = vmatpush1.bf16.msra.mxu0 0
  %1529 = vmatprep.subr.bf16.mxu0 0
  %1530 = vmatpush1.bf16.msra.mxu0 0
  %1531 = vmatprep.subr.bf16.mxu0 0
  %1532 = vmatpush1.bf16.msra.mxu0 0
  %1533 = vmatprep.subr.bf16.mxu0 0
  %1534 = vmatpush1.bf16.msra.mxu0 0
  %1535 = vmatprep.subr.bf16.mxu0 0
  %1536 = vmatpush1.bf16.msra.mxu0 0
  %1537 = vmatprep.subr.bf16.mxu0 0
  %1538 = vmatpush1.bf16.msra.mxu0 0
  %1539 = vmatprep.subr.bf16.mxu0 0
  %1540 = vmatpush1.bf16.msra.mxu0 0
  %1541 = vmatprep.subr.bf16.mxu0 0
  %1542 = vmatpush1.bf16.msra.mxu0 0
  %1543 = vmatprep.subr.bf16.mxu0 0
  %1544 = vmatpush1.bf16.msra.mxu0 0
  %1545 = vmatprep.mubr.bf16.mxu0 0
  %1546 = vmatmul.mubr.bf16.gmra.mrb[0].mxu0 %v1490
  %v1547 = vpop.f32.mrb[0].mxu0
  %v1548 = vadd.f32 %v1475, %v1547
  %v1549 = vpop.f32.mrb[0].mxu0
  %v1550 = vpop.f32.mrb[0].mxu0
  %v1551 = vadd.f32 %v1475, %v1550
  %v1552 = vpop.f32.mrb[0].mxu0
  %1553 = vmatprep.mubr.bf16.mxu0 0
  %1554 = vmatmul.mubr.bf16.gmra.mrb[0].mxu0 %v1493
  %v1555 = vpop.f32.mrb[0].mxu0
  %v1556 = vadd.f32 %v1475, %v1555
  %v1557 = vpop.f32.mrb[0].mxu0
  %v1558 = vpop.f32.mrb[0].mxu0
  %v1559 = vadd.f32 %v1475, %v1558
  %v1560 = vpop.f32.mrb[0].mxu0
  %1561 = vmatprep.mubr.bf16.mxu0 0
  %1562 = vmatmul.mubr.bf16.gmra.mrb[0].mxu0 %v1496
  %v1563 = vpop.f32.mrb[0].mxu0
  %v1564 = vadd.f32 %v1475, %v1563
  %v1565 = vpop.f32.mrb[0].mxu0
  %v1566 = vpop.f32.mrb[0].mxu0
  %v1567 = vadd.f32 %v1475, %v1566
  %v1568 = vpop.f32.mrb[0].mxu0
  %1569 = vmatprep.mubr.bf16.mxu0 0
  %1570 = vmatmul.mubr.bf16.gmra.mrb[0].mxu0 %v1499
  %v1571 = vpop.f32.mrb[0].mxu0
  %v1572 = vadd.f32 %v1475, %v1571
  %v1573 = vpop.f32.mrb[0].mxu0
  %v1574 = vpop.f32.mrb[0].mxu0
  %v1575 = vadd.f32 %v1475, %v1574
  %v1576 = vpop.f32.mrb[0].mxu0
  %1577 = vmatprep.mubr.bf16.mxu0 0
  %1578 = vmatmul.mubr.bf16.gmra.mrb[0].mxu0 %v1502
  %v1579 = vpop.f32.mrb[0].mxu0
  %v1580 = vadd.f32 %v1475, %v1579
  %v1581 = vpop.f32.mrb[0].mxu0
  %v1582 = vpop.f32.mrb[0].mxu0
  %v1583 = vadd.f32 %v1475, %v1582
  %v1584 = vpop.f32.mrb[0].mxu0
  %1585 = vmatprep.mubr.bf16.mxu0 0
  %1586 = vmatmul.mubr.bf16.gmra.mrb[0].mxu0 %v1505
  %v1587 = vpop.f32.mrb[0].mxu0
  %v1588 = vadd.f32 %v1475, %v1587
  %v1589 = vpop.f32.mrb[0].mxu0
  %v1590 = vpop.f32.mrb[0].mxu0
  %v1591 = vadd.f32 %v1475, %v1590
  %v1592 = vpop.f32.mrb[0].mxu0
  %1593 = vmatprep.mubr.bf16.mxu0 0
  %1594 = vmatmul.mubr.bf16.gmra.mrb[0].mxu0 %v1508
  %v1595 = vpop.f32.mrb[0].mxu0
  %v1596 = vadd.f32 %v1475, %v1595
  %v1597 = vpop.f32.mrb[0].mxu0
  %v1598 = vpop.f32.mrb[0].mxu0
  %v1599 = vadd.f32 %v1475, %v1598
  %v1600 = vpop.f32.mrb[0].mxu0
  %1601 = vmatprep.mubr.bf16.mxu0 0
  %1602 = vmatmul.mubr.bf16.gmra.mrb[0].mxu0 %v1511
  %v1603 = vpop.f32.mrb[0].mxu0
  %v1604 = vadd.f32 %v1475, %v1603
  %v1605 = vpop.f32.mrb[0].mxu0
  %v1606 = vpop.f32.mrb[0].mxu0
  %v1607 = vpop.f32.mrb[0].mxu0
  %1608 = vdwg.mxu0
  %1609 = vst.msk [vmem:[#allocation3] sm:$0xff] %vm360, %v1548
  %1610 = vst.msk [vmem:[#allocation3 + $0x8] sm:$0xff] %vm360, %v1551
  %1611 = vst.msk [vmem:[#allocation3 + $0x10] sm:$0xff] %vm360, %v1556
  %1612 = vst.msk [vmem:[#allocation3 + $0x18] sm:$0xff] %vm360, %v1559
  %1613 = vst.msk [vmem:[#allocation3 + $0x20] sm:$0xff] %vm360, %v1564
  %1614 = vst.msk [vmem:[#allocation3 + $0x28] sm:$0xff] %vm360, %v1567
  %1615 = vst.msk [vmem:[#allocation3 + $0x30] sm:$0xff] %vm360, %v1572
  %1616 = vst.msk [vmem:[#allocation3 + $0x38] sm:$0xff] %vm360, %v1575
  %1617 = vst.msk [vmem:[#allocation3 + $0x40] sm:$0xff] %vm360, %v1580
  %1618 = vst.msk [vmem:[#allocation3 + $0x48] sm:$0xff] %vm360, %v1583
  %1619 = vst.msk [vmem:[#allocation3 + $0x50] sm:$0xff] %vm360, %v1588
  %1620 = vst.msk [vmem:[#allocation3 + $0x58] sm:$0xff] %vm360, %v1591
  %1621 = vst.msk [vmem:[#allocation3 + $0x60] sm:$0xff] %vm360, %v1596
  %1622 = vst.msk [vmem:[#allocation3 + $0x68] sm:$0xff] %vm360, %v1599
  %1623 = vst.msk [vmem:[#allocation3 + $0x70] sm:$0xff] %vm360, %v1604
  %1639 = vrot.lane.b32.xlu0 %v1548, 96
  %v1640 = vpop.permute.xlu0 %1639
  %1641 = vrot.lane.b32.xlu0 %v1551, 96
  %v1642 = vpop.permute.xlu0 %1641
  %1643 = vrot.lane.b32.xlu0 %v1556, 96
  %v1644 = vpop.permute.xlu0 %1643
  %1645 = vrot.lane.b32.xlu0 %v1559, 96
  %v1646 = vpop.permute.xlu0 %1645
  %1647 = vrot.lane.b32.xlu0 %v1564, 96
  %v1648 = vpop.permute.xlu0 %1647
  %1649 = vrot.lane.b32.xlu0 %v1567, 96
  %v1650 = vpop.permute.xlu0 %1649
  %1651 = vrot.lane.b32.xlu0 %v1572, 96
  %v1652 = vpop.permute.xlu0 %1651
  %1653 = vrot.lane.b32.xlu0 %v1575, 96
  %v1654 = vpop.permute.xlu0 %1653
  %1655 = vrot.lane.b32.xlu0 %v1580, 96
  %v1656 = vpop.permute.xlu0 %1655
  %1657 = vrot.lane.b32.xlu0 %v1583, 96
  %v1658 = vpop.permute.xlu0 %1657
  %1659 = vrot.lane.b32.xlu0 %v1588, 96
  %v1660 = vpop.permute.xlu0 %1659
  %1661 = vrot.lane.b32.xlu0 %v1591, 96
  %v1662 = vpop.permute.xlu0 %1661
  %1663 = vrot.lane.b32.xlu0 %v1596, 96
  %v1664 = vpop.permute.xlu0 %1663
  %1665 = vrot.lane.b32.xlu0 %v1599, 96
  %v1666 = vpop.permute.xlu0 %1665
  %1667 = vrot.lane.b32.xlu0 %v1604, 96
  %v1668 = vpop.permute.xlu0 %1667
  %s1684 = scalar_lea.vmem [#allocation3], 120
  %1685 = vst.msk [vmem:[%s1684] sm:$0xff] %vm360, %v1640
  %1686 = vst.msk [vmem:[%s1684 + $0x8] sm:$0xff] %vm360, %v1642
  %1687 = vst.msk [vmem:[%s1684 + $0x10] sm:$0xff] %vm360, %v1644
  %1688 = vst.msk [vmem:[%s1684 + $0x18] sm:$0xff] %vm360, %v1646
  %1689 = vst.msk [vmem:[%s1684 + $0x20] sm:$0xff] %vm360, %v1648
  %1690 = vst.msk [vmem:[%s1684 + $0x28] sm:$0xff] %vm360, %v1650
  %1691 = vst.msk [vmem:[%s1684 + $0x30] sm:$0xff] %vm360, %v1652
  %1692 = vst.msk [vmem:[%s1684 + $0x38] sm:$0xff] %vm360, %v1654
  %1693 = vst.msk [vmem:[%s1684 + $0x40] sm:$0xff] %vm360, %v1656
  %1694 = vst.msk [vmem:[%s1684 + $0x48] sm:$0xff] %vm360, %v1658
  %1695 = vst.msk [vmem:[%s1684 + $0x50] sm:$0xff] %vm360, %v1660
  %1696 = vst.msk [vmem:[%s1684 + $0x58] sm:$0xff] %vm360, %v1662
  %1697 = vst.msk [vmem:[%s1684 + $0x60] sm:$0xff] %vm360, %v1664
  %1698 = vst.msk [vmem:[%s1684 + $0x68] sm:$0xff] %vm360, %v1666
  %1699 = vst.msk [vmem:[%s1684 + $0x70] sm:$0xff] %vm360, %v1668
  %1700 = vrot.lane.b32.xlu0 %v1548, 64
  %v1701 = vpop.permute.xlu0 %1700
  %1702 = vrot.lane.b32.xlu0 %v1551, 64
  %v1703 = vpop.permute.xlu0 %1702
  %1704 = vrot.lane.b32.xlu0 %v1556, 64
  %v1705 = vpop.permute.xlu0 %1704
  %1706 = vrot.lane.b32.xlu0 %v1559, 64
  %v1707 = vpop.permute.xlu0 %1706
  %1708 = vrot.lane.b32.xlu0 %v1564, 64
  %v1709 = vpop.permute.xlu0 %1708
  %1710 = vrot.lane.b32.xlu0 %v1567, 64
  %v1711 = vpop.permute.xlu0 %1710
  %1712 = vrot.lane.b32.xlu0 %v1572, 64
  %v1713 = vpop.permute.xlu0 %1712
  %1714 = vrot.lane.b32.xlu0 %v1575, 64
  %v1715 = vpop.permute.xlu0 %1714
  %1716 = vrot.lane.b32.xlu0 %v1580, 64
  %v1717 = vpop.permute.xlu0 %1716
  %1718 = vrot.lane.b32.xlu0 %v1583, 64
  %v1719 = vpop.permute.xlu0 %1718
  %1720 = vrot.lane.b32.xlu0 %v1588, 64
  %v1721 = vpop.permute.xlu0 %1720
  %1722 = vrot.lane.b32.xlu0 %v1591, 64
  %v1723 = vpop.permute.xlu0 %1722
  %1724 = vrot.lane.b32.xlu0 %v1596, 64
  %v1725 = vpop.permute.xlu0 %1724
  %1726 = vrot.lane.b32.xlu0 %v1599, 64
  %v1727 = vpop.permute.xlu0 %1726
  %1728 = vrot.lane.b32.xlu0 %v1604, 64
  %v1729 = vpop.permute.xlu0 %1728
  %s1745 = scalar_lea.vmem [#allocation3], 240
  %1746 = vst.msk [vmem:[%s1745] sm:$0xff] %vm360, %v1701
  %1747 = vst.msk [vmem:[%s1745 + $0x8] sm:$0xff] %vm360, %v1703
  %1748 = vst.msk [vmem:[%s1745 + $0x10] sm:$0xff] %vm360, %v1705
  %1749 = vst.msk [vmem:[%s1745 + $0x18] sm:$0xff] %vm360, %v1707
  %1750 = vst.msk [vmem:[%s1745 + $0x20] sm:$0xff] %vm360, %v1709
  %1751 = vst.msk [vmem:[%s1745 + $0x28] sm:$0xff] %vm360, %v1711
  %1752 = vst.msk [vmem:[%s1745 + $0x30] sm:$0xff] %vm360, %v1713
  %1753 = vst.msk [vmem:[%s1745 + $0x38] sm:$0xff] %vm360, %v1715
  %1754 = vst.msk [vmem:[%s1745 + $0x40] sm:$0xff] %vm360, %v1717
  %1755 = vst.msk [vmem:[%s1745 + $0x48] sm:$0xff] %vm360, %v1719
  %1756 = vst.msk [vmem:[%s1745 + $0x50] sm:$0xff] %vm360, %v1721
  %1757 = vst.msk [vmem:[%s1745 + $0x58] sm:$0xff] %vm360, %v1723
  %1758 = vst.msk [vmem:[%s1745 + $0x60] sm:$0xff] %vm360, %v1725
  %1759 = vst.msk [vmem:[%s1745 + $0x68] sm:$0xff] %vm360, %v1727
  %1760 = vst.msk [vmem:[%s1745 + $0x70] sm:$0xff] %vm360, %v1729
  %v1761 = vld [vmem:[%s8] sm:$0xf]
  %v1762 = vld [vmem:[%s8 + $0x4] sm:$0xf]
  %v1763 = vld [vmem:[%s8 + $0x8] sm:$0xf]
  %v1764 = vld [vmem:[%s8 + $0xc] sm:$0xf]
  %v1765 = vld [vmem:[%s10] sm:$0x1]
  %v1767 = vlaneseq
  %v1768 = vshrl.u32 %v1767, 7
  %v1769 = vsub.s32 0, %v1768
  %v1770 = vrot.slane %v1765, %v1769
  %v1771 = vld [vmem:[#allocation3] sm:$0xff]
  %v1772 = vld [vmem:[%s1684] sm:$0xff]
  %v1773 = vld [vmem:[%s1745] sm:$0xff]
  %v1778 = vunpack.c.l.b16 %v1761
  %v1779 = vunpack.c.l.b16 %v1762
  %v1780 = vunpack.c.l.b16 %v1763
  %v1781 = vunpack.c.l.b16 %v1764
  %v1782 = vpack.c.b16 %v1779, %v1778
  %v1783 = vpack.c.b16 %v1781, %v1780
  %1786 = vmatprep.subr.bf16.mxu0 0
  %1787 = vmatpush1.bf16.msra.mxu0 %v1782
  %1788 = vmatprep.subr.bf16.mxu0 0
  %1789 = vmatpush1.bf16.msra.mxu0 %v1783
  %1790 = vmatprep.subr.bf16.mxu0 0
  %1791 = vmatpush1.bf16.msra.mxu0 0
  %1792 = vmatprep.subr.bf16.mxu0 0
  %1793 = vmatpush1.bf16.msra.mxu0 0
  %1794 = vmatprep.subr.bf16.mxu0 0
  %1795 = vmatpush1.bf16.msra.mxu0 0
  %1796 = vmatprep.subr.bf16.mxu0 0
  %1797 = vmatpush1.bf16.msra.mxu0 0
  %1798 = vmatprep.subr.bf16.mxu0 0
  %1799 = vmatpush1.bf16.msra.mxu0 0
  %1800 = vmatprep.subr.bf16.mxu0 0
  %1801 = vmatpush1.bf16.msra.mxu0 0
  %1802 = vmatprep.subr.bf16.mxu0 0
  %1803 = vmatpush1.bf16.msra.mxu0 0
  %1804 = vmatprep.subr.bf16.mxu0 0
  %1805 = vmatpush1.bf16.msra.mxu0 0
  %1806 = vmatprep.subr.bf16.mxu0 0
  %1807 = vmatpush1.bf16.msra.mxu0 0
  %1808 = vmatprep.subr.bf16.mxu0 0
  %1809 = vmatpush1.bf16.msra.mxu0 0
  %1810 = vmatprep.subr.bf16.mxu0 0
  %1811 = vmatpush1.bf16.msra.mxu0 0
  %1812 = vmatprep.subr.bf16.mxu0 0
  %1813 = vmatpush1.bf16.msra.mxu0 0
  %1814 = vmatprep.subr.bf16.mxu0 0
  %1815 = vmatpush1.bf16.msra.mxu0 0
  %1816 = vmatprep.subr.bf16.mxu0 0
  %1817 = vmatpush1.bf16.msra.mxu0 0
  %1818 = vmatprep.mubr.bf16.mxu0 0
  %1819 = vmatmul.mubr.bf16.gmra.mrb[0].mxu0 %v665
  %v1820 = vpop.f32.mrb[0].mxu0
  %v1821 = vadd.f32 0.0, %v1820
  %v1822 = vpop.f32.mrb[0].mxu0
  %v1823 = vpop.f32.mrb[0].mxu0
  %v1824 = vpop.f32.mrb[0].mxu0
  %1825 = vdwg.mxu0
  %v1826 = vadd.f32 %v1771, %v1821
  %v1827 = vxor.u32 %v1826, 2147483648
  %v1828 = vmul.f32 %v1827, 1.442695
  %v1829 = vpow.pop %v1828
  %v1830 = vadd.f32 %v1829, 1.0
  %v1831 = vrcp.pop %v1830
  %v1832 = vmul.f32 1.0, %v1831
  %1834 = vrot.lane.b32.xlu0 %v1821, 96
  %v1835 = vpop.permute.xlu0 %1834
  %v1837 = vadd.f32 %v1772, %v1835
  %v1838 = vxor.u32 %v1837, 2147483648
  %v1839 = vmul.f32 %v1838, 1.442695
  %v1840 = vpow.pop %v1839
  %v1841 = vadd.f32 %v1840, 1.0
  %v1842 = vrcp.pop %v1841
  %v1843 = vmul.f32 1.0, %v1842
  %1844 = vrot.lane.b32.xlu0 %v1770, 64
  %v1845 = vpop.permute.xlu0 %1844
  %v1847 = vadd.f32 %v1821, %v1845
  %1849 = vrot.lane.b32.xlu0 %v1847, 64
  %v1850 = vpop.permute.xlu0 %1849
  %v1852 = vmul.f32 %v1832, %v1850
  %v1853 = vadd.f32 %v1773, %v1852
  %v1854 = vtanh.pop %v1853
  %v1855 = vsub.f32 1.0, %v1843
  %v1856 = vmul.f32 %v1855, %v1854
  %v1857 = vmul.f32 %v1843, 0.0
  %v1858 = vadd.f32 %v1856, %v1857
  %v1859 = vld [vmem:[#allocation3 + $0x18] sm:$0xff]
  %v1860 = vld [vmem:[%s1684 + $0x18] sm:$0xff]
  %v1861 = vld [vmem:[%s1745 + $0x18] sm:$0xff]
  %v1862 = vpack.c.bf16 %v1858, %v1858
  %v1864 = vsel %vm360, %v1862, 0
  %1866 = vmatprep.subr.bf16.mxu0 0
  %1867 = vmatpush1.bf16.msra.mxu0 %v1782
  %1868 = vmatprep.subr.bf16.mxu0 0
  %1869 = vmatpush1.bf16.msra.mxu0 %v1783
  %1870 = vmatprep.subr.bf16.mxu0 0
  %1871 = vmatpush1.bf16.msra.mxu0 0
  %1872 = vmatprep.subr.bf16.mxu0 0
  %1873 = vmatpush1.bf16.msra.mxu0 0
  %1874 = vmatprep.subr.bf16.mxu0 0
  %1875 = vmatpush1.bf16.msra.mxu0 0
  %1876 = vmatprep.subr.bf16.mxu0 0
  %1877 = vmatpush1.bf16.msra.mxu0 0
  %1878 = vmatprep.subr.bf16.mxu0 0
  %1879 = vmatpush1.bf16.msra.mxu0 0
  %1880 = vmatprep.subr.bf16.mxu0 0
  %1881 = vmatpush1.bf16.msra.mxu0 0
  %1882 = vmatprep.subr.bf16.mxu0 0
  %1883 = vmatpush1.bf16.msra.mxu0 0
  %1884 = vmatprep.subr.bf16.mxu0 0
  %1885 = vmatpush1.bf16.msra.mxu0 0
  %1886 = vmatprep.subr.bf16.mxu0 0
  %1887 = vmatpush1.bf16.msra.mxu0 0
  %1888 = vmatprep.subr.bf16.mxu0 0
  %1889 = vmatpush1.bf16.msra.mxu0 0
  %1890 = vmatprep.subr.bf16.mxu0 0
  %1891 = vmatpush1.bf16.msra.mxu0 0
  %1892 = vmatprep.subr.bf16.mxu0 0
  %1893 = vmatpush1.bf16.msra.mxu0 0
  %1894 = vmatprep.subr.bf16.mxu0 0
  %1895 = vmatpush1.bf16.msra.mxu0 0
  %1896 = vmatprep.subr.bf16.mxu0 0
  %1897 = vmatpush1.bf16.msra.mxu0 0
  %1898 = vmatprep.mubr.bf16.mxu0 0
  %1899 = vmatmul.mubr.bf16.gmra.mrb[0].mxu0 %v1864
  %v1900 = vpop.f32.mrb[0].mxu0
  %v1901 = vadd.f32 0.0, %v1900
  %v1902 = vpop.f32.mrb[0].mxu0
  %v1903 = vpop.f32.mrb[0].mxu0
  %v1904 = vpop.f32.mrb[0].mxu0
  %1905 = vdwg.mxu0
  %v1906 = vadd.f32 %v1859, %v1901
  %v1907 = vxor.u32 %v1906, 2147483648
  %v1908 = vmul.f32 %v1907, 1.442695
  %v1909 = vpow.pop %v1908
  %v1910 = vadd.f32 %v1909, 1.0
  %v1911 = vrcp.pop %v1910
  %v1912 = vmul.f32 1.0, %v1911
  %1914 = vrot.lane.b32.xlu0 %v1901, 96
  %v1915 = vpop.permute.xlu0 %1914
  %v1917 = vadd.f32 %v1860, %v1915
  %v1918 = vxor.u32 %v1917, 2147483648
  %v1919 = vmul.f32 %v1918, 1.442695
  %v1920 = vpow.pop %v1919
  %v1921 = vadd.f32 %v1920, 1.0
  %v1922 = vrcp.pop %v1921
  %v1923 = vmul.f32 1.0, %v1922
  %v1924 = vadd.f32 %v1901, %v1845
  %1926 = vrot.lane.b32.xlu0 %v1924, 64
  %v1927 = vpop.permute.xlu0 %1926
  %v1929 = vmul.f32 %v1912, %v1927
  %v1930 = vadd.f32 %v1861, %v1929
  %v1931 = vtanh.pop %v1930
  %v1932 = vsub.f32 1.0, %v1923
  %v1933 = vmul.f32 %v1932, %v1931
  %v1934 = vmul.f32 %v1923, %v1858
  %v1935 = vadd.f32 %v1933, %v1934
  %v1936 = vld [vmem:[#allocation3 + $0x30] sm:$0xff]
  %v1937 = vld [vmem:[%s1684 + $0x30] sm:$0xff]
  %v1938 = vld [vmem:[%s1745 + $0x30] sm:$0xff]
  %v1939 = vpack.c.bf16 %v1935, %v1935
  %v1941 = vsel %vm360, %v1939, 0
  %1943 = vmatprep.subr.bf16.mxu0 0
  %1944 = vmatpush1.bf16.msra.mxu0 %v1782
  %1945 = vmatprep.subr.bf16.mxu0 0
  %1946 = vmatpush1.bf16.msra.mxu0 %v1783
  %1947 = vmatprep.subr.bf16.mxu0 0
  %1948 = vmatpush1.bf16.msra.mxu0 0
  %1949 = vmatprep.subr.bf16.mxu0 0
  %1950 = vmatpush1.bf16.msra.mxu0 0
  %1951 = vmatprep.subr.bf16.mxu0 0
  %1952 = vmatpush1.bf16.msra.mxu0 0
  %1953 = vmatprep.subr.bf16.mxu0 0
  %1954 = vmatpush1.bf16.msra.mxu0 0
  %1955 = vmatprep.subr.bf16.mxu0 0
  %1956 = vmatpush1.bf16.msra.mxu0 0
  %1957 = vmatprep.subr.bf16.mxu0 0
  %1958 = vmatpush1.bf16.msra.mxu0 0
  %1959 = vmatprep.subr.bf16.mxu0 0
  %1960 = vmatpush1.bf16.msra.mxu0 0
  %1961 = vmatprep.subr.bf16.mxu0 0
  %1962 = vmatpush1.bf16.msra.mxu0 0
  %1963 = vmatprep.subr.bf16.mxu0 0
  %1964 = vmatpush1.bf16.msra.mxu0 0
  %1965 = vmatprep.subr.bf16.mxu0 0
  %1966 = vmatpush1.bf16.msra.mxu0 0
  %1967 = vmatprep.subr.bf16.mxu0 0
  %1968 = vmatpush1.bf16.msra.mxu0 0
  %1969 = vmatprep.subr.bf16.mxu0 0
  %1970 = vmatpush1.bf16.msra.mxu0 0
  %1971 = vmatprep.subr.bf16.mxu0 0
  %1972 = vmatpush1.bf16.msra.mxu0 0
  %1973 = vmatprep.subr.bf16.mxu0 0
  %1974 = vmatpush1.bf16.msra.mxu0 0
  %1975 = vmatprep.mubr.bf16.mxu0 0
  %1976 = vmatmul.mubr.bf16.gmra.mrb[0].mxu0 %v1941
  %v1977 = vpop.f32.mrb[0].mxu0
  %v1978 = vadd.f32 0.0, %v1977
  %v1979 = vpop.f32.mrb[0].mxu0
  %v1980 = vpop.f32.mrb[0].mxu0
  %v1981 = vpop.f32.mrb[0].mxu0
  %1982 = vdwg.mxu0
  %v1983 = vadd.f32 %v1936, %v1978
  %v1984 = vxor.u32 %v1983, 2147483648
  %v1985 = vmul.f32 %v1984, 1.442695
  %v1986 = vpow.pop %v1985
  %v1987 = vadd.f32 %v1986, 1.0
  %v1988 = vrcp.pop %v1987
  %v1989 = vmul.f32 1.0, %v1988
  %1991 = vrot.lane.b32.xlu0 %v1978, 96
  %v1992 = vpop.permute.xlu0 %1991
  %v1994 = vadd.f32 %v1937, %v1992
  %v1995 = vxor.u32 %v1994, 2147483648
  %v1996 = vmul.f32 %v1995, 1.442695
  %v1997 = vpow.pop %v1996
  %v1998 = vadd.f32 %v1997, 1.0
  %v1999 = vrcp.pop %v1998
  %v2000 = vmul.f32 1.0, %v1999
  %v2001 = vadd.f32 %v1978, %v1845
  %2003 = vrot.lane.b32.xlu0 %v2001, 64
  %v2004 = vpop.permute.xlu0 %2003
  %v2006 = vmul.f32 %v1989, %v2004
  %v2007 = vadd.f32 %v1938, %v2006
  %v2008 = vtanh.pop %v2007
  %v2009 = vsub.f32 1.0, %v2000
  %v2010 = vmul.f32 %v2009, %v2008
  %v2011 = vmul.f32 %v2000, %v1935
  %v2012 = vadd.f32 %v2010, %v2011
  %v2013 = vld [vmem:[#allocation3 + $0x48] sm:$0xff]
  %v2014 = vld [vmem:[%s1684 + $0x48] sm:$0xff]
  %v2015 = vld [vmem:[%s1745 + $0x48] sm:$0xff]
  %v2016 = vpack.c.bf16 %v2012, %v2012
  %v2018 = vsel %vm360, %v2016, 0
  %2020 = vmatprep.subr.bf16.mxu0 0
  %2021 = vmatpush1.bf16.msra.mxu0 %v1782
  %2022 = vmatprep.subr.bf16.mxu0 0
  %2023 = vmatpush1.bf16.msra.mxu0 %v1783
  %2024 = vmatprep.subr.bf16.mxu0 0
  %2025 = vmatpush1.bf16.msra.mxu0 0
  %2026 = vmatprep.subr.bf16.mxu0 0
  %2027 = vmatpush1.bf16.msra.mxu0 0
  %2028 = vmatprep.subr.bf16.mxu0 0
  %2029 = vmatpush1.bf16.msra.mxu0 0
  %2030 = vmatprep.subr.bf16.mxu0 0
  %2031 = vmatpush1.bf16.msra.mxu0 0
  %2032 = vmatprep.subr.bf16.mxu0 0
  %2033 = vmatpush1.bf16.msra.mxu0 0
  %2034 = vmatprep.subr.bf16.mxu0 0
  %2035 = vmatpush1.bf16.msra.mxu0 0
  %2036 = vmatprep.subr.bf16.mxu0 0
  %2037 = vmatpush1.bf16.msra.mxu0 0
  %2038 = vmatprep.subr.bf16.mxu0 0
  %2039 = vmatpush1.bf16.msra.mxu0 0
  %2040 = vmatprep.subr.bf16.mxu0 0
  %2041 = vmatpush1.bf16.msra.mxu0 0
  %2042 = vmatprep.subr.bf16.mxu0 0
  %2043 = vmatpush1.bf16.msra.mxu0 0
  %2044 = vmatprep.subr.bf16.mxu0 0
  %2045 = vmatpush1.bf16.msra.mxu0 0
  %2046 = vmatprep.subr.bf16.mxu0 0
  %2047 = vmatpush1.bf16.msra.mxu0 0
  %2048 = vmatprep.subr.bf16.mxu0 0
  %2049 = vmatpush1.bf16.msra.mxu0 0
  %2050 = vmatprep.subr.bf16.mxu0 0
  %2051 = vmatpush1.bf16.msra.mxu0 0
  %2052 = vmatprep.mubr.bf16.mxu0 0
  %2053 = vmatmul.mubr.bf16.gmra.mrb[0].mxu0 %v2018
  %v2054 = vpop.f32.mrb[0].mxu0
  %v2055 = vadd.f32 0.0, %v2054
  %v2056 = vpop.f32.mrb[0].mxu0
  %v2057 = vpop.f32.mrb[0].mxu0
  %v2058 = vpop.f32.mrb[0].mxu0
  %2059 = vdwg.mxu0
  %v2060 = vadd.f32 %v2013, %v2055
  %v2061 = vxor.u32 %v2060, 2147483648
  %v2062 = vmul.f32 %v2061, 1.442695
  %v2063 = vpow.pop %v2062
  %v2064 = vadd.f32 %v2063, 1.0
  %v2065 = vrcp.pop %v2064
  %v2066 = vmul.f32 1.0, %v2065
  %2068 = vrot.lane.b32.xlu0 %v2055, 96
  %v2069 = vpop.permute.xlu0 %2068
  %v2071 = vadd.f32 %v2014, %v2069
  %v2072 = vxor.u32 %v2071, 2147483648
  %v2073 = vmul.f32 %v2072, 1.442695
  %v2074 = vpow.pop %v2073
  %v2075 = vadd.f32 %v2074, 1.0
  %v2076 = vrcp.pop %v2075
  %v2077 = vmul.f32 1.0, %v2076
  %v2078 = vadd.f32 %v2055, %v1845
  %2080 = vrot.lane.b32.xlu0 %v2078, 64
  %v2081 = vpop.permute.xlu0 %2080
  %v2083 = vmul.f32 %v2066, %v2081
  %v2084 = vadd.f32 %v2015, %v2083
  %v2085 = vtanh.pop %v2084
  %v2086 = vsub.f32 1.0, %v2077
  %v2087 = vmul.f32 %v2086, %v2085
  %v2088 = vmul.f32 %v2077, %v2012
  %v2089 = vadd.f32 %v2087, %v2088
  %v2090 = vld [vmem:[#allocation3 + $0x60] sm:$0xff]
  %v2091 = vld [vmem:[%s1684 + $0x60] sm:$0xff]
  %v2092 = vld [vmem:[%s1745 + $0x60] sm:$0xff]
  %v2093 = vpack.c.bf16 %v2089, %v2089
  %v2095 = vsel %vm360, %v2093, 0
  %2097 = vmatprep.subr.bf16.mxu0 0
  %2098 = vmatpush1.bf16.msra.mxu0 %v1782
  %2099 = vmatprep.subr.bf16.mxu0 0
  %2100 = vmatpush1.bf16.msra.mxu0 %v1783
  %2101 = vmatprep.subr.bf16.mxu0 0
  %2102 = vmatpush1.bf16.msra.mxu0 0
  %2103 = vmatprep.subr.bf16.mxu0 0
  %2104 = vmatpush1.bf16.msra.mxu0 0
  %2105 = vmatprep.subr.bf16.mxu0 0
  %2106 = vmatpush1.bf16.msra.mxu0 0
  %2107 = vmatprep.subr.bf16.mxu0 0
  %2108 = vmatpush1.bf16.msra.mxu0 0
  %2109 = vmatprep.subr.bf16.mxu0 0
  %2110 = vmatpush1.bf16.msra.mxu0 0
  %2111 = vmatprep.subr.bf16.mxu0 0
  %2112 = vmatpush1.bf16.msra.mxu0 0
  %2113 = vmatprep.subr.bf16.mxu0 0
  %2114 = vmatpush1.bf16.msra.mxu0 0
  %2115 = vmatprep.subr.bf16.mxu0 0
  %2116 = vmatpush1.bf16.msra.mxu0 0
  %2117 = vmatprep.subr.bf16.mxu0 0
  %2118 = vmatpush1.bf16.msra.mxu0 0
  %2119 = vmatprep.subr.bf16.mxu0 0
  %2120 = vmatpush1.bf16.msra.mxu0 0
  %2121 = vmatprep.subr.bf16.mxu0 0
  %2122 = vmatpush1.bf16.msra.mxu0 0
  %2123 = vmatprep.subr.bf16.mxu0 0
  %2124 = vmatpush1.bf16.msra.mxu0 0
  %2125 = vmatprep.subr.bf16.mxu0 0
  %2126 = vmatpush1.bf16.msra.mxu0 0
  %2127 = vmatprep.subr.bf16.mxu0 0
  %2128 = vmatpush1.bf16.msra.mxu0 0
  %2129 = vmatprep.mubr.bf16.mxu0 0
  %2130 = vmatmul.mubr.bf16.gmra.mrb[0].mxu0 %v2095
  %v2131 = vpop.f32.mrb[0].mxu0
  %v2132 = vadd.f32 0.0, %v2131
  %v2133 = vpop.f32.mrb[0].mxu0
  %v2134 = vpop.f32.mrb[0].mxu0
  %v2135 = vpop.f32.mrb[0].mxu0
  %2136 = vdwg.mxu0
  %v2137 = vadd.f32 %v2090, %v2132
  %v2138 = vxor.u32 %v2137, 2147483648
  %v2139 = vmul.f32 %v2138, 1.442695
  %v2140 = vpow.pop %v2139
  %v2141 = vadd.f32 %v2140, 1.0
  %v2142 = vrcp.pop %v2141
  %v2143 = vmul.f32 1.0, %v2142
  %2145 = vrot.lane.b32.xlu0 %v2132, 96
  %v2146 = vpop.permute.xlu0 %2145
  %v2148 = vadd.f32 %v2091, %v2146
  %v2149 = vxor.u32 %v2148, 2147483648
  %v2150 = vmul.f32 %v2149, 1.442695
  %v2151 = vpow.pop %v2150
  %v2152 = vadd.f32 %v2151, 1.0
  %v2153 = vrcp.pop %v2152
  %v2154 = vmul.f32 1.0, %v2153
  %v2155 = vadd.f32 %v2132, %v1845
  %2157 = vrot.lane.b32.xlu0 %v2155, 64
  %v2158 = vpop.permute.xlu0 %2157
  %v2160 = vmul.f32 %v2143, %v2158
  %v2161 = vadd.f32 %v2092, %v2160
  %v2162 = vtanh.pop %v2161
  %v2163 = vsub.f32 1.0, %v2154
  %v2164 = vmul.f32 %v2163, %v2162
  %v2165 = vmul.f32 %v2154, %v2089
  %v2166 = vadd.f32 %v2164, %v2165
  %v2167 = vld [vmem:[#allocation3 + $0x8] sm:$0xff]
  %v2168 = vld [vmem:[%s1684 + $0x8] sm:$0xff]
  %v2169 = vld [vmem:[%s1745 + $0x8] sm:$0xff]
  %v2170 = vpack.c.bf16 %v2166, %v2166
  %v2172 = vsel %vm360, %v2170, 0
  %2174 = vmatprep.subr.bf16.mxu0 0
  %2175 = vmatpush1.bf16.msra.mxu0 %v1782
  %2176 = vmatprep.subr.bf16.mxu0 0
  %2177 = vmatpush1.bf16.msra.mxu0 %v1783
  %2178 = vmatprep.subr.bf16.mxu0 0
  %2179 = vmatpush1.bf16.msra.mxu0 0
  %2180 = vmatprep.subr.bf16.mxu0 0
  %2181 = vmatpush1.bf16.msra.mxu0 0
  %2182 = vmatprep.subr.bf16.mxu0 0
  %2183 = vmatpush1.bf16.msra.mxu0 0
  %2184 = vmatprep.subr.bf16.mxu0 0
  %2185 = vmatpush1.bf16.msra.mxu0 0
  %2186 = vmatprep.subr.bf16.mxu0 0
  %2187 = vmatpush1.bf16.msra.mxu0 0
  %2188 = vmatprep.subr.bf16.mxu0 0
  %2189 = vmatpush1.bf16.msra.mxu0 0
  %2190 = vmatprep.subr.bf16.mxu0 0
  %2191 = vmatpush1.bf16.msra.mxu0 0
  %2192 = vmatprep.subr.bf16.mxu0 0
  %2193 = vmatpush1.bf16.msra.mxu0 0
  %2194 = vmatprep.subr.bf16.mxu0 0
  %2195 = vmatpush1.bf16.msra.mxu0 0
  %2196 = vmatprep.subr.bf16.mxu0 0
  %2197 = vmatpush1.bf16.msra.mxu0 0
  %2198 = vmatprep.subr.bf16.mxu0 0
  %2199 = vmatpush1.bf16.msra.mxu0 0
  %2200 = vmatprep.subr.bf16.mxu0 0
  %2201 = vmatpush1.bf16.msra.mxu0 0
  %2202 = vmatprep.subr.bf16.mxu0 0
  %2203 = vmatpush1.bf16.msra.mxu0 0
  %2204 = vmatprep.subr.bf16.mxu0 0
  %2205 = vmatpush1.bf16.msra.mxu0 0
  %2206 = vmatprep.mubr.bf16.mxu0 0
  %2207 = vmatmul.mubr.bf16.gmra.mrb[0].mxu0 %v2172
  %v2208 = vpop.f32.mrb[0].mxu0
  %v2209 = vadd.f32 0.0, %v2208
  %v2210 = vpop.f32.mrb[0].mxu0
  %v2211 = vpop.f32.mrb[0].mxu0
  %v2212 = vpop.f32.mrb[0].mxu0
  %2213 = vdwg.mxu0
  %v2214 = vadd.f32 %v2167, %v2209
  %v2215 = vxor.u32 %v2214, 2147483648
  %v2216 = vmul.f32 %v2215, 1.442695
  %v2217 = vpow.pop %v2216
  %v2218 = vadd.f32 %v2217, 1.0
  %v2219 = vrcp.pop %v2218
  %v2220 = vmul.f32 1.0, %v2219
  %2222 = vrot.lane.b32.xlu0 %v2209, 96
  %v2223 = vpop.permute.xlu0 %2222
  %v2225 = vadd.f32 %v2168, %v2223
  %v2226 = vxor.u32 %v2225, 2147483648
  %v2227 = vmul.f32 %v2226, 1.442695
  %v2228 = vpow.pop %v2227
  %v2229 = vadd.f32 %v2228, 1.0
  %v2230 = vrcp.pop %v2229
  %v2231 = vmul.f32 1.0, %v2230
  %v2232 = vadd.f32 %v2209, %v1845
  %2234 = vrot.lane.b32.xlu0 %v2232, 64
  %v2235 = vpop.permute.xlu0 %2234
  %v2237 = vmul.f32 %v2220, %v2235
  %v2238 = vadd.f32 %v2169, %v2237
  %v2239 = vtanh.pop %v2238
  %v2240 = vsub.f32 1.0, %v2231
  %v2241 = vmul.f32 %v2240, %v2239
  %v2242 = vmul.f32 %v2231, %v2166
  %v2243 = vadd.f32 %v2241, %v2242
  %v2244 = vld [vmem:[#allocation3 + $0x20] sm:$0xff]
  %v2245 = vld [vmem:[%s1684 + $0x20] sm:$0xff]
  %v2246 = vld [vmem:[%s1745 + $0x20] sm:$0xff]
  %v2247 = vpack.c.bf16 %v2243, %v2243
  %v2249 = vsel %vm360, %v2247, 0
  %2251 = vmatprep.subr.bf16.mxu0 0
  %2252 = vmatpush1.bf16.msra.mxu0 %v1782
  %2253 = vmatprep.subr.bf16.mxu0 0
  %2254 = vmatpush1.bf16.msra.mxu0 %v1783
  %2255 = vmatprep.subr.bf16.mxu0 0
  %2256 = vmatpush1.bf16.msra.mxu0 0
  %2257 = vmatprep.subr.bf16.mxu0 0
  %2258 = vmatpush1.bf16.msra.mxu0 0
  %2259 = vmatprep.subr.bf16.mxu0 0
  %2260 = vmatpush1.bf16.msra.mxu0 0
  %2261 = vmatprep.subr.bf16.mxu0 0
  %2262 = vmatpush1.bf16.msra.mxu0 0
  %2263 = vmatprep.subr.bf16.mxu0 0
  %2264 = vmatpush1.bf16.msra.mxu0 0
  %2265 = vmatprep.subr.bf16.mxu0 0
  %2266 = vmatpush1.bf16.msra.mxu0 0
  %2267 = vmatprep.subr.bf16.mxu0 0
  %2268 = vmatpush1.bf16.msra.mxu0 0
  %2269 = vmatprep.subr.bf16.mxu0 0
  %2270 = vmatpush1.bf16.msra.mxu0 0
  %2271 = vmatprep.subr.bf16.mxu0 0
  %2272 = vmatpush1.bf16.msra.mxu0 0
  %2273 = vmatprep.subr.bf16.mxu0 0
  %2274 = vmatpush1.bf16.msra.mxu0 0
  %2275 = vmatprep.subr.bf16.mxu0 0
  %2276 = vmatpush1.bf16.msra.mxu0 0
  %2277 = vmatprep.subr.bf16.mxu0 0
  %2278 = vmatpush1.bf16.msra.mxu0 0
  %2279 = vmatprep.subr.bf16.mxu0 0
  %2280 = vmatpush1.bf16.msra.mxu0 0
  %2281 = vmatprep.subr.bf16.mxu0 0
  %2282 = vmatpush1.bf16.msra.mxu0 0
  %2283 = vmatprep.mubr.bf16.mxu0 0
  %2284 = vmatmul.mubr.bf16.gmra.mrb[0].mxu0 %v2249
  %v2285 = vpop.f32.mrb[0].mxu0
  %v2286 = vadd.f32 0.0, %v2285
  %v2287 = vpop.f32.mrb[0].mxu0
  %v2288 = vpop.f32.mrb[0].mxu0
  %v2289 = vpop.f32.mrb[0].mxu0
  %2290 = vdwg.mxu0
  %v2291 = vadd.f32 %v2244, %v2286
  %v2292 = vxor.u32 %v2291, 2147483648
  %v2293 = vmul.f32 %v2292, 1.442695
  %v2294 = vpow.pop %v2293
  %v2295 = vadd.f32 %v2294, 1.0
  %v2296 = vrcp.pop %v2295
  %v2297 = vmul.f32 1.0, %v2296
  %2299 = vrot.lane.b32.xlu0 %v2286, 96
  %v2300 = vpop.permute.xlu0 %2299
  %v2302 = vadd.f32 %v2245, %v2300
  %v2303 = vxor.u32 %v2302, 2147483648
  %v2304 = vmul.f32 %v2303, 1.442695
  %v2305 = vpow.pop %v2304
  %v2306 = vadd.f32 %v2305, 1.0
  %v2307 = vrcp.pop %v2306
  %v2308 = vmul.f32 1.0, %v2307
  %v2309 = vadd.f32 %v2286, %v1845
  %2311 = vrot.lane.b32.xlu0 %v2309, 64
  %v2312 = vpop.permute.xlu0 %2311
  %v2314 = vmul.f32 %v2297, %v2312
  %v2315 = vadd.f32 %v2246, %v2314
  %v2316 = vtanh.pop %v2315
  %v2317 = vsub.f32 1.0, %v2308
  %v2318 = vmul.f32 %v2317, %v2316
  %v2319 = vmul.f32 %v2308, %v2243
  %v2320 = vadd.f32 %v2318, %v2319
  %v2321 = vld [vmem:[#allocation3 + $0x38] sm:$0xff]
  %v2322 = vld [vmem:[%s1684 + $0x38] sm:$0xff]
  %v2323 = vld [vmem:[%s1745 + $0x38] sm:$0xff]
  %v2324 = vpack.c.bf16 %v2320, %v2320
  %v2326 = vsel %vm360, %v2324, 0
  %2328 = vmatprep.subr.bf16.mxu0 0
  %2329 = vmatpush1.bf16.msra.mxu0 %v1782
  %2330 = vmatprep.subr.bf16.mxu0 0
  %2331 = vmatpush1.bf16.msra.mxu0 %v1783
  %2332 = vmatprep.subr.bf16.mxu0 0
  %2333 = vmatpush1.bf16.msra.mxu0 0
  %2334 = vmatprep.subr.bf16.mxu0 0
  %2335 = vmatpush1.bf16.msra.mxu0 0
  %2336 = vmatprep.subr.bf16.mxu0 0
  %2337 = vmatpush1.bf16.msra.mxu0 0
  %2338 = vmatprep.subr.bf16.mxu0 0
  %2339 = vmatpush1.bf16.msra.mxu0 0
  %2340 = vmatprep.subr.bf16.mxu0 0
  %2341 = vmatpush1.bf16.msra.mxu0 0
  %2342 = vmatprep.subr.bf16.mxu0 0
  %2343 = vmatpush1.bf16.msra.mxu0 0
  %2344 = vmatprep.subr.bf16.mxu0 0
  %2345 = vmatpush1.bf16.msra.mxu0 0
  %2346 = vmatprep.subr.bf16.mxu0 0
  %2347 = vmatpush1.bf16.msra.mxu0 0
  %2348 = vmatprep.subr.bf16.mxu0 0
  %2349 = vmatpush1.bf16.msra.mxu0 0
  %2350 = vmatprep.subr.bf16.mxu0 0
  %2351 = vmatpush1.bf16.msra.mxu0 0
  %2352 = vmatprep.subr.bf16.mxu0 0
  %2353 = vmatpush1.bf16.msra.mxu0 0
  %2354 = vmatprep.subr.bf16.mxu0 0
  %2355 = vmatpush1.bf16.msra.mxu0 0
  %2356 = vmatprep.subr.bf16.mxu0 0
  %2357 = vmatpush1.bf16.msra.mxu0 0
  %2358 = vmatprep.subr.bf16.mxu0 0
  %2359 = vmatpush1.bf16.msra.mxu0 0
  %2360 = vmatprep.mubr.bf16.mxu0 0
  %2361 = vmatmul.mubr.bf16.gmra.mrb[0].mxu0 %v2326
  %v2362 = vpop.f32.mrb[0].mxu0
  %v2363 = vadd.f32 0.0, %v2362
  %v2364 = vpop.f32.mrb[0].mxu0
  %v2365 = vpop.f32.mrb[0].mxu0
  %v2366 = vpop.f32.mrb[0].mxu0
  %2367 = vdwg.mxu0
  %v2368 = vadd.f32 %v2321, %v2363
  %v2369 = vxor.u32 %v2368, 2147483648
  %v2370 = vmul.f32 %v2369, 1.442695
  %v2371 = vpow.pop %v2370
  %v2372 = vadd.f32 %v2371, 1.0
  %v2373 = vrcp.pop %v2372
  %v2374 = vmul.f32 1.0, %v2373
  %2376 = vrot.lane.b32.xlu0 %v2363, 96
  %v2377 = vpop.permute.xlu0 %2376
  %v2379 = vadd.f32 %v2322, %v2377
  %v2380 = vxor.u32 %v2379, 2147483648
  %v2381 = vmul.f32 %v2380, 1.442695
  %v2382 = vpow.pop %v2381
  %v2383 = vadd.f32 %v2382, 1.0
  %v2384 = vrcp.pop %v2383
  %v2385 = vmul.f32 1.0, %v2384
  %v2386 = vadd.f32 %v2363, %v1845
  %2388 = vrot.lane.b32.xlu0 %v2386, 64
  %v2389 = vpop.permute.xlu0 %2388
  %v2391 = vmul.f32 %v2374, %v2389
  %v2392 = vadd.f32 %v2323, %v2391
  %v2393 = vtanh.pop %v2392
  %v2394 = vsub.f32 1.0, %v2385
  %v2395 = vmul.f32 %v2394, %v2393
  %v2396 = vmul.f32 %v2385, %v2320
  %v2397 = vadd.f32 %v2395, %v2396
  %v2398 = vld [vmem:[#allocation3 + $0x50] sm:$0xff]
  %v2399 = vld [vmem:[%s1684 + $0x50] sm:$0xff]
  %v2400 = vld [vmem:[%s1745 + $0x50] sm:$0xff]
  %v2401 = vpack.c.bf16 %v2397, %v2397
  %v2403 = vsel %vm360, %v2401, 0
  %2405 = vmatprep.subr.bf16.mxu0 0
  %2406 = vmatpush1.bf16.msra.mxu0 %v1782
  %2407 = vmatprep.subr.bf16.mxu0 0
  %2408 = vmatpush1.bf16.msra.mxu0 %v1783
  %2409 = vmatprep.subr.bf16.mxu0 0
  %2410 = vmatpush1.bf16.msra.mxu0 0
  %2411 = vmatprep.subr.bf16.mxu0 0
  %2412 = vmatpush1.bf16.msra.mxu0 0
  %2413 = vmatprep.subr.bf16.mxu0 0
  %2414 = vmatpush1.bf16.msra.mxu0 0
  %2415 = vmatprep.subr.bf16.mxu0 0
  %2416 = vmatpush1.bf16.msra.mxu0 0
  %2417 = vmatprep.subr.bf16.mxu0 0
  %2418 = vmatpush1.bf16.msra.mxu0 0
  %2419 = vmatprep.subr.bf16.mxu0 0
  %2420 = vmatpush1.bf16.msra.mxu0 0
  %2421 = vmatprep.subr.bf16.mxu0 0
  %2422 = vmatpush1.bf16.msra.mxu0 0
  %2423 = vmatprep.subr.bf16.mxu0 0
  %2424 = vmatpush1.bf16.msra.mxu0 0
  %2425 = vmatprep.subr.bf16.mxu0 0
  %2426 = vmatpush1.bf16.msra.mxu0 0
  %2427 = vmatprep.subr.bf16.mxu0 0
  %2428 = vmatpush1.bf16.msra.mxu0 0
  %2429 = vmatprep.subr.bf16.mxu0 0
  %2430 = vmatpush1.bf16.msra.mxu0 0
  %2431 = vmatprep.subr.bf16.mxu0 0
  %2432 = vmatpush1.bf16.msra.mxu0 0
  %2433 = vmatprep.subr.bf16.mxu0 0
  %2434 = vmatpush1.bf16.msra.mxu0 0
  %2435 = vmatprep.subr.bf16.mxu0 0
  %2436 = vmatpush1.bf16.msra.mxu0 0
  %2437 = vmatprep.mubr.bf16.mxu0 0
  %2438 = vmatmul.mubr.bf16.gmra.mrb[0].mxu0 %v2403
  %v2439 = vpop.f32.mrb[0].mxu0
  %v2440 = vadd.f32 0.0, %v2439
  %v2441 = vpop.f32.mrb[0].mxu0
  %v2442 = vpop.f32.mrb[0].mxu0
  %v2443 = vpop.f32.mrb[0].mxu0
  %2444 = vdwg.mxu0
  %v2445 = vadd.f32 %v2398, %v2440
  %v2446 = vxor.u32 %v2445, 2147483648
  %v2447 = vmul.f32 %v2446, 1.442695
  %v2448 = vpow.pop %v2447
  %v2449 = vadd.f32 %v2448, 1.0
  %v2450 = vrcp.pop %v2449
  %v2451 = vmul.f32 1.0, %v2450
  %2453 = vrot.lane.b32.xlu0 %v2440, 96
  %v2454 = vpop.permute.xlu0 %2453
  %v2456 = vadd.f32 %v2399, %v2454
  %v2457 = vxor.u32 %v2456, 2147483648
  %v2458 = vmul.f32 %v2457, 1.442695
  %v2459 = vpow.pop %v2458
  %v2460 = vadd.f32 %v2459, 1.0
  %v2461 = vrcp.pop %v2460
  %v2462 = vmul.f32 1.0, %v2461
  %v2463 = vadd.f32 %v2440, %v1845
  %2465 = vrot.lane.b32.xlu0 %v2463, 64
  %v2466 = vpop.permute.xlu0 %2465
  %v2468 = vmul.f32 %v2451, %v2466
  %v2469 = vadd.f32 %v2400, %v2468
  %v2470 = vtanh.pop %v2469
  %v2471 = vsub.f32 1.0, %v2462
  %v2472 = vmul.f32 %v2471, %v2470
  %v2473 = vmul.f32 %v2462, %v2397
  %v2474 = vadd.f32 %v2472, %v2473
  %v2475 = vld [vmem:[#allocation3 + $0x68] sm:$0xff]
  %v2476 = vld [vmem:[%s1684 + $0x68] sm:$0xff]
  %v2477 = vld [vmem:[%s1745 + $0x68] sm:$0xff]
  %v2478 = vpack.c.bf16 %v2474, %v2474
  %v2480 = vsel %vm360, %v2478, 0
  %2482 = vmatprep.subr.bf16.mxu0 0
  %2483 = vmatpush1.bf16.msra.mxu0 %v1782
  %2484 = vmatprep.subr.bf16.mxu0 0
  %2485 = vmatpush1.bf16.msra.mxu0 %v1783
  %2486 = vmatprep.subr.bf16.mxu0 0
  %2487 = vmatpush1.bf16.msra.mxu0 0
  %2488 = vmatprep.subr.bf16.mxu0 0
  %2489 = vmatpush1.bf16.msra.mxu0 0
  %2490 = vmatprep.subr.bf16.mxu0 0
  %2491 = vmatpush1.bf16.msra.mxu0 0
  %2492 = vmatprep.subr.bf16.mxu0 0
  %2493 = vmatpush1.bf16.msra.mxu0 0
  %2494 = vmatprep.subr.bf16.mxu0 0
  %2495 = vmatpush1.bf16.msra.mxu0 0
  %2496 = vmatprep.subr.bf16.mxu0 0
  %2497 = vmatpush1.bf16.msra.mxu0 0
  %2498 = vmatprep.subr.bf16.mxu0 0
  %2499 = vmatpush1.bf16.msra.mxu0 0
  %2500 = vmatprep.subr.bf16.mxu0 0
  %2501 = vmatpush1.bf16.msra.mxu0 0
  %2502 = vmatprep.subr.bf16.mxu0 0
  %2503 = vmatpush1.bf16.msra.mxu0 0
  %2504 = vmatprep.subr.bf16.mxu0 0
  %2505 = vmatpush1.bf16.msra.mxu0 0
  %2506 = vmatprep.subr.bf16.mxu0 0
  %2507 = vmatpush1.bf16.msra.mxu0 0
  %2508 = vmatprep.subr.bf16.mxu0 0
  %2509 = vmatpush1.bf16.msra.mxu0 0
  %2510 = vmatprep.subr.bf16.mxu0 0
  %2511 = vmatpush1.bf16.msra.mxu0 0
  %2512 = vmatprep.subr.bf16.mxu0 0
  %2513 = vmatpush1.bf16.msra.mxu0 0
  %2514 = vmatprep.mubr.bf16.mxu0 0
  %2515 = vmatmul.mubr.bf16.gmra.mrb[0].mxu0 %v2480
  %v2516 = vpop.f32.mrb[0].mxu0
  %v2517 = vadd.f32 0.0, %v2516
  %v2518 = vpop.f32.mrb[0].mxu0
  %v2519 = vpop.f32.mrb[0].mxu0
  %v2520 = vpop.f32.mrb[0].mxu0
  %2521 = vdwg.mxu0
  %v2522 = vadd.f32 %v2475, %v2517
  %v2523 = vxor.u32 %v2522, 2147483648
  %v2524 = vmul.f32 %v2523, 1.442695
  %v2525 = vpow.pop %v2524
  %v2526 = vadd.f32 %v2525, 1.0
  %v2527 = vrcp.pop %v2526
  %v2528 = vmul.f32 1.0, %v2527
  %2530 = vrot.lane.b32.xlu0 %v2517, 96
  %v2531 = vpop.permute.xlu0 %2530
  %v2533 = vadd.f32 %v2476, %v2531
  %v2534 = vxor.u32 %v2533, 2147483648
  %v2535 = vmul.f32 %v2534, 1.442695
  %v2536 = vpow.pop %v2535
  %v2537 = vadd.f32 %v2536, 1.0
  %v2538 = vrcp.pop %v2537
  %v2539 = vmul.f32 1.0, %v2538
  %v2540 = vadd.f32 %v2517, %v1845
  %2542 = vrot.lane.b32.xlu0 %v2540, 64
  %v2543 = vpop.permute.xlu0 %2542
  %v2545 = vmul.f32 %v2528, %v2543
  %v2546 = vadd.f32 %v2477, %v2545
  %v2547 = vtanh.pop %v2546
  %v2548 = vsub.f32 1.0, %v2539
  %v2549 = vmul.f32 %v2548, %v2547
  %v2550 = vmul.f32 %v2539, %v2474
  %v2551 = vadd.f32 %v2549, %v2550
  %v2552 = vld [vmem:[#allocation3 + $0x10] sm:$0xff]
  %v2553 = vld [vmem:[%s1684 + $0x10] sm:$0xff]
  %v2554 = vld [vmem:[%s1745 + $0x10] sm:$0xff]
  %v2555 = vpack.c.bf16 %v2551, %v2551
  %v2557 = vsel %vm360, %v2555, 0
  %2559 = vmatprep.subr.bf16.mxu0 0
  %2560 = vmatpush1.bf16.msra.mxu0 %v1782
  %2561 = vmatprep.subr.bf16.mxu0 0
  %2562 = vmatpush1.bf16.msra.mxu0 %v1783
  %2563 = vmatprep.subr.bf16.mxu0 0
  %2564 = vmatpush1.bf16.msra.mxu0 0
  %2565 = vmatprep.subr.bf16.mxu0 0
  %2566 = vmatpush1.bf16.msra.mxu0 0
  %2567 = vmatprep.subr.bf16.mxu0 0
  %2568 = vmatpush1.bf16.msra.mxu0 0
  %2569 = vmatprep.subr.bf16.mxu0 0
  %2570 = vmatpush1.bf16.msra.mxu0 0
  %2571 = vmatprep.subr.bf16.mxu0 0
  %2572 = vmatpush1.bf16.msra.mxu0 0
  %2573 = vmatprep.subr.bf16.mxu0 0
  %2574 = vmatpush1.bf16.msra.mxu0 0
  %2575 = vmatprep.subr.bf16.mxu0 0
  %2576 = vmatpush1.bf16.msra.mxu0 0
  %2577 = vmatprep.subr.bf16.mxu0 0
  %2578 = vmatpush1.bf16.msra.mxu0 0
  %2579 = vmatprep.subr.bf16.mxu0 0
  %2580 = vmatpush1.bf16.msra.mxu0 0
  %2581 = vmatprep.subr.bf16.mxu0 0
  %2582 = vmatpush1.bf16.msra.mxu0 0
  %2583 = vmatprep.subr.bf16.mxu0 0
  %2584 = vmatpush1.bf16.msra.mxu0 0
  %2585 = vmatprep.subr.bf16.mxu0 0
  %2586 = vmatpush1.bf16.msra.mxu0 0
  %2587 = vmatprep.subr.bf16.mxu0 0
  %2588 = vmatpush1.bf16.msra.mxu0 0
  %2589 = vmatprep.subr.bf16.mxu0 0
  %2590 = vmatpush1.bf16.msra.mxu0 0
  %2591 = vmatprep.mubr.bf16.mxu0 0
  %2592 = vmatmul.mubr.bf16.gmra.mrb[0].mxu0 %v2557
  %v2593 = vpop.f32.mrb[0].mxu0
  %v2594 = vadd.f32 0.0, %v2593
  %v2595 = vpop.f32.mrb[0].mxu0
  %v2596 = vpop.f32.mrb[0].mxu0
  %v2597 = vpop.f32.mrb[0].mxu0
  %2598 = vdwg.mxu0
  %v2599 = vadd.f32 %v2552, %v2594
  %v2600 = vxor.u32 %v2599, 2147483648
  %v2601 = vmul.f32 %v2600, 1.442695
  %v2602 = vpow.pop %v2601
  %v2603 = vadd.f32 %v2602, 1.0
  %v2604 = vrcp.pop %v2603
  %v2605 = vmul.f32 1.0, %v2604
  %2607 = vrot.lane.b32.xlu0 %v2594, 96
  %v2608 = vpop.permute.xlu0 %2607
  %v2610 = vadd.f32 %v2553, %v2608
  %v2611 = vxor.u32 %v2610, 2147483648
  %v2612 = vmul.f32 %v2611, 1.442695
  %v2613 = vpow.pop %v2612
  %v2614 = vadd.f32 %v2613, 1.0
  %v2615 = vrcp.pop %v2614
  %v2616 = vmul.f32 1.0, %v2615
  %v2617 = vadd.f32 %v2594, %v1845
  %2619 = vrot.lane.b32.xlu0 %v2617, 64
  %v2620 = vpop.permute.xlu0 %2619
  %v2622 = vmul.f32 %v2605, %v2620
  %v2623 = vadd.f32 %v2554, %v2622
  %v2624 = vtanh.pop %v2623
  %v2625 = vsub.f32 1.0, %v2616
  %v2626 = vmul.f32 %v2625, %v2624
  %v2627 = vmul.f32 %v2616, %v2551
  %v2628 = vadd.f32 %v2626, %v2627
  %v2629 = vld [vmem:[#allocation3 + $0x28] sm:$0xff]
  %v2630 = vld [vmem:[%s1684 + $0x28] sm:$0xff]
  %v2631 = vld [vmem:[%s1745 + $0x28] sm:$0xff]
  %v2632 = vpack.c.bf16 %v2628, %v2628
  %v2634 = vsel %vm360, %v2632, 0
  %2636 = vmatprep.subr.bf16.mxu0 0
  %2637 = vmatpush1.bf16.msra.mxu0 %v1782
  %2638 = vmatprep.subr.bf16.mxu0 0
  %2639 = vmatpush1.bf16.msra.mxu0 %v1783
  %2640 = vmatprep.subr.bf16.mxu0 0
  %2641 = vmatpush1.bf16.msra.mxu0 0
  %2642 = vmatprep.subr.bf16.mxu0 0
  %2643 = vmatpush1.bf16.msra.mxu0 0
  %2644 = vmatprep.subr.bf16.mxu0 0
  %2645 = vmatpush1.bf16.msra.mxu0 0
  %2646 = vmatprep.subr.bf16.mxu0 0
  %2647 = vmatpush1.bf16.msra.mxu0 0
  %2648 = vmatprep.subr.bf16.mxu0 0
  %2649 = vmatpush1.bf16.msra.mxu0 0
  %2650 = vmatprep.subr.bf16.mxu0 0
  %2651 = vmatpush1.bf16.msra.mxu0 0
  %2652 = vmatprep.subr.bf16.mxu0 0
  %2653 = vmatpush1.bf16.msra.mxu0 0
  %2654 = vmatprep.subr.bf16.mxu0 0
  %2655 = vmatpush1.bf16.msra.mxu0 0
  %2656 = vmatprep.subr.bf16.mxu0 0
  %2657 = vmatpush1.bf16.msra.mxu0 0
  %2658 = vmatprep.subr.bf16.mxu0 0
  %2659 = vmatpush1.bf16.msra.mxu0 0
  %2660 = vmatprep.subr.bf16.mxu0 0
  %2661 = vmatpush1.bf16.msra.mxu0 0
  %2662 = vmatprep.subr.bf16.mxu0 0
  %2663 = vmatpush1.bf16.msra.mxu0 0
  %2664 = vmatprep.subr.bf16.mxu0 0
  %2665 = vmatpush1.bf16.msra.mxu0 0
  %2666 = vmatprep.subr.bf16.mxu0 0
  %2667 = vmatpush1.bf16.msra.mxu0 0
  %2668 = vmatprep.mubr.bf16.mxu0 0
  %2669 = vmatmul.mubr.bf16.gmra.mrb[0].mxu0 %v2634
  %v2670 = vpop.f32.mrb[0].mxu0
  %v2671 = vadd.f32 0.0, %v2670
  %v2672 = vpop.f32.mrb[0].mxu0
  %v2673 = vpop.f32.mrb[0].mxu0
  %v2674 = vpop.f32.mrb[0].mxu0
  %2675 = vdwg.mxu0
  %v2676 = vadd.f32 %v2629, %v2671
  %v2677 = vxor.u32 %v2676, 2147483648
  %v2678 = vmul.f32 %v2677, 1.442695
  %v2679 = vpow.pop %v2678
  %v2680 = vadd.f32 %v2679, 1.0
  %v2681 = vrcp.pop %v2680
  %v2682 = vmul.f32 1.0, %v2681
  %2684 = vrot.lane.b32.xlu0 %v2671, 96
  %v2685 = vpop.permute.xlu0 %2684
  %v2687 = vadd.f32 %v2630, %v2685
  %v2688 = vxor.u32 %v2687, 2147483648
  %v2689 = vmul.f32 %v2688, 1.442695
  %v2690 = vpow.pop %v2689
  %v2691 = vadd.f32 %v2690, 1.0
  %v2692 = vrcp.pop %v2691
  %v2693 = vmul.f32 1.0, %v2692
  %v2694 = vadd.f32 %v2671, %v1845
  %2696 = vrot.lane.b32.xlu0 %v2694, 64
  %v2697 = vpop.permute.xlu0 %2696
  %v2699 = vmul.f32 %v2682, %v2697
  %v2700 = vadd.f32 %v2631, %v2699
  %v2701 = vtanh.pop %v2700
  %v2702 = vsub.f32 1.0, %v2693
  %v2703 = vmul.f32 %v2702, %v2701
  %v2704 = vmul.f32 %v2693, %v2628
  %v2705 = vadd.f32 %v2703, %v2704
  %v2706 = vld [vmem:[#allocation3 + $0x40] sm:$0xff]
  %v2707 = vld [vmem:[%s1684 + $0x40] sm:$0xff]
  %v2708 = vld [vmem:[%s1745 + $0x40] sm:$0xff]
  %v2709 = vpack.c.bf16 %v2705, %v2705
  %v2711 = vsel %vm360, %v2709, 0
  %2713 = vmatprep.subr.bf16.mxu0 0
  %2714 = vmatpush1.bf16.msra.mxu0 %v1782
  %2715 = vmatprep.subr.bf16.mxu0 0
  %2716 = vmatpush1.bf16.msra.mxu0 %v1783
  %2717 = vmatprep.subr.bf16.mxu0 0
  %2718 = vmatpush1.bf16.msra.mxu0 0
  %2719 = vmatprep.subr.bf16.mxu0 0
  %2720 = vmatpush1.bf16.msra.mxu0 0
  %2721 = vmatprep.subr.bf16.mxu0 0
  %2722 = vmatpush1.bf16.msra.mxu0 0
  %2723 = vmatprep.subr.bf16.mxu0 0
  %2724 = vmatpush1.bf16.msra.mxu0 0
  %2725 = vmatprep.subr.bf16.mxu0 0
  %2726 = vmatpush1.bf16.msra.mxu0 0
  %2727 = vmatprep.subr.bf16.mxu0 0
  %2728 = vmatpush1.bf16.msra.mxu0 0
  %2729 = vmatprep.subr.bf16.mxu0 0
  %2730 = vmatpush1.bf16.msra.mxu0 0
  %2731 = vmatprep.subr.bf16.mxu0 0
  %2732 = vmatpush1.bf16.msra.mxu0 0
  %2733 = vmatprep.subr.bf16.mxu0 0
  %2734 = vmatpush1.bf16.msra.mxu0 0
  %2735 = vmatprep.subr.bf16.mxu0 0
  %2736 = vmatpush1.bf16.msra.mxu0 0
  %2737 = vmatprep.subr.bf16.mxu0 0
  %2738 = vmatpush1.bf16.msra.mxu0 0
  %2739 = vmatprep.subr.bf16.mxu0 0
  %2740 = vmatpush1.bf16.msra.mxu0 0
  %2741 = vmatprep.subr.bf16.mxu0 0
  %2742 = vmatpush1.bf16.msra.mxu0 0
  %2743 = vmatprep.subr.bf16.mxu0 0
  %2744 = vmatpush1.bf16.msra.mxu0 0
  %2745 = vmatprep.mubr.bf16.mxu0 0
  %2746 = vmatmul.mubr.bf16.gmra.mrb[0].mxu0 %v2711
  %v2747 = vpop.f32.mrb[0].mxu0
  %v2748 = vadd.f32 0.0, %v2747
  %v2749 = vpop.f32.mrb[0].mxu0
  %v2750 = vpop.f32.mrb[0].mxu0
  %v2751 = vpop.f32.mrb[0].mxu0
  %2752 = vdwg.mxu0
  %v2753 = vadd.f32 %v2706, %v2748
  %v2754 = vxor.u32 %v2753, 2147483648
  %v2755 = vmul.f32 %v2754, 1.442695
  %v2756 = vpow.pop %v2755
  %v2757 = vadd.f32 %v2756, 1.0
  %v2758 = vrcp.pop %v2757
  %v2759 = vmul.f32 1.0, %v2758
  %2761 = vrot.lane.b32.xlu0 %v2748, 96
  %v2762 = vpop.permute.xlu0 %2761
  %v2764 = vadd.f32 %v2707, %v2762
  %v2765 = vxor.u32 %v2764, 2147483648
  %v2766 = vmul.f32 %v2765, 1.442695
  %v2767 = vpow.pop %v2766
  %v2768 = vadd.f32 %v2767, 1.0
  %v2769 = vrcp.pop %v2768
  %v2770 = vmul.f32 1.0, %v2769
  %v2771 = vadd.f32 %v2748, %v1845
  %2773 = vrot.lane.b32.xlu0 %v2771, 64
  %v2774 = vpop.permute.xlu0 %2773
  %v2776 = vmul.f32 %v2759, %v2774
  %v2777 = vadd.f32 %v2708, %v2776
  %v2778 = vtanh.pop %v2777
  %v2779 = vsub.f32 1.0, %v2770
  %v2780 = vmul.f32 %v2779, %v2778
  %v2781 = vmul.f32 %v2770, %v2705
  %v2782 = vadd.f32 %v2780, %v2781
  %v2783 = vld [vmem:[#allocation3 + $0x58] sm:$0xff]
  %v2784 = vld [vmem:[%s1684 + $0x58] sm:$0xff]
  %v2785 = vld [vmem:[%s1745 + $0x58] sm:$0xff]
  %v2786 = vpack.c.bf16 %v2782, %v2782
  %v2788 = vsel %vm360, %v2786, 0
  %2790 = vmatprep.subr.bf16.mxu0 0
  %2791 = vmatpush1.bf16.msra.mxu0 %v1782
  %2792 = vmatprep.subr.bf16.mxu0 0
  %2793 = vmatpush1.bf16.msra.mxu0 %v1783
  %2794 = vmatprep.subr.bf16.mxu0 0
  %2795 = vmatpush1.bf16.msra.mxu0 0
  %2796 = vmatprep.subr.bf16.mxu0 0
  %2797 = vmatpush1.bf16.msra.mxu0 0
  %2798 = vmatprep.subr.bf16.mxu0 0
  %2799 = vmatpush1.bf16.msra.mxu0 0
  %2800 = vmatprep.subr.bf16.mxu0 0
  %2801 = vmatpush1.bf16.msra.mxu0 0
  %2802 = vmatprep.subr.bf16.mxu0 0
  %2803 = vmatpush1.bf16.msra.mxu0 0
  %2804 = vmatprep.subr.bf16.mxu0 0
  %2805 = vmatpush1.bf16.msra.mxu0 0
  %2806 = vmatprep.subr.bf16.mxu0 0
  %2807 = vmatpush1.bf16.msra.mxu0 0
  %2808 = vmatprep.subr.bf16.mxu0 0
  %2809 = vmatpush1.bf16.msra.mxu0 0
  %2810 = vmatprep.subr.bf16.mxu0 0
  %2811 = vmatpush1.bf16.msra.mxu0 0
  %2812 = vmatprep.subr.bf16.mxu0 0
  %2813 = vmatpush1.bf16.msra.mxu0 0
  %2814 = vmatprep.subr.bf16.mxu0 0
  %2815 = vmatpush1.bf16.msra.mxu0 0
  %2816 = vmatprep.subr.bf16.mxu0 0
  %2817 = vmatpush1.bf16.msra.mxu0 0
  %2818 = vmatprep.subr.bf16.mxu0 0
  %2819 = vmatpush1.bf16.msra.mxu0 0
  %2820 = vmatprep.subr.bf16.mxu0 0
  %2821 = vmatpush1.bf16.msra.mxu0 0
  %2822 = vmatprep.mubr.bf16.mxu0 0
  %2823 = vmatmul.mubr.bf16.gmra.mrb[0].mxu0 %v2788
  %v2824 = vpop.f32.mrb[0].mxu0
  %v2825 = vadd.f32 0.0, %v2824
  %v2826 = vpop.f32.mrb[0].mxu0
  %v2827 = vpop.f32.mrb[0].mxu0
  %v2828 = vpop.f32.mrb[0].mxu0
  %2829 = vdwg.mxu0
  %v2830 = vadd.f32 %v2783, %v2825
  %v2831 = vxor.u32 %v2830, 2147483648
  %v2832 = vmul.f32 %v2831, 1.442695
  %v2833 = vpow.pop %v2832
  %v2834 = vadd.f32 %v2833, 1.0
  %v2835 = vrcp.pop %v2834
  %v2836 = vmul.f32 1.0, %v2835
  %2838 = vrot.lane.b32.xlu0 %v2825, 96
  %v2839 = vpop.permute.xlu0 %2838
  %v2841 = vadd.f32 %v2784, %v2839
  %v2842 = vxor.u32 %v2841, 2147483648
  %v2843 = vmul.f32 %v2842, 1.442695
  %v2844 = vpow.pop %v2843
  %v2845 = vadd.f32 %v2844, 1.0
  %v2846 = vrcp.pop %v2845
  %v2847 = vmul.f32 1.0, %v2846
  %v2848 = vadd.f32 %v2825, %v1845
  %2850 = vrot.lane.b32.xlu0 %v2848, 64
  %v2851 = vpop.permute.xlu0 %2850
  %v2853 = vmul.f32 %v2836, %v2851
  %v2854 = vadd.f32 %v2785, %v2853
  %v2855 = vtanh.pop %v2854
  %v2856 = vsub.f32 1.0, %v2847
  %v2857 = vmul.f32 %v2856, %v2855
  %v2858 = vmul.f32 %v2847, %v2782
  %v2859 = vadd.f32 %v2857, %v2858
  %v2860 = vld [vmem:[#allocation3 + $0x70] sm:$0xff]
  %v2861 = vld [vmem:[%s1684 + $0x70] sm:$0xff]
  %v2862 = vld [vmem:[%s1745 + $0x70] sm:$0xff]
  %v2863 = vpack.c.bf16 %v2859, %v2859
  %v2865 = vsel %vm360, %v2863, 0
  %2867 = vmatprep.subr.bf16.mxu0 0
  %2868 = vmatpush1.bf16.msra.mxu0 %v1782
  %2869 = vmatprep.subr.bf16.mxu0 0
  %2870 = vmatpush1.bf16.msra.mxu0 %v1783
  %2871 = vmatprep.subr.bf16.mxu0 0
  %2872 = vmatpush1.bf16.msra.mxu0 0
  %2873 = vmatprep.subr.bf16.mxu0 0
  %2874 = vmatpush1.bf16.msra.mxu0 0
  %2875 = vmatprep.subr.bf16.mxu0 0
  %2876 = vmatpush1.bf16.msra.mxu0 0
  %2877 = vmatprep.subr.bf16.mxu0 0
  %2878 = vmatpush1.bf16.msra.mxu0 0
  %2879 = vmatprep.subr.bf16.mxu0 0
  %2880 = vmatpush1.bf16.msra.mxu0 0
  %2881 = vmatprep.subr.bf16.mxu0 0
  %2882 = vmatpush1.bf16.msra.mxu0 0
  %2883 = vmatprep.subr.bf16.mxu0 0
  %2884 = vmatpush1.bf16.msra.mxu0 0
  %2885 = vmatprep.subr.bf16.mxu0 0
  %2886 = vmatpush1.bf16.msra.mxu0 0
  %2887 = vmatprep.subr.bf16.mxu0 0
  %2888 = vmatpush1.bf16.msra.mxu0 0
  %2889 = vmatprep.subr.bf16.mxu0 0
  %2890 = vmatpush1.bf16.msra.mxu0 0
  %2891 = vmatprep.subr.bf16.mxu0 0
  %2892 = vmatpush1.bf16.msra.mxu0 0
  %2893 = vmatprep.subr.bf16.mxu0 0
  %2894 = vmatpush1.bf16.msra.mxu0 0
  %2895 = vmatprep.subr.bf16.mxu0 0
  %2896 = vmatpush1.bf16.msra.mxu0 0
  %2897 = vmatprep.subr.bf16.mxu0 0
  %2898 = vmatpush1.bf16.msra.mxu0 0
  %2899 = vmatprep.mubr.bf16.mxu0 0
  %2900 = vmatmul.mubr.bf16.gmra.mrb[0].mxu0 %v2865
  %v2901 = vpop.f32.mrb[0].mxu0
  %v2902 = vadd.f32 0.0, %v2901
  %v2903 = vpop.f32.mrb[0].mxu0
  %v2904 = vpop.f32.mrb[0].mxu0
  %v2905 = vpop.f32.mrb[0].mxu0
  %2906 = vdwg.mxu0
  %v2907 = vadd.f32 %v2860, %v2902
  %v2908 = vxor.u32 %v2907, 2147483648
  %v2909 = vmul.f32 %v2908, 1.442695
  %v2910 = vpow.pop %v2909
  %v2911 = vadd.f32 %v2910, 1.0
  %v2912 = vrcp.pop %v2911
  %v2913 = vmul.f32 1.0, %v2912
  %2915 = vrot.lane.b32.xlu0 %v2902, 96
  %v2916 = vpop.permute.xlu0 %2915
  %v2918 = vadd.f32 %v2861, %v2916
  %v2919 = vxor.u32 %v2918, 2147483648
  %v2920 = vmul.f32 %v2919, 1.442695
  %v2921 = vpow.pop %v2920
  %v2922 = vadd.f32 %v2921, 1.0
  %v2923 = vrcp.pop %v2922
  %v2924 = vmul.f32 1.0, %v2923
  %v2925 = vadd.f32 %v2902, %v1845
  %2927 = vrot.lane.b32.xlu0 %v2925, 64
  %v2928 = vpop.permute.xlu0 %2927
  %v2930 = vmul.f32 %v2913, %v2928
  %v2931 = vadd.f32 %v2862, %v2930
  %v2932 = vtanh.pop %v2931
  %v2933 = vsub.f32 1.0, %v2924
  %v2934 = vmul.f32 %v2933, %v2932
  %v2935 = vmul.f32 %v2924, %v2859
  %v2936 = vadd.f32 %v2934, %v2935
  %v2937 = vpack.c.bf16 %v2936, %v2936
  %v2938 = vld [vmem:[%s11] sm:$0xf]
  %v2939 = vld [vmem:[%s11 + $0x4] sm:$0xf]
  %v2940 = vld [vmem:[%s11 + $0x8] sm:$0xf]
  %v2941 = vld [vmem:[%s11 + $0xc] sm:$0xf]
  %v2942 = vld [vmem:[%s12] sm:$0x1]
  %v2944 = vlaneseq
  %v2945 = vshrl.u32 %v2944, 7
  %v2946 = vsub.s32 0, %v2945
  %v2947 = vrot.slane %v2942, %v2946
  %v2953 = vunpack.c.l.b16 %v2938
  %v2954 = vunpack.c.l.b16 %v2939
  %v2955 = vunpack.c.l.b16 %v2940
  %v2956 = vunpack.c.l.b16 %v2941
  %v2957 = vpack.c.b16 %v2954, %v2953
  %v2958 = vpack.c.b16 %v2956, %v2955
  %v2962 = vsel %vm360, %v2937, 0
  %2964 = vmatprep.subr.bf16.mxu0 0
  %2965 = vmatpush1.bf16.msra.mxu0 %v2957
  %2966 = vmatprep.subr.bf16.mxu0 0
  %2967 = vmatpush1.bf16.msra.mxu0 %v2958
  %2968 = vmatprep.subr.bf16.mxu0 0
  %2969 = vmatpush1.bf16.msra.mxu0 0
  %2970 = vmatprep.subr.bf16.mxu0 0
  %2971 = vmatpush1.bf16.msra.mxu0 0
  %2972 = vmatprep.subr.bf16.mxu0 0
  %2973 = vmatpush1.bf16.msra.mxu0 0
  %2974 = vmatprep.subr.bf16.mxu0 0
  %2975 = vmatpush1.bf16.msra.mxu0 0
  %2976 = vmatprep.subr.bf16.mxu0 0
  %2977 = vmatpush1.bf16.msra.mxu0 0
  %2978 = vmatprep.subr.bf16.mxu0 0
  %2979 = vmatpush1.bf16.msra.mxu0 0
  %2980 = vmatprep.subr.bf16.mxu0 0
  %2981 = vmatpush1.bf16.msra.mxu0 0
  %2982 = vmatprep.subr.bf16.mxu0 0
  %2983 = vmatpush1.bf16.msra.mxu0 0
  %2984 = vmatprep.subr.bf16.mxu0 0
  %2985 = vmatpush1.bf16.msra.mxu0 0
  %2986 = vmatprep.subr.bf16.mxu0 0
  %2987 = vmatpush1.bf16.msra.mxu0 0
  %2988 = vmatprep.subr.bf16.mxu0 0
  %2989 = vmatpush1.bf16.msra.mxu0 0
  %2990 = vmatprep.subr.bf16.mxu0 0
  %2991 = vmatpush1.bf16.msra.mxu0 0
  %2992 = vmatprep.subr.bf16.mxu0 0
  %2993 = vmatpush1.bf16.msra.mxu0 0
  %2994 = vmatprep.subr.bf16.mxu0 0
  %2995 = vmatpush1.bf16.msra.mxu0 0
  %2996 = vmatprep.mubr.bf16.mxu0 0
  %2997 = vmatmul.mubr.bf16.gmra.mrb[0].mxu0 %v2962
  %v2998 = vpop.f32.mrb[0].mxu0
  %v2999 = vadd.f32 %v2947, %v2998
  %v3000 = vpop.f32.mrb[0].mxu0
  %v3001 = vpop.f32.mrb[0].mxu0
  %v3002 = vpop.f32.mrb[0].mxu0
  %3003 = vdwg.mxu0
  %v3004 = vld [vmem:[%s1] sm:$0xff]
  %v3005 = vld [vmem:[%s1 + $0x8] sm:$0xff]
  %v3006 = vld [vmem:[%s1 + $0x10] sm:$0xff]
  %v3007 = vld [vmem:[%s1 + $0x18] sm:$0xff]
  %v3008 = vld [vmem:[%s1 + $0x20] sm:$0xff]
  %v3009 = vld [vmem:[%s1 + $0x28] sm:$0xff]
  %3010 = vset.pattern.permute.xlu0 0
  %3011 = vperm.xlu0 %3010, %v3004
  %v3012 = vpop.permute.xlu0 %3011
  %3013 = vset.pattern.permute.xlu0 0
  %3014 = vperm.xlu0 %3013, %v3005
  %v3015 = vpop.permute.xlu0 %3014
  %3016 = vset.pattern.permute.xlu0 0
  %3017 = vperm.xlu0 %3016, %v3006
  %v3018 = vpop.permute.xlu0 %3017
  %3019 = vset.pattern.permute.xlu0 0
  %3020 = vperm.xlu0 %3019, %v3007
  %v3021 = vpop.permute.xlu0 %3020
  %3022 = vset.pattern.permute.xlu0 0
  %3023 = vperm.xlu0 %3022, %v3008
  %v3024 = vpop.permute.xlu0 %3023
  %3025 = vset.pattern.permute.xlu0 0
  %3026 = vperm.xlu0 %3025, %v3009
  %v3027 = vpop.permute.xlu0 %3026
  %vm3028 = vcmp.eq.s32.totalorder %v3012, %v85
  %vm3029 = vcmp.eq.s32.totalorder %v3015, %v85
  %vm3030 = vcmp.eq.s32.totalorder %v3018, %v85
  %vm3031 = vcmp.eq.s32.totalorder %v3021, %v85
  %vm3032 = vcmp.eq.s32.totalorder %v3024, %v85
  %vm3033 = vcmp.eq.s32.totalorder %v3027, %v85
  %v3034 = vsel %vm3028, 1.0, 0.0
  %v3035 = vsel %vm3029, 1.0, 0.0
  %v3036 = vsel %vm3030, 1.0, 0.0
  %v3037 = vsel %vm3031, 1.0, 0.0
  %v3038 = vsel %vm3032, 1.0, 0.0
  %v3039 = vsel %vm3033, 1.0, 0.0
  %v3040 = vpack.c.bf16 %v3035, %v3034
  %v3041 = vpack.c.bf16 %v3037, %v3036
  %v3042 = vpack.c.bf16 %v3039, %v3038
  %v3043 = vld [vmem:[%s13] sm:$0xf]
  %v3044 = vld [vmem:[%s13 + $0x4] sm:$0xf]
  %v3045 = vld [vmem:[%s13 + $0x8] sm:$0xf]
  %v3046 = vld [vmem:[%s13 + $0xc] sm:$0xf]
  %v3047 = vld [vmem:[%s13 + $0x10] sm:$0xf]
  %v3048 = vld [vmem:[%s13 + $0x14] sm:$0xf]
  %v3049 = vld [vmem:[%s13 + $0x18] sm:$0xf]
  %v3050 = vld [vmem:[%s13 + $0x1c] sm:$0xf]
  %v3051 = vld [vmem:[%s13 + $0x20] sm:$0xf]
  %v3052 = vld [vmem:[%s13 + $0x24] sm:$0xf]
  %v3053 = vld [vmem:[%s13 + $0x28] sm:$0xf]
  %v3054 = vld [vmem:[%s13 + $0x2c] sm:$0xf]
  %v3055 = vld [vmem:[%s13 + $0x30] sm:$0xf]
  %v3056 = vld [vmem:[%s13 + $0x34] sm:$0xf]
  %v3057 = vld [vmem:[%s13 + $0x38] sm:$0xf]
  %v3058 = vld [vmem:[%s13 + $0x3c] sm:$0xf]
  %v3075 = vunpack.c.l.b16 %v3043
  %v3076 = vunpack.c.l.b16 %v3044
  %v3077 = vunpack.c.l.b16 %v3045
  %v3078 = vunpack.c.l.b16 %v3046
  %v3079 = vunpack.c.l.b16 %v3047
  %v3080 = vunpack.c.l.b16 %v3048
  %v3081 = vunpack.c.l.b16 %v3049
  %v3082 = vunpack.c.l.b16 %v3050
  %v3083 = vunpack.c.l.b16 %v3051
  %v3084 = vunpack.c.l.b16 %v3052
  %v3085 = vunpack.c.l.b16 %v3053
  %v3086 = vunpack.c.l.b16 %v3054
  %v3087 = vunpack.c.l.b16 %v3055
  %v3088 = vunpack.c.l.b16 %v3056
  %v3089 = vunpack.c.l.b16 %v3057
  %v3090 = vunpack.c.l.b16 %v3058
  %v3091 = vpack.c.b16 %v3076, %v3075
  %v3092 = vpack.c.b16 %v3078, %v3077
  %v3093 = vpack.c.b16 %v3080, %v3079
  %v3094 = vpack.c.b16 %v3082, %v3081
  %v3095 = vpack.c.b16 %v3084, %v3083
  %v3096 = vpack.c.b16 %v3086, %v3085
  %v3097 = vpack.c.b16 %v3088, %v3087
  %v3098 = vpack.c.b16 %v3090, %v3089
  %3107 = vmatprep.subr.bf16.mxu0 0
  %3108 = vmatpush1.bf16.msra.mxu0 %v3091
  %3109 = vmatprep.subr.bf16.mxu0 0
  %3110 = vmatpush1.bf16.msra.mxu0 %v3092
  %3111 = vmatprep.subr.bf16.mxu0 0
  %3112 = vmatpush1.bf16.msra.mxu0 %v3093
  %3113 = vmatprep.subr.bf16.mxu0 0
  %3114 = vmatpush1.bf16.msra.mxu0 %v3094
  %3115 = vmatprep.subr.bf16.mxu0 0
  %3116 = vmatpush1.bf16.msra.mxu0 %v3095
  %3117 = vmatprep.subr.bf16.mxu0 0
  %3118 = vmatpush1.bf16.msra.mxu0 %v3096
  %3119 = vmatprep.subr.bf16.mxu0 0
  %3120 = vmatpush1.bf16.msra.mxu0 %v3097
  %3121 = vmatprep.subr.bf16.mxu0 0
  %3122 = vmatpush1.bf16.msra.mxu0 %v3098
  %3123 = vmatprep.subr.bf16.mxu0 0
  %3124 = vmatpush1.bf16.msra.mxu0 0
  %3125 = vmatprep.subr.bf16.mxu0 0
  %3126 = vmatpush1.bf16.msra.mxu0 0
  %3127 = vmatprep.subr.bf16.mxu0 0
  %3128 = vmatpush1.bf16.msra.mxu0 0
  %3129 = vmatprep.subr.bf16.mxu0 0
  %3130 = vmatpush1.bf16.msra.mxu0 0
  %3131 = vmatprep.subr.bf16.mxu0 0
  %3132 = vmatpush1.bf16.msra.mxu0 0
  %3133 = vmatprep.subr.bf16.mxu0 0
  %3134 = vmatpush1.bf16.msra.mxu0 0
  %3135 = vmatprep.subr.bf16.mxu0 0
  %3136 = vmatpush1.bf16.msra.mxu0 0
  %3137 = vmatprep.subr.bf16.mxu0 0
  %3138 = vmatpush1.bf16.msra.mxu0 0
  %3139 = vmatprep.mubr.bf16.mxu0 0
  %3140 = vmatmul.mubr.bf16.gmra.mrb[0].mxu0 %v3040
  %v3141 = vpop.f32.mrb[0].mxu0
  %v3142 = vadd.f32 0.0, %v3141
  %v3143 = vpop.f32.mrb[0].mxu0
  %v3144 = vpop.f32.mrb[0].mxu0
  %v3145 = vadd.f32 0.0, %v3144
  %v3146 = vpop.f32.mrb[0].mxu0
  %3147 = vmatprep.mubr.bf16.mxu0 0
  %3148 = vmatmul.mubr.bf16.gmra.mrb[0].mxu0 %v3041
  %v3149 = vpop.f32.mrb[0].mxu0
  %v3150 = vadd.f32 0.0, %v3149
  %v3151 = vpop.f32.mrb[0].mxu0
  %v3152 = vpop.f32.mrb[0].mxu0
  %v3153 = vadd.f32 0.0, %v3152
  %v3154 = vpop.f32.mrb[0].mxu0
  %3155 = vmatprep.mubr.bf16.mxu0 0
  %3156 = vmatmul.mubr.bf16.gmra.mrb[0].mxu0 %v3042
  %v3157 = vpop.f32.mrb[0].mxu0
  %v3158 = vadd.f32 0.0, %v3157
  %v3159 = vpop.f32.mrb[0].mxu0
  %v3160 = vpop.f32.mrb[0].mxu0
  %v3161 = vadd.f32 0.0, %v3160
  %v3162 = vpop.f32.mrb[0].mxu0
  %3163 = vdwg.mxu0
  %v3164 = vpack.c.bf16 %v3145, %v3142
  %v3165 = vpack.c.bf16 %v3153, %v3150
  %v3166 = vpack.c.bf16 %v3161, %v3158
  %v3167 = vld [vmem:[%s14] sm:$0xf]
  %v3168 = vld [vmem:[%s14 + $0x4] sm:$0xf]
  %v3169 = vld [vmem:[%s14 + $0x8] sm:$0xf]
  %v3170 = vld [vmem:[%s14 + $0xc] sm:$0xf]
  %v3171 = vld [vmem:[%s16] sm:$0x1]
  %v3173 = vlaneseq
  %v3174 = vshrl.u32 %v3173, 7
  %v3175 = vsub.s32 0, %v3174
  %v3176 = vrot.slane %v3171, %v3175
  %v3182 = vunpack.c.l.b16 %v3167
  %v3183 = vunpack.c.l.b16 %v3168
  %v3184 = vunpack.c.l.b16 %v3169
  %v3185 = vunpack.c.l.b16 %v3170
  %v3186 = vpack.c.b16 %v3183, %v3182
  %v3187 = vpack.c.b16 %v3185, %v3184
  %v3191 = vsel %vm360, %v3164, 0
  %v3194 = vsel %vm360, %v3165, 0
  %v3197 = vsel %vm360, %v3166, 0
  %3199 = vmatprep.subr.bf16.mxu0 0
  %3200 = vmatpush1.bf16.msra.mxu0 %v3186
  %3201 = vmatprep.subr.bf16.mxu0 0
  %3202 = vmatpush1.bf16.msra.mxu0 %v3187
  %3203 = vmatprep.subr.bf16.mxu0 0
  %3204 = vmatpush1.bf16.msra.mxu0 0
  %3205 = vmatprep.subr.bf16.mxu0 0
  %3206 = vmatpush1.bf16.msra.mxu0 0
  %3207 = vmatprep.subr.bf16.mxu0 0
  %3208 = vmatpush1.bf16.msra.mxu0 0
  %3209 = vmatprep.subr.bf16.mxu0 0
  %3210 = vmatpush1.bf16.msra.mxu0 0
  %3211 = vmatprep.subr.bf16.mxu0 0
  %3212 = vmatpush1.bf16.msra.mxu0 0
  %3213 = vmatprep.subr.bf16.mxu0 0
  %3214 = vmatpush1.bf16.msra.mxu0 0
  %3215 = vmatprep.subr.bf16.mxu0 0
  %3216 = vmatpush1.bf16.msra.mxu0 0
  %3217 = vmatprep.subr.bf16.mxu0 0
  %3218 = vmatpush1.bf16.msra.mxu0 0
  %3219 = vmatprep.subr.bf16.mxu0 0
  %3220 = vmatpush1.bf16.msra.mxu0 0
  %3221 = vmatprep.subr.bf16.mxu0 0
  %3222 = vmatpush1.bf16.msra.mxu0 0
  %3223 = vmatprep.subr.bf16.mxu0 0
  %3224 = vmatpush1.bf16.msra.mxu0 0
  %3225 = vmatprep.subr.bf16.mxu0 0
  %3226 = vmatpush1.bf16.msra.mxu0 0
  %3227 = vmatprep.subr.bf16.mxu0 0
  %3228 = vmatpush1.bf16.msra.mxu0 0
  %3229 = vmatprep.subr.bf16.mxu0 0
  %3230 = vmatpush1.bf16.msra.mxu0 0
  %3231 = vmatprep.mubr.bf16.mxu0 0
  %3232 = vmatmul.mubr.bf16.gmra.mrb[0].mxu0 %v3191
  %v3233 = vpop.f32.mrb[0].mxu0
  %v3234 = vadd.f32 %v3176, %v3233
  %v3235 = vpop.f32.mrb[0].mxu0
  %v3236 = vpop.f32.mrb[0].mxu0
  %v3237 = vadd.f32 %v3176, %v3236
  %v3238 = vpop.f32.mrb[0].mxu0
  %3239 = vmatprep.mubr.bf16.mxu0 0
  %3240 = vmatmul.mubr.bf16.gmra.mrb[0].mxu0 %v3194
  %v3241 = vpop.f32.mrb[0].mxu0
  %v3242 = vadd.f32 %v3176, %v3241
  %v3243 = vpop.f32.mrb[0].mxu0
  %v3244 = vpop.f32.mrb[0].mxu0
  %v3245 = vadd.f32 %v3176, %v3244
  %v3246 = vpop.f32.mrb[0].mxu0
  %3247 = vmatprep.mubr.bf16.mxu0 0
  %3248 = vmatmul.mubr.bf16.gmra.mrb[0].mxu0 %v3197
  %v3249 = vpop.f32.mrb[0].mxu0
  %v3250 = vadd.f32 %v3176, %v3249
  %v3251 = vpop.f32.mrb[0].mxu0
  %v3252 = vpop.f32.mrb[0].mxu0
  %v3253 = vadd.f32 %v3176, %v3252
  %v3254 = vpop.f32.mrb[0].mxu0
  %3255 = vdwg.mxu0
  %3256 = vst.msk [vmem:[#allocation4] sm:$0xff] %vm360, %v3234
  %3257 = vst.msk [vmem:[#allocation4 + $0x8] sm:$0xff] %vm360, %v3237
  %3258 = vst.msk [vmem:[#allocation4 + $0x10] sm:$0xff] %vm360, %v3242
  %3259 = vst.msk [vmem:[#allocation4 + $0x18] sm:$0xff] %vm360, %v3245
  %3260 = vst.msk [vmem:[#allocation4 + $0x20] sm:$0xff] %vm360, %v3250
  %3261 = vst.msk [vmem:[#allocation4 + $0x28] sm:$0xff] %vm360, %v3253
  %3268 = vrot.lane.b32.xlu0 %v3234, 96
  %v3269 = vpop.permute.xlu0 %3268
  %3270 = vrot.lane.b32.xlu0 %v3237, 96
  %v3271 = vpop.permute.xlu0 %3270
  %3272 = vrot.lane.b32.xlu0 %v3242, 96
  %v3273 = vpop.permute.xlu0 %3272
  %3274 = vrot.lane.b32.xlu0 %v3245, 96
  %v3275 = vpop.permute.xlu0 %3274
  %3276 = vrot.lane.b32.xlu0 %v3250, 96
  %v3277 = vpop.permute.xlu0 %3276
  %3278 = vrot.lane.b32.xlu0 %v3253, 96
  %v3279 = vpop.permute.xlu0 %3278
  %s3286 = scalar_lea.vmem [#allocation4], 48
  %3287 = vst.msk [vmem:[%s3286] sm:$0xff] %vm360, %v3269
  %3288 = vst.msk [vmem:[%s3286 + $0x8] sm:$0xff] %vm360, %v3271
  %3289 = vst.msk [vmem:[%s3286 + $0x10] sm:$0xff] %vm360, %v3273
  %3290 = vst.msk [vmem:[%s3286 + $0x18] sm:$0xff] %vm360, %v3275
  %3291 = vst.msk [vmem:[%s3286 + $0x20] sm:$0xff] %vm360, %v3277
  %3292 = vst.msk [vmem:[%s3286 + $0x28] sm:$0xff] %vm360, %v3279
  %3293 = vrot.lane.b32.xlu0 %v3234, 64
  %v3294 = vpop.permute.xlu0 %3293
  %3295 = vrot.lane.b32.xlu0 %v3237, 64
  %v3296 = vpop.permute.xlu0 %3295
  %3297 = vrot.lane.b32.xlu0 %v3242, 64
  %v3298 = vpop.permute.xlu0 %3297
  %3299 = vrot.lane.b32.xlu0 %v3245, 64
  %v3300 = vpop.permute.xlu0 %3299
  %3301 = vrot.lane.b32.xlu0 %v3250, 64
  %v3302 = vpop.permute.xlu0 %3301
  %3303 = vrot.lane.b32.xlu0 %v3253, 64
  %v3304 = vpop.permute.xlu0 %3303
  %s3311 = scalar_lea.vmem [#allocation4], 96
  %3312 = vst.msk [vmem:[%s3311] sm:$0xff] %vm360, %v3294
  %3313 = vst.msk [vmem:[%s3311 + $0x8] sm:$0xff] %vm360, %v3296
  %3314 = vst.msk [vmem:[%s3311 + $0x10] sm:$0xff] %vm360, %v3298
  %3315 = vst.msk [vmem:[%s3311 + $0x18] sm:$0xff] %vm360, %v3300
  %3316 = vst.msk [vmem:[%s3311 + $0x20] sm:$0xff] %vm360, %v3302
  %3317 = vst.msk [vmem:[%s3311 + $0x28] sm:$0xff] %vm360, %v3304
  %v3318 = vld [vmem:[%s15] sm:$0xf]
  %v3319 = vld [vmem:[%s15 + $0x4] sm:$0xf]
  %v3320 = vld [vmem:[%s15 + $0x8] sm:$0xf]
  %v3321 = vld [vmem:[%s15 + $0xc] sm:$0xf]
  %v3322 = vld [vmem:[%s17] sm:$0x1]
  %v3324 = vlaneseq
  %v3325 = vshrl.u32 %v3324, 7
  %v3326 = vsub.s32 0, %v3325
  %v3327 = vrot.slane %v3322, %v3326
  %v3328 = vld [vmem:[#allocation4] sm:$0xff]
  %v3329 = vld [vmem:[%s3286] sm:$0xff]
  %v3330 = vld [vmem:[%s3311] sm:$0xff]
  %v3331 = vpack.c.bf16 %v2999, %v2999
  %v3336 = vunpack.c.l.b16 %v3318
  %v3337 = vunpack.c.l.b16 %v3319
  %v3338 = vunpack.c.l.b16 %v3320
  %v3339 = vunpack.c.l.b16 %v3321
  %v3340 = vpack.c.b16 %v3337, %v3336
  %v3341 = vpack.c.b16 %v3339, %v3338
  %v3345 = vsel %vm360, %v3331, 0
  %3347 = vmatprep.subr.bf16.mxu0 0
  %3348 = vmatpush1.bf16.msra.mxu0 %v3340
  %3349 = vmatprep.subr.bf16.mxu0 0
  %3350 = vmatpush1.bf16.msra.mxu0 %v3341
  %3351 = vmatprep.subr.bf16.mxu0 0
  %3352 = vmatpush1.bf16.msra.mxu0 0
  %3353 = vmatprep.subr.bf16.mxu0 0
  %3354 = vmatpush1.bf16.msra.mxu0 0
  %3355 = vmatprep.subr.bf16.mxu0 0
  %3356 = vmatpush1.bf16.msra.mxu0 0
  %3357 = vmatprep.subr.bf16.mxu0 0
  %3358 = vmatpush1.bf16.msra.mxu0 0
  %3359 = vmatprep.subr.bf16.mxu0 0
  %3360 = vmatpush1.bf16.msra.mxu0 0
  %3361 = vmatprep.subr.bf16.mxu0 0
  %3362 = vmatpush1.bf16.msra.mxu0 0
  %3363 = vmatprep.subr.bf16.mxu0 0
  %3364 = vmatpush1.bf16.msra.mxu0 0
  %3365 = vmatprep.subr.bf16.mxu0 0
  %3366 = vmatpush1.bf16.msra.mxu0 0
  %3367 = vmatprep.subr.bf16.mxu0 0
  %3368 = vmatpush1.bf16.msra.mxu0 0
  %3369 = vmatprep.subr.bf16.mxu0 0
  %3370 = vmatpush1.bf16.msra.mxu0 0
  %3371 = vmatprep.subr.bf16.mxu0 0
  %3372 = vmatpush1.bf16.msra.mxu0 0
  %3373 = vmatprep.subr.bf16.mxu0 0
  %3374 = vmatpush1.bf16.msra.mxu0 0
  %3375 = vmatprep.subr.bf16.mxu0 0
  %3376 = vmatpush1.bf16.msra.mxu0 0
  %3377 = vmatprep.subr.bf16.mxu0 0
  %3378 = vmatpush1.bf16.msra.mxu0 0
  %3379 = vmatprep.mubr.bf16.mxu0 0
  %3380 = vmatmul.mubr.bf16.gmra.mrb[0].mxu0 %v3345
  %v3381 = vpop.f32.mrb[0].mxu0
  %v3382 = vadd.f32 0.0, %v3381
  %v3383 = vpop.f32.mrb[0].mxu0
  %v3384 = vpop.f32.mrb[0].mxu0
  %v3385 = vpop.f32.mrb[0].mxu0
  %3386 = vdwg.mxu0
  %v3387 = vadd.f32 %v3328, %v3382
  %v3388 = vxor.u32 %v3387, 2147483648
  %v3389 = vmul.f32 %v3388, 1.442695
  %v3390 = vpow.pop %v3389
  %v3391 = vadd.f32 %v3390, 1.0
  %v3392 = vrcp.pop %v3391
  %v3393 = vmul.f32 1.0, %v3392
  %3395 = vrot.lane.b32.xlu0 %v3382, 96
  %v3396 = vpop.permute.xlu0 %3395
  %v3398 = vadd.f32 %v3329, %v3396
  %v3399 = vxor.u32 %v3398, 2147483648
  %v3400 = vmul.f32 %v3399, 1.442695
  %v3401 = vpow.pop %v3400
  %v3402 = vadd.f32 %v3401, 1.0
  %v3403 = vrcp.pop %v3402
  %v3404 = vmul.f32 1.0, %v3403
  %3405 = vrot.lane.b32.xlu0 %v3327, 64
  %v3406 = vpop.permute.xlu0 %3405
  %v3408 = vadd.f32 %v3382, %v3406
  %3410 = vrot.lane.b32.xlu0 %v3408, 64
  %v3411 = vpop.permute.xlu0 %3410
  %v3413 = vmul.f32 %v3393, %v3411
  %v3414 = vadd.f32 %v3330, %v3413
  %v3415 = vtanh.pop %v3414
  %v3416 = vsub.f32 1.0, %v3404
  %v3417 = vmul.f32 %v3416, %v3415
  %v3418 = vmul.f32 %v3404, %v2999
  %v3419 = vadd.f32 %v3417, %v3418
  %3420 = vst.msk [vmem:[%s21] sm:$0xff] %vm360, %v3419
  %v3421 = vld [vmem:[#allocation4 + $0x8] sm:$0xff]
  %v3422 = vld [vmem:[%s3286 + $0x8] sm:$0xff]
  %v3423 = vld [vmem:[%s3311 + $0x8] sm:$0xff]
  %v3424 = vpack.c.bf16 %v3419, %v3419
  %v3426 = vsel %vm360, %v3424, 0
  %3428 = vmatprep.subr.bf16.mxu0 0
  %3429 = vmatpush1.bf16.msra.mxu0 %v3340
  %3430 = vmatprep.subr.bf16.mxu0 0
  %3431 = vmatpush1.bf16.msra.mxu0 %v3341
  %3432 = vmatprep.subr.bf16.mxu0 0
  %3433 = vmatpush1.bf16.msra.mxu0 0
  %3434 = vmatprep.subr.bf16.mxu0 0
  %3435 = vmatpush1.bf16.msra.mxu0 0
  %3436 = vmatprep.subr.bf16.mxu0 0
  %3437 = vmatpush1.bf16.msra.mxu0 0
  %3438 = vmatprep.subr.bf16.mxu0 0
  %3439 = vmatpush1.bf16.msra.mxu0 0
  %3440 = vmatprep.subr.bf16.mxu0 0
  %3441 = vmatpush1.bf16.msra.mxu0 0
  %3442 = vmatprep.subr.bf16.mxu0 0
  %3443 = vmatpush1.bf16.msra.mxu0 0
  %3444 = vmatprep.subr.bf16.mxu0 0
  %3445 = vmatpush1.bf16.msra.mxu0 0
  %3446 = vmatprep.subr.bf16.mxu0 0
  %3447 = vmatpush1.bf16.msra.mxu0 0
  %3448 = vmatprep.subr.bf16.mxu0 0
  %3449 = vmatpush1.bf16.msra.mxu0 0
  %3450 = vmatprep.subr.bf16.mxu0 0
  %3451 = vmatpush1.bf16.msra.mxu0 0
  %3452 = vmatprep.subr.bf16.mxu0 0
  %3453 = vmatpush1.bf16.msra.mxu0 0
  %3454 = vmatprep.subr.bf16.mxu0 0
  %3455 = vmatpush1.bf16.msra.mxu0 0
  %3456 = vmatprep.subr.bf16.mxu0 0
  %3457 = vmatpush1.bf16.msra.mxu0 0
  %3458 = vmatprep.subr.bf16.mxu0 0
  %3459 = vmatpush1.bf16.msra.mxu0 0
  %3460 = vmatprep.mubr.bf16.mxu0 0
  %3461 = vmatmul.mubr.bf16.gmra.mrb[0].mxu0 %v3426
  %v3462 = vpop.f32.mrb[0].mxu0
  %v3463 = vadd.f32 0.0, %v3462
  %v3464 = vpop.f32.mrb[0].mxu0
  %v3465 = vpop.f32.mrb[0].mxu0
  %v3466 = vpop.f32.mrb[0].mxu0
  %3467 = vdwg.mxu0
  %v3468 = vadd.f32 %v3421, %v3463
  %v3469 = vxor.u32 %v3468, 2147483648
  %v3470 = vmul.f32 %v3469, 1.442695
  %v3471 = vpow.pop %v3470
  %v3472 = vadd.f32 %v3471, 1.0
  %v3473 = vrcp.pop %v3472
  %v3474 = vmul.f32 1.0, %v3473
  %3476 = vrot.lane.b32.xlu0 %v3463, 96
  %v3477 = vpop.permute.xlu0 %3476
  %v3479 = vadd.f32 %v3422, %v3477
  %v3480 = vxor.u32 %v3479, 2147483648
  %v3481 = vmul.f32 %v3480, 1.442695
  %v3482 = vpow.pop %v3481
  %v3483 = vadd.f32 %v3482, 1.0
  %v3484 = vrcp.pop %v3483
  %v3485 = vmul.f32 1.0, %v3484
  %v3486 = vadd.f32 %v3463, %v3406
  %3488 = vrot.lane.b32.xlu0 %v3486, 64
  %v3489 = vpop.permute.xlu0 %3488
  %v3491 = vmul.f32 %v3474, %v3489
  %v3492 = vadd.f32 %v3423, %v3491
  %v3493 = vtanh.pop %v3492
  %v3494 = vsub.f32 1.0, %v3485
  %v3495 = vmul.f32 %v3494, %v3493
  %v3496 = vmul.f32 %v3485, %v3419
  %v3497 = vadd.f32 %v3495, %v3496
  %3498 = vst.msk [vmem:[%s21 + $0x8] sm:$0xff] %vm360, %v3497
  %v3499 = vld [vmem:[#allocation4 + $0x10] sm:$0xff]
  %v3500 = vld [vmem:[%s3286 + $0x10] sm:$0xff]
  %v3501 = vld [vmem:[%s3311 + $0x10] sm:$0xff]
  %v3502 = vpack.c.bf16 %v3497, %v3497
  %v3504 = vsel %vm360, %v3502, 0
  %3506 = vmatprep.subr.bf16.mxu0 0
  %3507 = vmatpush1.bf16.msra.mxu0 %v3340
  %3508 = vmatprep.subr.bf16.mxu0 0
  %3509 = vmatpush1.bf16.msra.mxu0 %v3341
  %3510 = vmatprep.subr.bf16.mxu0 0
  %3511 = vmatpush1.bf16.msra.mxu0 0
  %3512 = vmatprep.subr.bf16.mxu0 0
  %3513 = vmatpush1.bf16.msra.mxu0 0
  %3514 = vmatprep.subr.bf16.mxu0 0
  %3515 = vmatpush1.bf16.msra.mxu0 0
  %3516 = vmatprep.subr.bf16.mxu0 0
  %3517 = vmatpush1.bf16.msra.mxu0 0
  %3518 = vmatprep.subr.bf16.mxu0 0
  %3519 = vmatpush1.bf16.msra.mxu0 0
  %3520 = vmatprep.subr.bf16.mxu0 0
  %3521 = vmatpush1.bf16.msra.mxu0 0
  %3522 = vmatprep.subr.bf16.mxu0 0
  %3523 = vmatpush1.bf16.msra.mxu0 0
  %3524 = vmatprep.subr.bf16.mxu0 0
  %3525 = vmatpush1.bf16.msra.mxu0 0
  %3526 = vmatprep.subr.bf16.mxu0 0
  %3527 = vmatpush1.bf16.msra.mxu0 0
  %3528 = vmatprep.subr.bf16.mxu0 0
  %3529 = vmatpush1.bf16.msra.mxu0 0
  %3530 = vmatprep.subr.bf16.mxu0 0
  %3531 = vmatpush1.bf16.msra.mxu0 0
  %3532 = vmatprep.subr.bf16.mxu0 0
  %3533 = vmatpush1.bf16.msra.mxu0 0
  %3534 = vmatprep.subr.bf16.mxu0 0
  %3535 = vmatpush1.bf16.msra.mxu0 0
  %3536 = vmatprep.subr.bf16.mxu0 0
  %3537 = vmatpush1.bf16.msra.mxu0 0
  %3538 = vmatprep.mubr.bf16.mxu0 0
  %3539 = vmatmul.mubr.bf16.gmra.mrb[0].mxu0 %v3504
  %v3540 = vpop.f32.mrb[0].mxu0
  %v3541 = vadd.f32 0.0, %v3540
  %v3542 = vpop.f32.mrb[0].mxu0
  %v3543 = vpop.f32.mrb[0].mxu0
  %v3544 = vpop.f32.mrb[0].mxu0
  %3545 = vdwg.mxu0
  %v3546 = vadd.f32 %v3499, %v3541
  %v3547 = vxor.u32 %v3546, 2147483648
  %v3548 = vmul.f32 %v3547, 1.442695
  %v3549 = vpow.pop %v3548
  %v3550 = vadd.f32 %v3549, 1.0
  %v3551 = vrcp.pop %v3550
  %v3552 = vmul.f32 1.0, %v3551
  %3554 = vrot.lane.b32.xlu0 %v3541, 96
  %v3555 = vpop.permute.xlu0 %3554
  %v3557 = vadd.f32 %v3500, %v3555
  %v3558 = vxor.u32 %v3557, 2147483648
  %v3559 = vmul.f32 %v3558, 1.442695
  %v3560 = vpow.pop %v3559
  %v3561 = vadd.f32 %v3560, 1.0
  %v3562 = vrcp.pop %v3561
  %v3563 = vmul.f32 1.0, %v3562
  %v3564 = vadd.f32 %v3541, %v3406
  %3566 = vrot.lane.b32.xlu0 %v3564, 64
  %v3567 = vpop.permute.xlu0 %3566
  %v3569 = vmul.f32 %v3552, %v3567
  %v3570 = vadd.f32 %v3501, %v3569
  %v3571 = vtanh.pop %v3570
  %v3572 = vsub.f32 1.0, %v3563
  %v3573 = vmul.f32 %v3572, %v3571
  %v3574 = vmul.f32 %v3563, %v3497
  %v3575 = vadd.f32 %v3573, %v3574
  %3576 = vst.msk [vmem:[%s21 + $0x10] sm:$0xff] %vm360, %v3575
  %v3577 = vld [vmem:[#allocation4 + $0x18] sm:$0xff]
  %v3578 = vld [vmem:[%s3286 + $0x18] sm:$0xff]
  %v3579 = vld [vmem:[%s3311 + $0x18] sm:$0xff]
  %v3580 = vpack.c.bf16 %v3575, %v3575
  %v3582 = vsel %vm360, %v3580, 0
  %3584 = vmatprep.subr.bf16.mxu0 0
  %3585 = vmatpush1.bf16.msra.mxu0 %v3340
  %3586 = vmatprep.subr.bf16.mxu0 0
  %3587 = vmatpush1.bf16.msra.mxu0 %v3341
  %3588 = vmatprep.subr.bf16.mxu0 0
  %3589 = vmatpush1.bf16.msra.mxu0 0
  %3590 = vmatprep.subr.bf16.mxu0 0
  %3591 = vmatpush1.bf16.msra.mxu0 0
  %3592 = vmatprep.subr.bf16.mxu0 0
  %3593 = vmatpush1.bf16.msra.mxu0 0
  %3594 = vmatprep.subr.bf16.mxu0 0
  %3595 = vmatpush1.bf16.msra.mxu0 0
  %3596 = vmatprep.subr.bf16.mxu0 0
  %3597 = vmatpush1.bf16.msra.mxu0 0
  %3598 = vmatprep.subr.bf16.mxu0 0
  %3599 = vmatpush1.bf16.msra.mxu0 0
  %3600 = vmatprep.subr.bf16.mxu0 0
  %3601 = vmatpush1.bf16.msra.mxu0 0
  %3602 = vmatprep.subr.bf16.mxu0 0
  %3603 = vmatpush1.bf16.msra.mxu0 0
  %3604 = vmatprep.subr.bf16.mxu0 0
  %3605 = vmatpush1.bf16.msra.mxu0 0
  %3606 = vmatprep.subr.bf16.mxu0 0
  %3607 = vmatpush1.bf16.msra.mxu0 0
  %3608 = vmatprep.subr.bf16.mxu0 0
  %3609 = vmatpush1.bf16.msra.mxu0 0
  %3610 = vmatprep.subr.bf16.mxu0 0
  %3611 = vmatpush1.bf16.msra.mxu0 0
  %3612 = vmatprep.subr.bf16.mxu0 0
  %3613 = vmatpush1.bf16.msra.mxu0 0
  %3614 = vmatprep.subr.bf16.mxu0 0
  %3615 = vmatpush1.bf16.msra.mxu0 0
  %3616 = vmatprep.mubr.bf16.mxu0 0
  %3617 = vmatmul.mubr.bf16.gmra.mrb[0].mxu0 %v3582
  %v3618 = vpop.f32.mrb[0].mxu0
  %v3619 = vadd.f32 0.0, %v3618
  %v3620 = vpop.f32.mrb[0].mxu0
  %v3621 = vpop.f32.mrb[0].mxu0
  %v3622 = vpop.f32.mrb[0].mxu0
  %3623 = vdwg.mxu0
  %v3624 = vadd.f32 %v3577, %v3619
  %v3625 = vxor.u32 %v3624, 2147483648
  %v3626 = vmul.f32 %v3625, 1.442695
  %v3627 = vpow.pop %v3626
  %v3628 = vadd.f32 %v3627, 1.0
  %v3629 = vrcp.pop %v3628
  %v3630 = vmul.f32 1.0, %v3629
  %3632 = vrot.lane.b32.xlu0 %v3619, 96
  %v3633 = vpop.permute.xlu0 %3632
  %v3635 = vadd.f32 %v3578, %v3633
  %v3636 = vxor.u32 %v3635, 2147483648
  %v3637 = vmul.f32 %v3636, 1.442695
  %v3638 = vpow.pop %v3637
  %v3639 = vadd.f32 %v3638, 1.0
  %v3640 = vrcp.pop %v3639
  %v3641 = vmul.f32 1.0, %v3640
  %v3642 = vadd.f32 %v3619, %v3406
  %3644 = vrot.lane.b32.xlu0 %v3642, 64
  %v3645 = vpop.permute.xlu0 %3644
  %v3647 = vmul.f32 %v3630, %v3645
  %v3648 = vadd.f32 %v3579, %v3647
  %v3649 = vtanh.pop %v3648
  %v3650 = vsub.f32 1.0, %v3641
  %v3651 = vmul.f32 %v3650, %v3649
  %v3652 = vmul.f32 %v3641, %v3575
  %v3653 = vadd.f32 %v3651, %v3652
  %3654 = vst.msk [vmem:[%s21 + $0x18] sm:$0xff] %vm360, %v3653
  %v3655 = vld [vmem:[#allocation4 + $0x20] sm:$0xff]
  %v3656 = vld [vmem:[%s3286 + $0x20] sm:$0xff]
  %v3657 = vld [vmem:[%s3311 + $0x20] sm:$0xff]
  %v3658 = vpack.c.bf16 %v3653, %v3653
  %v3660 = vsel %vm360, %v3658, 0
  %3662 = vmatprep.subr.bf16.mxu0 0
  %3663 = vmatpush1.bf16.msra.mxu0 %v3340
  %3664 = vmatprep.subr.bf16.mxu0 0
  %3665 = vmatpush1.bf16.msra.mxu0 %v3341
  %3666 = vmatprep.subr.bf16.mxu0 0
  %3667 = vmatpush1.bf16.msra.mxu0 0
  %3668 = vmatprep.subr.bf16.mxu0 0
  %3669 = vmatpush1.bf16.msra.mxu0 0
  %3670 = vmatprep.subr.bf16.mxu0 0
  %3671 = vmatpush1.bf16.msra.mxu0 0
  %3672 = vmatprep.subr.bf16.mxu0 0
  %3673 = vmatpush1.bf16.msra.mxu0 0
  %3674 = vmatprep.subr.bf16.mxu0 0
  %3675 = vmatpush1.bf16.msra.mxu0 0
  %3676 = vmatprep.subr.bf16.mxu0 0
  %3677 = vmatpush1.bf16.msra.mxu0 0
  %3678 = vmatprep.subr.bf16.mxu0 0
  %3679 = vmatpush1.bf16.msra.mxu0 0
  %3680 = vmatprep.subr.bf16.mxu0 0
  %3681 = vmatpush1.bf16.msra.mxu0 0
  %3682 = vmatprep.subr.bf16.mxu0 0
  %3683 = vmatpush1.bf16.msra.mxu0 0
  %3684 = vmatprep.subr.bf16.mxu0 0
  %3685 = vmatpush1.bf16.msra.mxu0 0
  %3686 = vmatprep.subr.bf16.mxu0 0
  %3687 = vmatpush1.bf16.msra.mxu0 0
  %3688 = vmatprep.subr.bf16.mxu0 0
  %3689 = vmatpush1.bf16.msra.mxu0 0
  %3690 = vmatprep.subr.bf16.mxu0 0
  %3691 = vmatpush1.bf16.msra.mxu0 0
  %3692 = vmatprep.subr.bf16.mxu0 0
  %3693 = vmatpush1.bf16.msra.mxu0 0
  %3694 = vmatprep.mubr.bf16.mxu0 0
  %3695 = vmatmul.mubr.bf16.gmra.mrb[0].mxu0 %v3660
  %v3696 = vpop.f32.mrb[0].mxu0
  %v3697 = vadd.f32 0.0, %v3696
  %v3698 = vpop.f32.mrb[0].mxu0
  %v3699 = vpop.f32.mrb[0].mxu0
  %v3700 = vpop.f32.mrb[0].mxu0
  %3701 = vdwg.mxu0
  %v3702 = vadd.f32 %v3655, %v3697
  %v3703 = vxor.u32 %v3702, 2147483648
  %v3704 = vmul.f32 %v3703, 1.442695
  %v3705 = vpow.pop %v3704
  %v3706 = vadd.f32 %v3705, 1.0
  %v3707 = vrcp.pop %v3706
  %v3708 = vmul.f32 1.0, %v3707
  %3710 = vrot.lane.b32.xlu0 %v3697, 96
  %v3711 = vpop.permute.xlu0 %3710
  %v3713 = vadd.f32 %v3656, %v3711
  %v3714 = vxor.u32 %v3713, 2147483648
  %v3715 = vmul.f32 %v3714, 1.442695
  %v3716 = vpow.pop %v3715
  %v3717 = vadd.f32 %v3716, 1.0
  %v3718 = vrcp.pop %v3717
  %v3719 = vmul.f32 1.0, %v3718
  %v3720 = vadd.f32 %v3697, %v3406
  %3722 = vrot.lane.b32.xlu0 %v3720, 64
  %v3723 = vpop.permute.xlu0 %3722
  %v3725 = vmul.f32 %v3708, %v3723
  %v3726 = vadd.f32 %v3657, %v3725
  %v3727 = vtanh.pop %v3726
  %v3728 = vsub.f32 1.0, %v3719
  %v3729 = vmul.f32 %v3728, %v3727
  %v3730 = vmul.f32 %v3719, %v3653
  %v3731 = vadd.f32 %v3729, %v3730
  %3732 = vst.msk [vmem:[%s21 + $0x20] sm:$0xff] %vm360, %v3731
  %v3733 = vld [vmem:[#allocation4 + $0x28] sm:$0xff]
  %v3734 = vld [vmem:[%s3286 + $0x28] sm:$0xff]
  %v3735 = vld [vmem:[%s3311 + $0x28] sm:$0xff]
  %v3736 = vpack.c.bf16 %v3731, %v3731
  %v3738 = vsel %vm360, %v3736, 0
  %3740 = vmatprep.subr.bf16.mxu0 0
  %3741 = vmatpush1.bf16.msra.mxu0 %v3340
  %3742 = vmatprep.subr.bf16.mxu0 0
  %3743 = vmatpush1.bf16.msra.mxu0 %v3341
  %3744 = vmatprep.subr.bf16.mxu0 0
  %3745 = vmatpush1.bf16.msra.mxu0 0
  %3746 = vmatprep.subr.bf16.mxu0 0
  %3747 = vmatpush1.bf16.msra.mxu0 0
  %3748 = vmatprep.subr.bf16.mxu0 0
  %3749 = vmatpush1.bf16.msra.mxu0 0
  %3750 = vmatprep.subr.bf16.mxu0 0
  %3751 = vmatpush1.bf16.msra.mxu0 0
  %3752 = vmatprep.subr.bf16.mxu0 0
  %3753 = vmatpush1.bf16.msra.mxu0 0
  %3754 = vmatprep.subr.bf16.mxu0 0
  %3755 = vmatpush1.bf16.msra.mxu0 0
  %3756 = vmatprep.subr.bf16.mxu0 0
  %3757 = vmatpush1.bf16.msra.mxu0 0
  %3758 = vmatprep.subr.bf16.mxu0 0
  %3759 = vmatpush1.bf16.msra.mxu0 0
  %3760 = vmatprep.subr.bf16.mxu0 0
  %3761 = vmatpush1.bf16.msra.mxu0 0
  %3762 = vmatprep.subr.bf16.mxu0 0
  %3763 = vmatpush1.bf16.msra.mxu0 0
  %3764 = vmatprep.subr.bf16.mxu0 0
  %3765 = vmatpush1.bf16.msra.mxu0 0
  %3766 = vmatprep.subr.bf16.mxu0 0
  %3767 = vmatpush1.bf16.msra.mxu0 0
  %3768 = vmatprep.subr.bf16.mxu0 0
  %3769 = vmatpush1.bf16.msra.mxu0 0
  %3770 = vmatprep.subr.bf16.mxu0 0
  %3771 = vmatpush1.bf16.msra.mxu0 0
  %3772 = vmatprep.mubr.bf16.mxu0 0
  %3773 = vmatmul.mubr.bf16.gmra.mrb[0].mxu0 %v3738
  %v3774 = vpop.f32.mrb[0].mxu0
  %v3775 = vadd.f32 0.0, %v3774
  %v3776 = vpop.f32.mrb[0].mxu0
  %v3777 = vpop.f32.mrb[0].mxu0
  %v3778 = vpop.f32.mrb[0].mxu0
  %3779 = vdwg.mxu0
  %v3780 = vadd.f32 %v3733, %v3775
  %v3781 = vxor.u32 %v3780, 2147483648
  %v3782 = vmul.f32 %v3781, 1.442695
  %v3783 = vpow.pop %v3782
  %v3784 = vadd.f32 %v3783, 1.0
  %v3785 = vrcp.pop %v3784
  %v3786 = vmul.f32 1.0, %v3785
  %3788 = vrot.lane.b32.xlu0 %v3775, 96
  %v3789 = vpop.permute.xlu0 %3788
  %v3791 = vadd.f32 %v3734, %v3789
  %v3792 = vxor.u32 %v3791, 2147483648
  %v3793 = vmul.f32 %v3792, 1.442695
  %v3794 = vpow.pop %v3793
  %v3795 = vadd.f32 %v3794, 1.0
  %v3796 = vrcp.pop %v3795
  %v3797 = vmul.f32 1.0, %v3796
  %v3798 = vadd.f32 %v3775, %v3406
  %3800 = vrot.lane.b32.xlu0 %v3798, 64
  %v3801 = vpop.permute.xlu0 %3800
  %v3803 = vmul.f32 %v3786, %v3801
  %v3804 = vadd.f32 %v3735, %v3803
  %v3805 = vtanh.pop %v3804
  %v3806 = vsub.f32 1.0, %v3797
  %v3807 = vmul.f32 %v3806, %v3805
  %v3808 = vmul.f32 %v3797, %v3731
  %v3809 = vadd.f32 %v3807, %v3808
  %3810 = vst.msk [vmem:[%s21 + $0x28] sm:$0xff] %vm360, %v3809
  %v3811 = vld [vmem:[%s21] sm:$0xff]
  %v3812 = vld [vmem:[%s21 + $0x8] sm:$0xff]
  %v3813 = vld [vmem:[%s21 + $0x10] sm:$0xff]
  %v3814 = vld [vmem:[%s21 + $0x18] sm:$0xff]
  %v3815 = vld [vmem:[%s21 + $0x20] sm:$0xff]
  %v3816 = vld [vmem:[%s21 + $0x28] sm:$0xff]
  %v3817 = vpack.c.bf16 %v3812, %v3811
  %v3818 = vpack.c.bf16 %v3814, %v3813
  %v3819 = vpack.c.bf16 %v3816, %v3815
  %v3820 = vld [vmem:[%s18] sm:$0xf]
  %v3821 = vld [vmem:[%s18 + $0x4] sm:$0xf]
  %v3822 = vld [vmem:[%s18 + $0x8] sm:$0xf]
  %v3823 = vld [vmem:[%s18 + $0xc] sm:$0xf]
  %v3824 = vld [vmem:[%s19] sm:$0x1]
  %v3826 = vlaneseq
  %v3827 = vshrl.u32 %v3826, 7
  %v3828 = vsub.s32 0, %v3827
  %v3829 = vrot.slane %v3824, %v3828
  %v3835 = vunpack.c.l.b16 %v3820
  %v3836 = vunpack.c.l.b16 %v3821
  %v3837 = vunpack.c.l.b16 %v3822
  %v3838 = vunpack.c.l.b16 %v3823
  %v3839 = vpack.c.b16 %v3836, %v3835
  %v3840 = vpack.c.b16 %v3838, %v3837
  %v3844 = vsel %vm360, %v3817, 0
  %v3847 = vsel %vm360, %v3818, 0
  %v3850 = vsel %vm360, %v3819, 0
  %3852 = vmatprep.subr.bf16.mxu0 0
  %3853 = vmatpush1.bf16.msra.mxu0 %v3839
  %3854 = vmatprep.subr.bf16.mxu0 0
  %3855 = vmatpush1.bf16.msra.mxu0 %v3840
  %3856 = vmatprep.subr.bf16.mxu0 0
  %3857 = vmatpush1.bf16.msra.mxu0 0
  %3858 = vmatprep.subr.bf16.mxu0 0
  %3859 = vmatpush1.bf16.msra.mxu0 0
  %3860 = vmatprep.subr.bf16.mxu0 0
  %3861 = vmatpush1.bf16.msra.mxu0 0
  %3862 = vmatprep.subr.bf16.mxu0 0
  %3863 = vmatpush1.bf16.msra.mxu0 0
  %3864 = vmatprep.subr.bf16.mxu0 0
  %3865 = vmatpush1.bf16.msra.mxu0 0
  %3866 = vmatprep.subr.bf16.mxu0 0
  %3867 = vmatpush1.bf16.msra.mxu0 0
  %3868 = vmatprep.subr.bf16.mxu0 0
  %3869 = vmatpush1.bf16.msra.mxu0 0
  %3870 = vmatprep.subr.bf16.mxu0 0
  %3871 = vmatpush1.bf16.msra.mxu0 0
  %3872 = vmatprep.subr.bf16.mxu0 0
  %3873 = vmatpush1.bf16.msra.mxu0 0
  %3874 = vmatprep.subr.bf16.mxu0 0
  %3875 = vmatpush1.bf16.msra.mxu0 0
  %3876 = vmatprep.subr.bf16.mxu0 0
  %3877 = vmatpush1.bf16.msra.mxu0 0
  %3878 = vmatprep.subr.bf16.mxu0 0
  %3879 = vmatpush1.bf16.msra.mxu0 0
  %3880 = vmatprep.subr.bf16.mxu0 0
  %3881 = vmatpush1.bf16.msra.mxu0 0
  %3882 = vmatprep.subr.bf16.mxu0 0
  %3883 = vmatpush1.bf16.msra.mxu0 0
  %3884 = vmatprep.mubr.bf16.mxu0 0
  %3885 = vmatmul.mubr.bf16.gmra.mrb[0].mxu0 %v3844
  %v3886 = vpop.f32.mrb[0].mxu0
  %v3887 = vadd.f32 %v3829, %v3886
  %v3888 = vpop.f32.mrb[0].mxu0
  %v3889 = vpop.f32.mrb[0].mxu0
  %v3890 = vadd.f32 %v3829, %v3889
  %v3891 = vpop.f32.mrb[0].mxu0
  %3892 = vmatprep.mubr.bf16.mxu0 0
  %3893 = vmatmul.mubr.bf16.gmra.mrb[0].mxu0 %v3847
  %v3894 = vpop.f32.mrb[0].mxu0
  %v3895 = vadd.f32 %v3829, %v3894
  %v3896 = vpop.f32.mrb[0].mxu0
  %v3897 = vpop.f32.mrb[0].mxu0
  %v3898 = vadd.f32 %v3829, %v3897
  %v3899 = vpop.f32.mrb[0].mxu0
  %3900 = vmatprep.mubr.bf16.mxu0 0
  %3901 = vmatmul.mubr.bf16.gmra.mrb[0].mxu0 %v3850
  %v3902 = vpop.f32.mrb[0].mxu0
  %v3903 = vadd.f32 %v3829, %v3902
  %v3904 = vpop.f32.mrb[0].mxu0
  %v3905 = vpop.f32.mrb[0].mxu0
  %v3906 = vadd.f32 %v3829, %v3905
  %v3907 = vpop.f32.mrb[0].mxu0
  %3908 = vdwg.mxu0
  %3909 = vst [vmem:[%s22] sm:$0xff] %v3887
  %3910 = vst [vmem:[%s22 + $0x8] sm:$0xff] %v3890
  %3911 = vst [vmem:[%s22 + $0x10] sm:$0xff] %v3895
  %3912 = vst [vmem:[%s22 + $0x18] sm:$0xff] %v3898
  %3913 = vst [vmem:[%s22 + $0x20] sm:$0xff] %v3903
  %3914 = vst [vmem:[%s22 + $0x28] sm:$0xff] %v3906
  // Predicated region
  $region82: #{hred_forward.1} parent=0 // pred_check
    _
  $region83: #{hred_forward.1} parent=0 // pred_check_branch
    %3916 = sbr.rel (0) target = $region85
  $region84: #{hred_forward.1} parent=0 // pred_region
    _
  $region85: #{hred_forward.1} parent=0 // pred_fallthru
    _
  // Predicated region
  $region86: #{hred_forward.1} parent=0 // pred_check
    _
  $region87: #{hred_forward.1} parent=0 // pred_check_branch
    %3918 = sbr.rel (0) target = $region89
  $region88: #{hred_forward.1} parent=0 // pred_region
    _
  $region89: #{hred_forward.1} parent=0 // pred_fallthru
    _
  // Predicated region
  $region90: #{hred_forward.1} parent=0 // pred_check
    _
  $region91: #{hred_forward.1} parent=0 // pred_check_branch
    %3920 = sbr.rel (0) target = $region93
  $region92: #{hred_forward.1} parent=0 // pred_region
    _
  $region93: #{hred_forward.1} parent=0 // pred_fallthru
    _
  // Predicated region
  $region94: #{hred_forward.1} parent=0 // pred_check
    _
  $region95: #{hred_forward.1} parent=0 // pred_check_branch
    %3922 = sbr.rel (0) target = $region97
  $region96: #{hred_forward.1} parent=0 // pred_region
    _
  $region97: #{hred_forward.1} parent=0 // pred_fallthru
    _
  // Predicated region
  $region98: #{hred_forward.1} parent=0 // pred_check
    _
  $region99: #{hred_forward.1} parent=0 // pred_check_branch
    %3924 = sbr.rel (0) target = $region101
  $region100: #{hred_forward.1} parent=0 // pred_region
    _
  $region101: #{hred_forward.1} parent=0 // pred_fallthru
    _
  // Predicated region
  $region102: #{hred_forward.1} parent=0 // pred_check
    _
  $region103: #{hred_forward.1} parent=0 // pred_check_branch
    %3926 = sbr.rel (0) target = $region105
  $region104: #{hred_forward.1} parent=0 // pred_region
    _
  $region105: #{hred_forward.1} parent=0 // pred_fallthru
    _

</llo_original>
